<compile_context>
chip_gen: v5e
topology: v5e:2x2
jax: 0.10.0
libtpu: 0.0.40
codegen_flags: <defaults>
</compile_context>

<pallas_src>
import math
import functools

import jax
import jax.numpy as jnp
from jax.experimental import pallas as pl


# ---------------------------------------------------------------------------
# Gabor filter bank (matches GaborConv2d.genGaborBank exactly) — plain-JAX glue
# ---------------------------------------------------------------------------
def gen_gabor_bank(kernel_size, channel_in, channel_out, sigma, gamma, theta, f, psi):
    xmax = kernel_size // 2
    ymax = kernel_size // 2
    xmin, ymin = -xmax, -ymax
    ksize = xmax - xmin + 1

    y_0 = jnp.arange(ymin, ymax + 1, dtype=jnp.float32)
    x_0 = jnp.arange(xmin, xmax + 1, dtype=jnp.float32)
    # y varies along the last axis, x varies along the second-to-last axis
    y = jnp.broadcast_to(y_0.reshape(1, 1, 1, ksize),
                         (channel_out, channel_in, ksize, ksize))
    x = jnp.broadcast_to(x_0.reshape(1, 1, ksize, 1),
                         (channel_out, channel_in, ksize, ksize))

    th = theta.reshape(-1, 1, 1, 1)
    sig = sigma.reshape(-1, 1, 1, 1)
    fr = f.reshape(-1, 1, 1, 1)
    ps = psi.reshape(-1, 1, 1, 1)

    x_theta = x * jnp.cos(th) + y * jnp.sin(th)
    y_theta = -x * jnp.sin(th) + y * jnp.cos(th)

    gb = -jnp.exp(-0.5 * ((gamma * x_theta) ** 2 + y_theta ** 2) / (8.0 * sig ** 2)) \
         * jnp.cos(2.0 * math.pi * fr * x_theta + ps)
    gb = gb - gb.mean(axis=(2, 3), keepdims=True)
    return gb


# ---------------------------------------------------------------------------
# Shared im2col helper (XLA wrapper glue; never inside a kernel)
# ---------------------------------------------------------------------------
def _im2col(x, K, stride):
    """x: (N, C, H, W) already padded. Returns ((N, C, K*K, Ho, Wo), Ho, Wo)."""
    N, C, H, W = x.shape
    Ho = (H - K) // stride + 1
    Wo = (W - K) // stride + 1
    cols = []
    for ky in range(K):
        for kx in range(K):
            cols.append(x[:, :,
                          ky:ky + (Ho - 1) * stride + 1:stride,
                          kx:kx + (Wo - 1) * stride + 1:stride])
    return jnp.stack(cols, axis=2), Ho, Wo


# ---------------------------------------------------------------------------
# Kernel 1 & 2: whole-batch Gabor conv as a single MXU matmul (no bias operand)
# ---------------------------------------------------------------------------
def _gabor_matmul_kernel(p_ref, w_ref, o_ref):
    # p_ref: (C_in*K*K, N*Ho*Wo)  im2col patches, lane-dense columns (n, yo, xo)
    # w_ref: (C_out, C_in*K*K)    pre-flattened Gabor bank
    # o_ref: (C_out, N*Ho*Wo)     lane-dense output
    o_ref[...] = jnp.dot(w_ref[...], p_ref[...],
                         preferred_element_type=jnp.float32).astype(o_ref.dtype)


def gabor_conv_mxu(x, gb, *, stride, padding):
    """x: (N, C_in, H, W) NCHW; gb: (C_out, C_in, K, K) OIHW -> (N, C_out, Ho, Wo)."""
    N, C_in, H, W = x.shape
    C_out, _, K, _ = gb.shape
    xp = jnp.pad(x, ((0, 0), (0, 0), (padding, padding), (padding, padding)))
    P, Ho, Wo = _im2col(xp, K, stride)                          # (N, C_in, K*K, Ho, Wo)
    # rows ordered (c_in, ky, kx) to match gb.reshape(C_out, -1); columns (n, yo, xo)
    P = P.transpose(1, 2, 0, 3, 4).reshape(C_in * K * K, N * Ho * Wo)
    w2d = gb.reshape(C_out, C_in * K * K)

    out = pl.pallas_call(
        _gabor_matmul_kernel,
        out_shape=jax.ShapeDtypeStruct((C_out, N * Ho * Wo), x.dtype),
    )(P, w2d)
    return out.reshape(C_out, N, Ho, Wo).transpose(1, 0, 2, 3)


# ---------------------------------------------------------------------------
# Kernel 3: both stages' competitive-softmax mixture + SE layer, fused
# ---------------------------------------------------------------------------
def _compete_se_pair_kernel(x1_ref, w1a_ref, w2a_ref, x2_ref, w1b_ref, w2b_ref,
                            o1_ref, o2_ref, *, wc, ws):
    def compete_se(x_ref, w1_ref, w2_ref, o_ref):
        x = x_ref[...].astype(jnp.float32)                      # (N, C, H, W)
        hw = x.shape[2] * x.shape[3]
        # One exp serves the channel / row / column softmaxes; a per-image max is a
        # valid stabilizing shift for every normalization axis simultaneously.
        m = x.max(axis=3, keepdims=True).max(axis=2, keepdims=True).max(axis=1, keepdims=True)
        e = jnp.exp(x - m)
        rc = pl.reciprocal(jnp.sum(e, axis=1, keepdims=True), approx=True)   # dim=1
        rh = pl.reciprocal(jnp.sum(e, axis=2, keepdims=True), approx=True)   # dim=2
        rw = pl.reciprocal(jnp.sum(e, axis=3, keepdims=True), approx=True)   # dim=3
        mix = e * (wc * rc + ws * (rh + rw))                    # (N, C, H, W)

        # SELayer: avgpool -> fc -> relu -> fc -> sigmoid -> channel scale.
        # The (C, C) fcs run on the VPU (broadcast-mul + lane reduce), not the MXU.
        y = jnp.sum(jnp.sum(mix, axis=3), axis=2) * (1.0 / hw)  # (N, C)
        h = jnp.maximum(jnp.sum(y[:, None, :] * w1_ref[...][None, :, :], axis=-1), 0.0)
        z = jnp.sum(h[:, None, :] * w2_ref[...][None, :, :], axis=-1)
        s = 1.0 / (1.0 + jnp.exp(-z))                           # (N, C)
        o_ref[...] = (mix * s[:, :, None, None]).astype(o_ref.dtype)

    compete_se(x1_ref, w1a_ref, w2a_ref, o1_ref)
    compete_se(x2_ref, w1b_ref, w2b_ref, o2_ref)


def compete_se_pair(xg1, xg2, w1a, w2a, w1b, w2b, *, weight_chan, weight_spa):
    kern = functools.partial(_compete_se_pair_kernel,
                             wc=float(weight_chan), ws=float(weight_spa))
    return pl.pallas_call(
        kern,
        out_shape=(jax.ShapeDtypeStruct(xg1.shape, xg1.dtype),
                   jax.ShapeDtypeStruct(xg2.shape, xg2.dtype)),
    )(xg1, w1a, w2a, xg2, w1b, w2b)


# ---------------------------------------------------------------------------
# Kernel 4: both stages' PPU conv (5x5, stride 2) + 2x2 maxpool, fused
# ---------------------------------------------------------------------------
def _ppu_conv_pool_pair_kernel(p1_ref, w1_ref, b1_ref, p2_ref, w2_ref, b2_ref,
                               o1_ref, o2_ref):
    def conv_pool(p_ref, w_ref, b_ref, o_ref):
        # p_ref: (4, C_in*K*K, Npool) patches grouped by 2x2 pooling quadrant.
        # maxpool(conv + b) == max_q(conv_q) + b since the bias is per-channel.
        w = w_ref[...]
        r0 = jnp.dot(w, p_ref[0], preferred_element_type=jnp.float32)
        r1 = jnp.dot(w, p_ref[1], preferred_element_type=jnp.float32)
        r2 = jnp.dot(w, p_ref[2], preferred_element_type=jnp.float32)
        r3 = jnp.dot(w, p_ref[3], preferred_element_type=jnp.float32)
        pooled = jnp.maximum(jnp.maximum(r0, r1), jnp.maximum(r2, r3))
        o_ref[...] = (pooled + b_ref[...]).astype(o_ref.dtype)

    conv_pool(p1_ref, w1_ref, b1_ref, o1_ref)
    conv_pool(p2_ref, w2_ref, b2_ref, o2_ref)


def _ppu_quadrant_patches(x, K, stride=2):
    """im2col for a KxK/stride-2 VALID conv with columns grouped by the 2x2 maxpool
    quadrant that follows.  Returns ((4, C*K*K, N*Hp*Wp), (N, Hp, Wp))."""
    N, C, H, W = x.shape
    P, Ho, Wo = _im2col(x, K, stride)                           # (N, C, K*K, Ho, Wo)
    Hp, Wp = Ho // 2, Wo // 2                                   # MaxPool2d(2,2) floors
    quads = [P[:, :, :, dy:dy + 2 * Hp:2, dx:dx + 2 * Wp:2]
             for dy in (0, 1) for dx in (0, 1)]                 # (N, C, K*K, Hp, Wp) each
    Q = jnp.stack(quads, axis=0)                                # (4, N, C, K*K, Hp, Wp)
    Q = Q.transpose(0, 2, 3, 1, 4, 5).reshape(4, C * K * K, N * Hp * Wp)
    return Q, (N, Hp, Wp)


def ppu_conv_pool_pair(x1, w1, b1, x2, w2, b2):
    """Both stages' Conv2d(C, C2, 5, stride=2, pad=0) + MaxPool2d(2,2), one pallas_call."""
    C2 = w1.shape[0]
    P1, (N, Hp1, Wp1) = _ppu_quadrant_patches(x1, K=w1.shape[2])
    P2, (_, Hp2, Wp2) = _ppu_quadrant_patches(x2, K=w2.shape[2])

    o1, o2 = pl.pallas_call(
        _ppu_conv_pool_pair_kernel,
        out_shape=(jax.ShapeDtypeStruct((C2, N * Hp1 * Wp1), x1.dtype),
                   jax.ShapeDtypeStruct((C2, N * Hp2 * Wp2), x2.dtype)),
    )(P1, w1.reshape(C2, -1), b1.reshape(C2, 1).astype(jnp.float32),
      P2, w2.reshape(C2, -1), b2.reshape(C2, 1).astype(jnp.float32))

    f1 = o1.reshape(C2, N, Hp1, Wp1).transpose(1, 0, 2, 3).reshape(N, -1)
    f2 = o2.reshape(C2, N, Hp2, Wp2).transpose(1, 0, 2, 3).reshape(N, -1)
    return f1, f2


# ---------------------------------------------------------------------------
# CompetitiveBlock_Mul_Ord_Comp forward (4 pallas_calls total)
# ---------------------------------------------------------------------------
def competitive_block_forward(x, params, *, ksize, channel_in, n_competitor, weight):
    wc = weight
    ws = (1.0 - weight) / 2.0
    pad = ksize // 2

    k1 = gen_gabor_bank(ksize, channel_in, n_competitor,
                        params["g1_sigma"], params["g1_gamma"], params["g1_theta"],
                        params["g1_f"], params["g1_psi"])
    k2 = gen_gabor_bank(ksize, n_competitor, n_competitor,
                        params["g2_sigma"], params["g2_gamma"], params["g2_theta"],
                        params["g2_f"], params["g2_psi"])

    # two Learnable-Gabor convs (stage 2's LGC consumes stage 1's raw LGC output)
    xg1 = gabor_conv_mxu(x, k1, stride=2, padding=pad)          # pallas_call #1
    xg2 = gabor_conv_mxu(xg1, k2, stride=2, padding=pad)        # pallas_call #2

    # both stages' competitive-softmax mixture + SE, one fused call
    x_1, x_2 = compete_se_pair(xg1, xg2,
                               params["se1_w1"], params["se1_w2"],
                               params["se2_w1"], params["se2_w2"],
                               weight_chan=wc, weight_spa=ws)   # pallas_call #3

    # both stages' PPU conv + 2x2 maxpool, one fused call
    f1, f2 = ppu_conv_pool_pair(x_1, params["conv1_w"], params["conv1_b"],
                                x_2, params["conv2_w"], params["conv2_b"])  # pallas_call #4
    return jnp.concatenate([f1, f2], axis=1)


# ---------------------------------------------------------------------------
# Pure-JAX reference (mirrors the PyTorch forward) for correctness checking
# ---------------------------------------------------------------------------
def maxpool2x2(x):
    N, C, H, W = x.shape
    Ho, Wo = H // 2, W // 2
    xr = x[:, :, :Ho * 2, :Wo * 2].reshape(N, C, Ho, 2, Wo, 2)
    return jnp.max(xr, axis=(3, 5))


def _ref_conv(x, w, b, stride, padding):
    out = jax.lax.conv_general_dilated(
        x, w, (stride, stride), [(padding, padding), (padding, padding)],
        dimension_numbers=("NCHW", "OIHW", "NCHW"),
        precision=jax.lax.Precision.HIGHEST)
    if b is not None:
        out = out + b[None, :, None, None]
    return out


def _ref_compete_se(x, w1, w2, wc, ws):
    xc = wc * jax.nn.softmax(x, axis=1) \
         + ws * (jax.nn.softmax(x, axis=2) + jax.nn.softmax(x, axis=3))
    y = jnp.mean(xc, axis=(2, 3))                      # (N, C)
    h = jnp.maximum(y @ w1.T, 0.0)
    s = jax.nn.sigmoid(h @ w2.T)
    return xc * s[:, :, None, None]


def ref_forward(x, params, *, ksize, channel_in, n_competitor, weight):
    wc = weight
    ws = (1.0 - weight) / 2.0
    pad = ksize // 2
    k1 = gen_gabor_bank(ksize, channel_in, n_competitor,
                        params["g1_sigma"], params["g1_gamma"], params["g1_theta"],
                        params["g1_f"], params["g1_psi"])
    xg1 = _ref_conv(x, k1, None, 2, pad)
    x_1 = _ref_compete_se(xg1, params["se1_w1"], params["se1_w2"], wc, ws)
    x_1 = _ref_conv(x_1, params["conv1_w"], params["conv1_b"], 2, 0)
    x_1 = maxpool2x2(x_1)

    k2 = gen_gabor_bank(ksize, n_competitor, n_competitor,
                        params["g2_sigma"], params["g2_gamma"], params["g2_theta"],
                        params["g2_f"], params["g2_psi"])
    xg2 = _ref_conv(xg1, k2, None, 2, pad)
    x_2 = _ref_compete_se(xg2, params["se2_w1"], params["se2_w2"], wc, ws)
    x_2 = _ref_conv(x_2, params["conv2_w"], params["conv2_b"], 2, 0)
    x_2 = maxpool2x2(x_2)

    N = x.shape[0]
    return jnp.concatenate([x_1.reshape(N, -1), x_2.reshape(N, -1)], axis=1)


if __name__ == "__main__":
    # Module configuration (channel_in must be 1 per the docstring).
    # 32x32 input is the smallest clean size: after two stride-2 Gabor stages the
    # second PPU conv (5x5, stride 2, no pad) still has a valid >=5x5 input.
    channel_in = 1
    n_competitor = 8
    ksize = 5
    o1 = 32
    weight = 0.8
    init_ratio = 1.0

    key = jax.random.PRNGKey(0)
    kx, k1, k2, k3, k4, k5, k6, k7, k8 = jax.random.split(key, 9)
    x = jax.random.normal(kx, (2, channel_in, 32, 32), dtype=jnp.float32)

    theta = jnp.arange(n_competitor, dtype=jnp.float32) * math.pi / n_competitor
    params = {
        # GaborConv2d #1 (channel_in -> n_competitor), init as in the PyTorch ctor
        "g1_gamma": jnp.array([2.0], jnp.float32),
        "g1_sigma": jnp.array([9.2 * init_ratio], jnp.float32),
        "g1_theta": theta,
        "g1_f": jnp.array([0.057 / init_ratio], jnp.float32),
        "g1_psi": jnp.array([0.0], jnp.float32),
        # GaborConv2d #2 (n_competitor -> n_competitor)
        "g2_gamma": jnp.array([2.0], jnp.float32),
        "g2_sigma": jnp.array([9.2 * init_ratio], jnp.float32),
        "g2_theta": theta,
        "g2_f": jnp.array([0.057 / init_ratio], jnp.float32),
        "g2_psi": jnp.array([0.0], jnp.float32),
        # SELayer fc weights (reduction=1 -> square, bias-free)
        "se1_w1": 0.3 * jax.random.normal(k1, (n_competitor, n_competitor), jnp.float32),
        "se1_w2": 0.3 * jax.random.normal(k2, (n_competitor, n_competitor), jnp.float32),
        "se2_w1": 0.3 * jax.random.normal(k3, (n_competitor, n_competitor), jnp.float32),
        "se2_w2": 0.3 * jax.random.normal(k4, (n_competitor, n_competitor), jnp.float32),
        # PPU convs: Conv2d(n_competitor, o1//2, 5, stride=2, padding=0) with bias
        "conv1_w": 0.05 * jax.random.normal(k5, (o1 // 2, n_competitor, 5, 5), jnp.float32),
        "conv1_b": 0.05 * jax.random.normal(k6, (o1 // 2,), jnp.float32),
        "conv2_w": 0.05 * jax.random.normal(k7, (o1 // 2, n_competitor, 5, 5), jnp.float32),
        "conv2_b": 0.05 * jax.random.normal(k8, (o1 // 2,), jnp.float32),
    }

    fwd = functools.partial(competitive_block_forward, ksize=ksize,
                            channel_in=channel_in, n_competitor=n_competitor,
                            weight=weight)
    out = jax.jit(fwd)(x, params)
    out = jax.block_until_ready(out)

    ref = ref_forward(x, params, ksize=ksize, channel_in=channel_in,
                      n_competitor=n_competitor, weight=weight)
    assert out.shape == (2, 160), out.shape
    err = float(jnp.max(jnp.abs(out - ref)))
    # tolerance 2e-3 (vs HIGHEST-precision XLA reference) to cover the EUP
    # approximate-reciprocal softmax denominators used in the fused kernel.
    assert jnp.allclose(out, ref, atol=2e-3, rtol=2e-3), \
        f"mismatch vs reference: max abs err {err}"

    print("KERNEL_OK")
</pallas_src>

<mosaic_0001>
module attributes {stable_mosaic.version = 11 : i64} {
  func.func @_gabor_matmul_kernel(%arg0: memref<25x512xf32, #tpu.memory_space<vmem>>, %arg1: memref<8x25xf32, #tpu.memory_space<vmem>>, %arg2: memref<8x512xf32, #tpu.memory_space<vmem>>) attributes {dimension_semantics = [], scalar_prefetch = 0 : i64, scratch_operands = 0 : i64, tpu.core_type = #tpu.core_type<tc>} {
    %c0 = arith.constant 0 : index
    %c0_0 = arith.constant 0 : index
    %0 = vector.load %arg1[%c0, %c0_0] : memref<8x25xf32, #tpu.memory_space<vmem>>, vector<8x25xf32>
    %c0_1 = arith.constant 0 : index
    %c0_2 = arith.constant 0 : index
    %1 = vector.load %arg0[%c0_1, %c0_2] : memref<25x512xf32, #tpu.memory_space<vmem>>, vector<25x512xf32>
    %cst = arith.constant dense<0.000000e+00> : vector<8x512xf32>
    %2 = tpu.matmul %0, %1, %cst {dimension_numbers = #tpu.dot_dimension_numbers<[1], [0], [0], [1], [0, 0, 1, 1], [], []>} : vector<8x25xf32>, vector<25x512xf32>, vector<8x512xf32> -> vector<8x512xf32>
    %c0_3 = arith.constant 0 : index
    %c0_4 = arith.constant 0 : index
    %3 = vector.load %arg2[%c0_3, %c0_4] : memref<8x512xf32, #tpu.memory_space<vmem>>, vector<8x512xf32>
    tpu.vector_store %arg2[%c0_3, %c0_4], %2 {strides = array<i32>} : memref<8x512xf32, #tpu.memory_space<vmem>>, vector<8x512xf32>,
    return
  }
}

module attributes {stable_mosaic.version = 11 : i64} {
  func.func @_gabor_matmul_kernel(%arg0: memref<200x128xf32, #tpu.memory_space<vmem>>, %arg1: memref<8x200xf32, #tpu.memory_space<vmem>>, %arg2: memref<8x128xf32, #tpu.memory_space<vmem>>) attributes {dimension_semantics = [], scalar_prefetch = 0 : i64, scratch_operands = 0 : i64, tpu.core_type = #tpu.core_type<tc>} {
    %c0 = arith.constant 0 : index
    %c0_0 = arith.constant 0 : index
    %0 = vector.load %arg1[%c0, %c0_0] : memref<8x200xf32, #tpu.memory_space<vmem>>, vector<8x200xf32>
    %c0_1 = arith.constant 0 : index
    %c0_2 = arith.constant 0 : index
    %1 = vector.load %arg0[%c0_1, %c0_2] : memref<200x128xf32, #tpu.memory_space<vmem>>, vector<200x128xf32>
    %cst = arith.constant dense<0.000000e+00> : vector<8x128xf32>
    %2 = tpu.matmul %0, %1, %cst {dimension_numbers = #tpu.dot_dimension_numbers<[1], [0], [0], [1], [0, 0, 1, 1], [], []>} : vector<8x200xf32>, vector<200x128xf32>, vector<8x128xf32> -> vector<8x128xf32>
    %c0_3 = arith.constant 0 : index
    %c0_4 = arith.constant 0 : index
    %3 = vector.load %arg2[%c0_3, %c0_4] : memref<8x128xf32, #tpu.memory_space<vmem>>, vector<8x128xf32>
    tpu.vector_store %arg2[%c0_3, %c0_4], %2 {strides = array<i32>} : memref<8x128xf32, #tpu.memory_space<vmem>>, vector<8x128xf32>,
    return
  }
}

module attributes {stable_mosaic.version = 11 : i64} {
  func.func @_compete_se_pair_kernel(%arg0: memref<2x8x16x16xf32, #tpu.memory_space<vmem>>, %arg1: memref<8x8xf32, #tpu.memory_space<vmem>>, %arg2: memref<8x8xf32, #tpu.memory_space<vmem>>, %arg3: memref<2x8x8x8xf32, #tpu.memory_space<vmem>>, %arg4: memref<8x8xf32, #tpu.memory_space<vmem>>, %arg5: memref<8x8xf32, #tpu.memory_space<vmem>>, %arg6: memref<2x8x16x16xf32, #tpu.memory_space<vmem>>, %arg7: memref<2x8x8x8xf32, #tpu.memory_space<vmem>>) attributes {dimension_semantics = [], scalar_prefetch = 0 : i64, scratch_operands = 0 : i64, tpu.core_type = #tpu.core_type<tc>} {
    %c0 = arith.constant 0 : index
    %c0_0 = arith.constant 0 : index
    %c0_1 = arith.constant 0 : index
    %c0_2 = arith.constant 0 : index
    %0 = vector.load %arg0[%c0, %c0_0, %c0_1, %c0_2] : memref<2x8x16x16xf32, #tpu.memory_space<vmem>>, vector<2x8x16x16xf32>
    %cst = arith.constant dense<0xFF800000> : vector<2x8x16xf32>
    %1 = vector.multi_reduction <maximumf>, %0, %cst [3] : vector<2x8x16x16xf32> to vector<2x8x16xf32>
    %2 = vector.shape_cast %1 : vector<2x8x16xf32> to vector<2x8x16x1xf32>
    %cst_3 = arith.constant dense<0xFF800000> : vector<2x8x1xf32>
    %3 = vector.multi_reduction <maximumf>, %2, %cst_3 [2] : vector<2x8x16x1xf32> to vector<2x8x1xf32>
    %4 = vector.shape_cast %3 : vector<2x8x1xf32> to vector<2x8x1x1xf32>
    %cst_4 = arith.constant dense<0xFF800000> : vector<2x1x1xf32>
    %5 = vector.multi_reduction <maximumf>, %4, %cst_4 [1] : vector<2x8x1x1xf32> to vector<2x1x1xf32>
    %6 = vector.shape_cast %5 : vector<2x1x1xf32> to vector<2x1x1x1xf32>
    %7 = vector.broadcast %6 : vector<2x1x1x1xf32> to vector<2x8x16x16xf32>
    %8 = arith.subf %0, %7 : vector<2x8x16x16xf32>
    %9 = math.exp %8 : vector<2x8x16x16xf32>
    %cst_5 = arith.constant dense<0.000000e+00> : vector<2x16x16xf32>
    %10 = vector.multi_reduction <add>, %9, %cst_5 [1] : vector<2x8x16x16xf32> to vector<2x16x16xf32>
    %11 = vector.shape_cast %10 : vector<2x16x16xf32> to vector<2x1x16x16xf32>
    %12 = tpu.reciprocal %11 {approx = true} : vector<2x1x16x16xf32> -> vector<2x1x16x16xf32>
    %cst_6 = arith.constant dense<0.000000e+00> : vector<2x8x16xf32>
    %13 = vector.multi_reduction <add>, %9, %cst_6 [2] : vector<2x8x16x16xf32> to vector<2x8x16xf32>
    %14 = vector.shape_cast %13 : vector<2x8x16xf32> to vector<2x8x1x16xf32>
    %15 = tpu.reciprocal %14 {approx = true} : vector<2x8x1x16xf32> -> vector<2x8x1x16xf32>
    %cst_7 = arith.constant dense<0.000000e+00> : vector<2x8x16xf32>
    %16 = vector.multi_reduction <add>, %9, %cst_7 [3] : vector<2x8x16x16xf32> to vector<2x8x16xf32>
    %17 = vector.shape_cast %16 : vector<2x8x16xf32> to vector<2x8x16x1xf32>
    %18 = tpu.reciprocal %17 {approx = true} : vector<2x8x16x1xf32> -> vector<2x8x16x1xf32>
    %cst_8 = arith.constant 8.000000e-01 : f32
    %19 = vector.broadcast %cst_8 : f32 to vector<2x1x16x16xf32>
    %20 = arith.mulf %19, %12 : vector<2x1x16x16xf32>
    %21 = vector.broadcast %15 : vector<2x8x1x16xf32> to vector<2x8x16x16xf32>
    %22 = vector.broadcast %18 : vector<2x8x16x1xf32> to vector<2x8x16x16xf32>
    %23 = arith.addf %21, %22 : vector<2x8x16x16xf32>
    %cst_9 = arith.constant 1.000000e-01 : f32
    %24 = vector.broadcast %cst_9 : f32 to vector<2x8x16x16xf32>
    %25 = arith.mulf %24, %23 : vector<2x8x16x16xf32>
    %26 = vector.broadcast %20 : vector<2x1x16x16xf32> to vector<2x8x16x16xf32>
    %27 = arith.addf %26, %25 : vector<2x8x16x16xf32>
    %28 = arith.mulf %9, %27 : vector<2x8x16x16xf32>
    %cst_10 = arith.constant dense<0.000000e+00> : vector<2x8x16xf32>
    %29 = vector.multi_reduction <add>, %28, %cst_10 [3] : vector<2x8x16x16xf32> to vector<2x8x16xf32>
    %cst_11 = arith.constant dense<0.000000e+00> : vector<2x8xf32>
    %30 = vector.multi_reduction <add>, %29, %cst_11 [2] : vector<2x8x16xf32> to vector<2x8xf32>
    %cst_12 = arith.constant 3.906250e-03 : f32
    %31 = vector.broadcast %cst_12 : f32 to vector<2x8xf32>
    %32 = arith.mulf %30, %31 : vector<2x8xf32>
    %33 = vector.shape_cast %32 : vector<2x8xf32> to vector<2x1x8xf32>
    %c0_13 = arith.constant 0 : index
    %c0_14 = arith.constant 0 : index
    %34 = vector.load %arg1[%c0_13, %c0_14] : memref<8x8xf32, #tpu.memory_space<vmem>>, vector<8x8xf32>
    %35 = vector.shape_cast %34 : vector<8x8xf32> to vector<1x8x8xf32>
    %36 = vector.broadcast %33 : vector<2x1x8xf32> to vector<2x8x8xf32>
    %37 = vector.broadcast %35 : vector<1x8x8xf32> to vector<2x8x8xf32>
    %38 = arith.mulf %36, %37 : vector<2x8x8xf32>
    %cst_15 = arith.constant dense<0.000000e+00> : vector<2x8xf32>
    %39 = vector.multi_reduction <add>, %38, %cst_15 [2] : vector<2x8x8xf32> to vector<2x8xf32>
    %cst_16 = arith.constant 0.000000e+00 : f32
    %40 = vector.broadcast %cst_16 : f32 to vector<2x8xf32>
    %41 = arith.maximumf %39, %40 : vector<2x8xf32>
    %42 = vector.shape_cast %41 : vector<2x8xf32> to vector<2x1x8xf32>
    %c0_17 = arith.constant 0 : index
    %c0_18 = arith.constant 0 : index
    %43 = vector.load %arg2[%c0_17, %c0_18] : memref<8x8xf32, #tpu.memory_space<vmem>>, vector<8x8xf32>
    %44 = vector.shape_cast %43 : vector<8x8xf32> to vector<1x8x8xf32>
    %45 = vector.broadcast %42 : vector<2x1x8xf32> to vector<2x8x8xf32>
    %46 = vector.broadcast %44 : vector<1x8x8xf32> to vector<2x8x8xf32>
    %47 = arith.mulf %45, %46 : vector<2x8x8xf32>
    %cst_19 = arith.constant dense<0.000000e+00> : vector<2x8xf32>
    %48 = vector.multi_reduction <add>, %47, %cst_19 [2] : vector<2x8x8xf32> to vector<2x8xf32>
    %cst_20 = arith.constant 0.000000e+00 : f32
    %49 = vector.broadcast %cst_20 : f32 to vector<2x8xf32>
    %50 = arith.subf %49, %48 : vector<2x8xf32>
    %51 = math.exp %50 : vector<2x8xf32>
    %cst_21 = arith.constant 1.000000e+00 : f32
    %52 = vector.broadcast %cst_21 : f32 to vector<2x8xf32>
    %53 = arith.addf %52, %51 : vector<2x8xf32>
    %cst_22 = arith.constant 1.000000e+00 : f32
    %54 = vector.broadcast %cst_22 : f32 to vector<2x8xf32>
    %55 = arith.divf %54, %53 : vector<2x8xf32>
    %56 = vector.shape_cast %55 : vector<2x8xf32> to vector<2x8x1x1xf32>
    %57 = vector.broadcast %56 : vector<2x8x1x1xf32> to vector<2x8x16x16xf32>
    %58 = arith.mulf %28, %57 : vector<2x8x16x16xf32>
    %c0_23 = arith.constant 0 : index
    %c0_24 = arith.constant 0 : index
    %c0_25 = arith.constant 0 : index
    %c0_26 = arith.constant 0 : index
    %59 = vector.load %arg6[%c0_23, %c0_24, %c0_25, %c0_26] : memref<2x8x16x16xf32, #tpu.memory_space<vmem>>, vector<2x8x16x16xf32>
    tpu.vector_store %arg6[%c0_23, %c0_24, %c0_25, %c0_26], %58 {strides = array<i32>} : memref<2x8x16x16xf32, #tpu.memory_space<vmem>>, vector<2x8x16x16xf32>,
    %c0_27 = arith.constant 0 : index
    %c0_28 = arith.constant 0 : index
    %c0_29 = arith.constant 0 : index
    %c0_30 = arith.constant 0 : index
    %60 = vector.load %arg3[%c0_27, %c0_28, %c0_29, %c0_30] : memref<2x8x8x8xf32, #tpu.memory_space<vmem>>, vector<2x8x8x8xf32>
    %cst_31 = arith.constant dense<0xFF800000> : vector<2x8x8xf32>
    %61 = vector.multi_reduction <maximumf>, %60, %cst_31 [3] : vector<2x8x8x8xf32> to vector<2x8x8xf32>
    %62 = vector.shape_cast %61 : vector<2x8x8xf32> to vector<2x8x8x1xf32>
    %cst_32 = arith.constant dense<0xFF800000> : vector<2x8x1xf32>
    %63 = vector.multi_reduction <maximumf>, %62, %cst_32 [2] : vector<2x8x8x1xf32> to vector<2x8x1xf32>
    %64 = vector.shape_cast %63 : vector<2x8x1xf32> to vector<2x8x1x1xf32>
    %cst_33 = arith.constant dense<0xFF800000> : vector<2x1x1xf32>
    %65 = vector.multi_reduction <maximumf>, %64, %cst_33 [1] : vector<2x8x1x1xf32> to vector<2x1x1xf32>
    %66 = vector.shape_cast %65 : vector<2x1x1xf32> to vector<2x1x1x1xf32>
    %67 = vector.broadcast %66 : vector<2x1x1x1xf32> to vector<2x8x8x8xf32>
    %68 = arith.subf %60, %67 : vector<2x8x8x8xf32>
    %69 = math.exp %68 : vector<2x8x8x8xf32>
    %cst_34 = arith.constant dense<0.000000e+00> : vector<2x8x8xf32>
    %70 = vector.multi_reduction <add>, %69, %cst_34 [1] : vector<2x8x8x8xf32> to vector<2x8x8xf32>
    %71 = vector.shape_cast %70 : vector<2x8x8xf32> to vector<2x1x8x8xf32>
    %72 = tpu.reciprocal %71 {approx = true} : vector<2x1x8x8xf32> -> vector<2x1x8x8xf32>
    %cst_35 = arith.constant dense<0.000000e+00> : vector<2x8x8xf32>
    %73 = vector.multi_reduction <add>, %69, %cst_35 [2] : vector<2x8x8x8xf32> to vector<2x8x8xf32>
    %74 = vector.shape_cast %73 : vector<2x8x8xf32> to vector<2x8x1x8xf32>
    %75 = tpu.reciprocal %74 {approx = true} : vector<2x8x1x8xf32> -> vector<2x8x1x8xf32>
    %cst_36 = arith.constant dense<0.000000e+00> : vector<2x8x8xf32>
    %76 = vector.multi_reduction <add>, %69, %cst_36 [3] : vector<2x8x8x8xf32> to vector<2x8x8xf32>
    %77 = vector.shape_cast %76 : vector<2x8x8xf32> to vector<2x8x8x1xf32>
    %78 = tpu.reciprocal %77 {approx = true} : vector<2x8x8x1xf32> -> vector<2x8x8x1xf32>
    %cst_37 = arith.constant 8.000000e-01 : f32
    %79 = vector.broadcast %cst_37 : f32 to vector<2x1x8x8xf32>
    %80 = arith.mulf %79, %72 : vector<2x1x8x8xf32>
    %81 = vector.broadcast %75 : vector<2x8x1x8xf32> to vector<2x8x8x8xf32>
    %82 = vector.broadcast %78 : vector<2x8x8x1xf32> to vector<2x8x8x8xf32>
    %83 = arith.addf %81, %82 : vector<2x8x8x8xf32>
    %cst_38 = arith.constant 1.000000e-01 : f32
    %84 = vector.broadcast %cst_38 : f32 to vector<2x8x8x8xf32>
    %85 = arith.mulf %84, %83 : vector<2x8x8x8xf32>
    %86 = vector.broadcast %80 : vector<2x1x8x8xf32> to vector<2x8x8x8xf32>
    %87 = arith.addf %86, %85 : vector<2x8x8x8xf32>
    %88 = arith.mulf %69, %87 : vector<2x8x8x8xf32>
    %cst_39 = arith.constant dense<0.000000e+00> : vector<2x8x8xf32>
    %89 = vector.multi_reduction <add>, %88, %cst_39 [3] : vector<2x8x8x8xf32> to vector<2x8x8xf32>
    %cst_40 = arith.constant dense<0.000000e+00> : vector<2x8xf32>
    %90 = vector.multi_reduction <add>, %89, %cst_40 [2] : vector<2x8x8xf32> to vector<2x8xf32>
    %cst_41 = arith.constant 1.562500e-02 : f32
    %91 = vector.broadcast %cst_41 : f32 to vector<2x8xf32>
    %92 = arith.mulf %90, %91 : vector<2x8xf32>
    %93 = vector.shape_cast %92 : vector<2x8xf32> to vector<2x1x8xf32>
    %c0_42 = arith.constant 0 : index
    %c0_43 = arith.constant 0 : index
    %94 = vector.load %arg4[%c0_42, %c0_43] : memref<8x8xf32, #tpu.memory_space<vmem>>, vector<8x8xf32>
    %95 = vector.shape_cast %94 : vector<8x8xf32> to vector<1x8x8xf32>
    %96 = vector.broadcast %93 : vector<2x1x8xf32> to vector<2x8x8xf32>
    %97 = vector.broadcast %95 : vector<1x8x8xf32> to vector<2x8x8xf32>
    %98 = arith.mulf %96, %97 : vector<2x8x8xf32>
    %cst_44 = arith.constant dense<0.000000e+00> : vector<2x8xf32>
    %99 = vector.multi_reduction <add>, %98, %cst_44 [2] : vector<2x8x8xf32> to vector<2x8xf32>
    %cst_45 = arith.constant 0.000000e+00 : f32
    %100 = vector.broadcast %cst_45 : f32 to vector<2x8xf32>
    %101 = arith.maximumf %99, %100 : vector<2x8xf32>
    %102 = vector.shape_cast %101 : vector<2x8xf32> to vector<2x1x8xf32>
    %c0_46 = arith.constant 0 : index
    %c0_47 = arith.constant 0 : index
    %103 = vector.load %arg5[%c0_46, %c0_47] : memref<8x8xf32, #tpu.memory_space<vmem>>, vector<8x8xf32>
    %104 = vector.shape_cast %103 : vector<8x8xf32> to vector<1x8x8xf32>
    %105 = vector.broadcast %102 : vector<2x1x8xf32> to vector<2x8x8xf32>
    %106 = vector.broadcast %104 : vector<1x8x8xf32> to vector<2x8x8xf32>
    %107 = arith.mulf %105, %106 : vector<2x8x8xf32>
    %cst_48 = arith.constant dense<0.000000e+00> : vector<2x8xf32>
    %108 = vector.multi_reduction <add>, %107, %cst_48 [2] : vector<2x8x8xf32> to vector<2x8xf32>
    %cst_49 = arith.constant 0.000000e+00 : f32
    %109 = vector.broadcast %cst_49 : f32 to vector<2x8xf32>
    %110 = arith.subf %109, %108 : vector<2x8xf32>
    %111 = math.exp %110 : vector<2x8xf32>
    %cst_50 = arith.constant 1.000000e+00 : f32
    %112 = vector.broadcast %cst_50 : f32 to vector<2x8xf32>
    %113 = arith.addf %112, %111 : vector<2x8xf32>
    %cst_51 = arith.constant 1.000000e+00 : f32
    %114 = vector.broadcast %cst_51 : f32 to vector<2x8xf32>
    %115 = arith.divf %114, %113 : vector<2x8xf32>
    %116 = vector.shape_cast %115 : vector<2x8xf32> to vector<2x8x1x1xf32>
    %117 = vector.broadcast %116 : vector<2x8x1x1xf32> to vector<2x8x8x8xf32>
    %118 = arith.mulf %88, %117 : vector<2x8x8x8xf32>
    %c0_52 = arith.constant 0 : index
    %c0_53 = arith.constant 0 : index
    %c0_54 = arith.constant 0 : index
    %c0_55 = arith.constant 0 : index
    %119 = vector.load %arg7[%c0_52, %c0_53, %c0_54, %c0_55] : memref<2x8x8x8xf32, #tpu.memory_space<vmem>>, vector<2x8x8x8xf32>
    tpu.vector_store %arg7[%c0_52, %c0_53, %c0_54, %c0_55], %118 {strides = array<i32>} : memref<2x8x8x8xf32, #tpu.memory_space<vmem>>, vector<2x8x8x8xf32>,
    return
  }
}

module attributes {stable_mosaic.version = 11 : i64} {
  func.func @_ppu_conv_pool_pair_kernel(%arg0: memref<4x200x18xf32, #tpu.memory_space<vmem>>, %arg1: memref<16x200xf32, #tpu.memory_space<vmem>>, %arg2: memref<16x1xf32, #tpu.memory_space<vmem>>, %arg3: memref<4x200x2xf32, #tpu.memory_space<vmem>>, %arg4: memref<16x200xf32, #tpu.memory_space<vmem>>, %arg5: memref<16x1xf32, #tpu.memory_space<vmem>>, %arg6: memref<16x18xf32, #tpu.memory_space<vmem>>, %arg7: memref<16x2xf32, #tpu.memory_space<vmem>>) attributes {dimension_semantics = [], scalar_prefetch = 0 : i64, scratch_operands = 0 : i64, tpu.core_type = #tpu.core_type<tc>} {
    %c0 = arith.constant 0 : index
    %c0_0 = arith.constant 0 : index
    %0 = vector.load %arg1[%c0, %c0_0] : memref<16x200xf32, #tpu.memory_space<vmem>>, vector<16x200xf32>
    %c0_1 = arith.constant 0 : index
    %c0_2 = arith.constant 0 : index
    %c0_3 = arith.constant 0 : index
    %1 = vector.load %arg0[%c0_1, %c0_2, %c0_3] : memref<4x200x18xf32, #tpu.memory_space<vmem>>, vector<1x200x18xf32>
    %2 = vector.shape_cast %1 : vector<1x200x18xf32> to vector<200x18xf32>
    %cst = arith.constant dense<0.000000e+00> : vector<16x18xf32>
    %3 = tpu.matmul %0, %2, %cst {dimension_numbers = #tpu.dot_dimension_numbers<[1], [0], [0], [1], [0, 0, 1, 1], [], []>} : vector<16x200xf32>, vector<200x18xf32>, vector<16x18xf32> -> vector<16x18xf32>
    %c1 = arith.constant 1 : index
    %c0_4 = arith.constant 0 : index
    %c0_5 = arith.constant 0 : index
    %4 = vector.load %arg0[%c1, %c0_4, %c0_5] : memref<4x200x18xf32, #tpu.memory_space<vmem>>, vector<1x200x18xf32>
    %5 = vector.shape_cast %4 : vector<1x200x18xf32> to vector<200x18xf32>
    %cst_6 = arith.constant dense<0.000000e+00> : vector<16x18xf32>
    %6 = tpu.matmul %0, %5, %cst_6 {dimension_numbers = #tpu.dot_dimension_numbers<[1], [0], [0], [1], [0, 0, 1, 1], [], []>} : vector<16x200xf32>, vector<200x18xf32>, vector<16x18xf32> -> vector<16x18xf32>
    %c2 = arith.constant 2 : index
    %c0_7 = arith.constant 0 : index
    %c0_8 = arith.constant 0 : index
    %7 = vector.load %arg0[%c2, %c0_7, %c0_8] : memref<4x200x18xf32, #tpu.memory_space<vmem>>, vector<1x200x18xf32>
    %8 = vector.shape_cast %7 : vector<1x200x18xf32> to vector<200x18xf32>
    %cst_9 = arith.constant dense<0.000000e+00> : vector<16x18xf32>
    %9 = tpu.matmul %0, %8, %cst_9 {dimension_numbers = #tpu.dot_dimension_numbers<[1], [0], [0], [1], [0, 0, 1, 1], [], []>} : vector<16x200xf32>, vector<200x18xf32>, vector<16x18xf32> -> vector<16x18xf32>
    %c3 = arith.constant 3 : index
    %c0_10 = arith.constant 0 : index
    %c0_11 = arith.constant 0 : index
    %10 = vector.load %arg0[%c3, %c0_10, %c0_11] : memref<4x200x18xf32, #tpu.memory_space<vmem>>, vector<1x200x18xf32>
    %11 = vector.shape_cast %10 : vector<1x200x18xf32> to vector<200x18xf32>
    %cst_12 = arith.constant dense<0.000000e+00> : vector<16x18xf32>
    %12 = tpu.matmul %0, %11, %cst_12 {dimension_numbers = #tpu.dot_dimension_numbers<[1], [0], [0], [1], [0, 0, 1, 1], [], []>} : vector<16x200xf32>, vector<200x18xf32>, vector<16x18xf32> -> vector<16x18xf32>
    %13 = arith.maximumf %3, %6 : vector<16x18xf32>
    %14 = arith.maximumf %9, %12 : vector<16x18xf32>
    %15 = arith.maximumf %13, %14 : vector<16x18xf32>
    %c0_13 = arith.constant 0 : index
    %c0_14 = arith.constant 0 : index
    %16 = vector.load %arg2[%c0_13, %c0_14] : memref<16x1xf32, #tpu.memory_space<vmem>>, vector<16x1xf32>
    %17 = vector.broadcast %16 : vector<16x1xf32> to vector<16x18xf32>
    %18 = arith.addf %15, %17 : vector<16x18xf32>
    %c0_15 = arith.constant 0 : index
    %c0_16 = arith.constant 0 : index
    %19 = vector.load %arg6[%c0_15, %c0_16] : memref<16x18xf32, #tpu.memory_space<vmem>>, vector<16x18xf32>
    tpu.vector_store %arg6[%c0_15, %c0_16], %18 {strides = array<i32>} : memref<16x18xf32, #tpu.memory_space<vmem>>, vector<16x18xf32>,
    %c0_17 = arith.constant 0 : index
    %c0_18 = arith.constant 0 : index
    %20 = vector.load %arg4[%c0_17, %c0_18] : memref<16x200xf32, #tpu.memory_space<vmem>>, vector<16x200xf32>
    %c0_19 = arith.constant 0 : index
    %c0_20 = arith.constant 0 : index
    %c0_21 = arith.constant 0 : index
    %21 = vector.load %arg3[%c0_19, %c0_20, %c0_21] : memref<4x200x2xf32, #tpu.memory_space<vmem>>, vector<1x200x2xf32>
    %22 = vector.shape_cast %21 : vector<1x200x2xf32> to vector<200x2xf32>
    %cst_22 = arith.constant dense<0.000000e+00> : vector<16x2xf32>
    %23 = tpu.matmul %20, %22, %cst_22 {dimension_numbers = #tpu.dot_dimension_numbers<[1], [0], [0], [1], [0, 0, 1, 1], [], []>} : vector<16x200xf32>, vector<200x2xf32>, vector<16x2xf32> -> vector<16x2xf32>
    %c1_23 = arith.constant 1 : index
    %c0_24 = arith.constant 0 : index
    %c0_25 = arith.constant 0 : index
    %24 = vector.load %arg3[%c1_23, %c0_24, %c0_25] : memref<4x200x2xf32, #tpu.memory_space<vmem>>, vector<1x200x2xf32>
    %25 = vector.shape_cast %24 : vector<1x200x2xf32> to vector<200x2xf32>
    %cst_26 = arith.constant dense<0.000000e+00> : vector<16x2xf32>
    %26 = tpu.matmul %20, %25, %cst_26 {dimension_numbers = #tpu.dot_dimension_numbers<[1], [0], [0], [1], [0, 0, 1, 1], [], []>} : vector<16x200xf32>, vector<200x2xf32>, vector<16x2xf32> -> vector<16x2xf32>
    %c2_27 = arith.constant 2 : index
    %c0_28 = arith.constant 0 : index
    %c0_29 = arith.constant 0 : index
    %27 = vector.load %arg3[%c2_27, %c0_28, %c0_29] : memref<4x200x2xf32, #tpu.memory_space<vmem>>, vector<1x200x2xf32>
    %28 = vector.shape_cast %27 : vector<1x200x2xf32> to vector<200x2xf32>
    %cst_30 = arith.constant dense<0.000000e+00> : vector<16x2xf32>
    %29 = tpu.matmul %20, %28, %cst_30 {dimension_numbers = #tpu.dot_dimension_numbers<[1], [0], [0], [1], [0, 0, 1, 1], [], []>} : vector<16x200xf32>, vector<200x2xf32>, vector<16x2xf32> -> vector<16x2xf32>
    %c3_31 = arith.constant 3 : index
    %c0_32 = arith.constant 0 : index
    %c0_33 = arith.constant 0 : index
    %30 = vector.load %arg3[%c3_31, %c0_32, %c0_33] : memref<4x200x2xf32, #tpu.memory_space<vmem>>, vector<1x200x2xf32>
    %31 = vector.shape_cast %30 : vector<1x200x2xf32> to vector<200x2xf32>
    %cst_34 = arith.constant dense<0.000000e+00> : vector<16x2xf32>
    %32 = tpu.matmul %20, %31, %cst_34 {dimension_numbers = #tpu.dot_dimension_numbers<[1], [0], [0], [1], [0, 0, 1, 1], [], []>} : vector<16x200xf32>, vector<200x2xf32>, vector<16x2xf32> -> vector<16x2xf32>
    %33 = arith.maximumf %23, %26 : vector<16x2xf32>
    %34 = arith.maximumf %29, %32 : vector<16x2xf32>
    %35 = arith.maximumf %33, %34 : vector<16x2xf32>
    %c0_35 = arith.constant 0 : index
    %c0_36 = arith.constant 0 : index
    %36 = vector.load %arg5[%c0_35, %c0_36] : memref<16x1xf32, #tpu.memory_space<vmem>>, vector<16x1xf32>
    %37 = vector.broadcast %36 : vector<16x1xf32> to vector<16x2xf32>
    %38 = arith.addf %35, %37 : vector<16x2xf32>
    %c0_37 = arith.constant 0 : index
    %c0_38 = arith.constant 0 : index
    %39 = vector.load %arg7[%c0_37, %c0_38] : memref<16x2xf32, #tpu.memory_space<vmem>>, vector<16x2xf32>
    tpu.vector_store %arg7[%c0_37, %c0_38], %38 {strides = array<i32>} : memref<16x2xf32, #tpu.memory_space<vmem>>, vector<16x2xf32>,
    return
  }
}

</mosaic_0001>

<llo_original>
// kernel: competitive_block_forward.4
$region0: #{competitive_block_forward.4}
  #allocation0 [shape = 'u32[]', space=smem, size = 0x4, offset = 0x4, fixed_abs, tag = 'smem constant byte address 0x4 - core index']
  #allocation1 [shape = 'u32[72,128]{1,0:T(1,128)}', space=vmem, size = 0x9000, scoped, tag = 'internal scratch']
  %s0 = inlined_call_operand.vmem [shape: f32[25,512], index: 0, kind: input, shape index: {}]
  %s1 = inlined_call_operand.vmem [shape: f32[8,25], index: 1, kind: input, shape index: {}]
  %s2 = inlined_call_operand.vmem [shape: f32[8,512], index: 2, kind: output, shape index: {}]
  %s3 = sld [smem:[#allocation0]]
  $region18: #{competitive_block_forward.4} parent=0
    _
  %s5 = ssub.s32 1, %s3
  %s6 = scalar_select 0, %s5, %s3
  // Predicated region
  $region2: #{competitive_block_forward.4} parent=0 // pred_check
    _
  $region3: #{competitive_block_forward.4} parent=0 // pred_check_branch
    %8 = sbr.rel (0) target = $region5
  $region4: #{competitive_block_forward.4} parent=0 // pred_region
    _
  $region5: #{competitive_block_forward.4} parent=0 // pred_fallthru
    _
  // Predicated region
  $region6: #{competitive_block_forward.4} parent=0 // pred_check
    _
  $region7: #{competitive_block_forward.4} parent=0 // pred_check_branch
    %10 = sbr.rel (0) target = $region9
  $region8: #{competitive_block_forward.4} parent=0 // pred_region
    _
  $region9: #{competitive_block_forward.4} parent=0 // pred_fallthru
    _
  %v11 = vld [vmem:[%s1] sm:$0xff]
  %v12 = vld [vmem:[%s0] sm:$0xff]
  %v13 = vld [vmem:[%s0 + $0x8] sm:$0xff]
  %v14 = vld [vmem:[%s0 + $0x10] sm:$0xff]
  %v15 = vld [vmem:[%s0 + $0x18] sm:$0xff]
  %v16 = vld [vmem:[%s0 + $0x20] sm:$0xff]
  %v17 = vld [vmem:[%s0 + $0x28] sm:$0xff]
  %v18 = vld [vmem:[%s0 + $0x30] sm:$0xff]
  %v19 = vld [vmem:[%s0 + $0x38] sm:$0xff]
  %v20 = vld [vmem:[%s0 + $0x40] sm:$0xff]
  %v21 = vld [vmem:[%s0 + $0x48] sm:$0xff]
  %v22 = vld [vmem:[%s0 + $0x50] sm:$0xff]
  %v23 = vld [vmem:[%s0 + $0x58] sm:$0xff]
  %v24 = vld [vmem:[%s0 + $0x60] sm:$0x1]
  %v25 = vld [vmem:[%s0 + $0x68] sm:$0x1]
  %v26 = vld [vmem:[%s0 + $0x70] sm:$0x1]
  %v27 = vld [vmem:[%s0 + $0x78] sm:$0x1]
  %vm28 = vcmask 203776
  %v30 = vsel %vm28, %v11, 0
  %vm32 = vcmask 1040384
  %v34 = vsel %vm32, %v24, 0
  %v37 = vsel %vm32, %v25, 0
  %v40 = vsel %vm32, %v26, 0
  %v43 = vsel %vm32, %v27, 0
  %45 = vmatpush.msra.mxu0 0.0
  %46 = vmatpush.msra.mxu0 0.0
  %47 = vmatpush.msra.mxu0 0.0
  %48 = vmatpush.msra.mxu0 0.0
  %49 = vmatpush.msra.mxu0 0.0
  %50 = vmatpush.msra.mxu0 0.0
  %51 = vmatpush.msra.mxu0 0.0
  %52 = vmatpush.msra.mxu0 0.0
  %53 = vmatpush.msra.mxu0 0.0
  %54 = vmatpush.msra.mxu0 0.0
  %55 = vmatpush.msra.mxu0 0.0
  %56 = vmatpush.msra.mxu0 0.0
  %57 = vmatpush.msra.mxu0 %v34
  %58 = vmatpush.msra.mxu0 %v20
  %59 = vmatpush.msra.mxu0 %v16
  %60 = vmatpush.msra.mxu0 %v12
  %61 = vmatmul.f32.gmra.mxu0 %v30
  %v62 = vpop.f32.mrf.mxu0
  %v63 = vadd.f32 0.0, %v62
  %64 = vdwg.mxu0
  %65 = vmatpush.msra.mxu0 0.0
  %66 = vmatpush.msra.mxu0 0.0
  %67 = vmatpush.msra.mxu0 0.0
  %68 = vmatpush.msra.mxu0 0.0
  %69 = vmatpush.msra.mxu0 0.0
  %70 = vmatpush.msra.mxu0 0.0
  %71 = vmatpush.msra.mxu0 0.0
  %72 = vmatpush.msra.mxu0 0.0
  %73 = vmatpush.msra.mxu0 0.0
  %74 = vmatpush.msra.mxu0 0.0
  %75 = vmatpush.msra.mxu0 0.0
  %76 = vmatpush.msra.mxu0 0.0
  %77 = vmatpush.msra.mxu0 %v37
  %78 = vmatpush.msra.mxu0 %v21
  %79 = vmatpush.msra.mxu0 %v17
  %80 = vmatpush.msra.mxu0 %v13
  %81 = vmatmul.f32.gmra.mxu0 %v30
  %v82 = vpop.f32.mrf.mxu0
  %v83 = vadd.f32 0.0, %v82
  %84 = vdwg.mxu0
  %85 = vmatpush.msra.mxu0 0.0
  %86 = vmatpush.msra.mxu0 0.0
  %87 = vmatpush.msra.mxu0 0.0
  %88 = vmatpush.msra.mxu0 0.0
  %89 = vmatpush.msra.mxu0 0.0
  %90 = vmatpush.msra.mxu0 0.0
  %91 = vmatpush.msra.mxu0 0.0
  %92 = vmatpush.msra.mxu0 0.0
  %93 = vmatpush.msra.mxu0 0.0
  %94 = vmatpush.msra.mxu0 0.0
  %95 = vmatpush.msra.mxu0 0.0
  %96 = vmatpush.msra.mxu0 0.0
  %97 = vmatpush.msra.mxu0 %v40
  %98 = vmatpush.msra.mxu0 %v22
  %99 = vmatpush.msra.mxu0 %v18
  %100 = vmatpush.msra.mxu0 %v14
  %101 = vmatmul.f32.gmra.mxu0 %v30
  %v102 = vpop.f32.mrf.mxu0
  %v103 = vadd.f32 0.0, %v102
  %104 = vdwg.mxu0
  %105 = vmatpush.msra.mxu0 0.0
  %106 = vmatpush.msra.mxu0 0.0
  %107 = vmatpush.msra.mxu0 0.0
  %108 = vmatpush.msra.mxu0 0.0
  %109 = vmatpush.msra.mxu0 0.0
  %110 = vmatpush.msra.mxu0 0.0
  %111 = vmatpush.msra.mxu0 0.0
  %112 = vmatpush.msra.mxu0 0.0
  %113 = vmatpush.msra.mxu0 0.0
  %114 = vmatpush.msra.mxu0 0.0
  %115 = vmatpush.msra.mxu0 0.0
  %116 = vmatpush.msra.mxu0 0.0
  %117 = vmatpush.msra.mxu0 %v43
  %118 = vmatpush.msra.mxu0 %v23
  %119 = vmatpush.msra.mxu0 %v19
  %120 = vmatpush.msra.mxu0 %v15
  %121 = vmatmul.f32.gmra.mxu0 %v30
  %v122 = vpop.f32.mrf.mxu0
  %v123 = vadd.f32 0.0, %v122
  %124 = vdwg.mxu0
  %125 = vst [vmem:[%s2] sm:$0xff] %v63
  %126 = vst [vmem:[%s2 + $0x8] sm:$0xff] %v83
  %127 = vst [vmem:[%s2 + $0x10] sm:$0xff] %v103
  %128 = vst [vmem:[%s2 + $0x18] sm:$0xff] %v123
  // Predicated region
  $region10: #{competitive_block_forward.4} parent=0 // pred_check
    _
  $region11: #{competitive_block_forward.4} parent=0 // pred_check_branch
    %130 = sbr.rel (0) target = $region13
  $region12: #{competitive_block_forward.4} parent=0 // pred_region
    _
  $region13: #{competitive_block_forward.4} parent=0 // pred_fallthru
    _
  // Predicated region
  $region14: #{competitive_block_forward.4} parent=0 // pred_check
    _
  $region15: #{competitive_block_forward.4} parent=0 // pred_check_branch
    %132 = sbr.rel (0) target = $region17
  $region16: #{competitive_block_forward.4} parent=0 // pred_region
    _
  $region17: #{competitive_block_forward.4} parent=0 // pred_fallthru
    _

// kernel: competitive_block_forward.5
$region0: #{competitive_block_forward.5}
  #allocation0 [shape = 'u32[]', space=smem, size = 0x4, offset = 0x4, fixed_abs, tag = 'smem constant byte address 0x4 - core index']
  #allocation1 [shape = 'u32[72,128]{1,0:T(1,128)}', space=vmem, size = 0x9000, scoped, tag = 'internal scratch']
  %s0 = inlined_call_operand.vmem [shape: f32[200,128], index: 0, kind: input, shape index: {}]
  %s1 = inlined_call_operand.vmem [shape: f32[8,200], index: 1, kind: input, shape index: {}]
  %s2 = inlined_call_operand.vmem [shape: f32[8,128], index: 2, kind: output, shape index: {}]
  %s3 = sld [smem:[#allocation0]]
  $region18: #{competitive_block_forward.5} parent=0
    _
  %s5 = ssub.s32 1, %s3
  %s6 = scalar_select 0, %s5, %s3
  // Predicated region
  $region2: #{competitive_block_forward.5} parent=0 // pred_check
    _
  $region3: #{competitive_block_forward.5} parent=0 // pred_check_branch
    %8 = sbr.rel (0) target = $region5
  $region4: #{competitive_block_forward.5} parent=0 // pred_region
    _
  $region5: #{competitive_block_forward.5} parent=0 // pred_fallthru
    _
  // Predicated region
  $region6: #{competitive_block_forward.5} parent=0 // pred_check
    _
  $region7: #{competitive_block_forward.5} parent=0 // pred_check_branch
    %10 = sbr.rel (0) target = $region9
  $region8: #{competitive_block_forward.5} parent=0 // pred_region
    _
  $region9: #{competitive_block_forward.5} parent=0 // pred_fallthru
    _
  %v11 = vld [vmem:[%s1] sm:$0xff]
  %v12 = vld [vmem:[%s1 + $0x8] sm:$0xff]
  %v13 = vld [vmem:[%s0] sm:$0xff]
  %v14 = vld [vmem:[%s0 + $0x8] sm:$0xff]
  %v15 = vld [vmem:[%s0 + $0x10] sm:$0xff]
  %v16 = vld [vmem:[%s0 + $0x18] sm:$0xff]
  %v17 = vld [vmem:[%s0 + $0x20] sm:$0xff]
  %v18 = vld [vmem:[%s0 + $0x28] sm:$0xff]
  %v19 = vld [vmem:[%s0 + $0x30] sm:$0xff]
  %v20 = vld [vmem:[%s0 + $0x38] sm:$0xff]
  %v21 = vld [vmem:[%s0 + $0x40] sm:$0xff]
  %v22 = vld [vmem:[%s0 + $0x48] sm:$0xff]
  %v23 = vld [vmem:[%s0 + $0x50] sm:$0xff]
  %v24 = vld [vmem:[%s0 + $0x58] sm:$0xff]
  %v25 = vld [vmem:[%s0 + $0x60] sm:$0xff]
  %v26 = vld [vmem:[%s0 + $0x68] sm:$0xff]
  %v27 = vld [vmem:[%s0 + $0x70] sm:$0xff]
  %v28 = vld [vmem:[%s0 + $0x78] sm:$0xff]
  %v29 = vld [vmem:[%s0 + $0x80] sm:$0xff]
  %v30 = vld [vmem:[%s0 + $0x88] sm:$0xff]
  %v31 = vld [vmem:[%s0 + $0x90] sm:$0xff]
  %v32 = vld [vmem:[%s0 + $0x98] sm:$0xff]
  %v33 = vld [vmem:[%s0 + $0xa0] sm:$0xff]
  %v34 = vld [vmem:[%s0 + $0xa8] sm:$0xff]
  %v35 = vld [vmem:[%s0 + $0xb0] sm:$0xff]
  %v36 = vld [vmem:[%s0 + $0xb8] sm:$0xff]
  %v37 = vld [vmem:[%s0 + $0xc0] sm:$0xff]
  %vm38 = vcmask 588800
  %v40 = vsel %vm38, %v12, 0
  %42 = vmatpush.msra.mxu0 %v28
  %43 = vmatpush.msra.mxu0 %v27
  %44 = vmatpush.msra.mxu0 %v26
  %45 = vmatpush.msra.mxu0 %v25
  %46 = vmatpush.msra.mxu0 %v24
  %47 = vmatpush.msra.mxu0 %v23
  %48 = vmatpush.msra.mxu0 %v22
  %49 = vmatpush.msra.mxu0 %v21
  %50 = vmatpush.msra.mxu0 %v20
  %51 = vmatpush.msra.mxu0 %v19
  %52 = vmatpush.msra.mxu0 %v18
  %53 = vmatpush.msra.mxu0 %v17
  %54 = vmatpush.msra.mxu0 %v16
  %55 = vmatpush.msra.mxu0 %v15
  %56 = vmatpush.msra.mxu0 %v14
  %57 = vmatpush.msra.mxu0 %v13
  %58 = vmatmul.f32.gmra.mxu0 %v11
  %v59 = vpop.f32.mrf.mxu0
  %v60 = vadd.f32 0.0, %v59
  %61 = vdwg.mxu0
  %62 = vmatpush.msra.mxu0 0.0
  %63 = vmatpush.msra.mxu0 0.0
  %64 = vmatpush.msra.mxu0 0.0
  %65 = vmatpush.msra.mxu0 0.0
  %66 = vmatpush.msra.mxu0 0.0
  %67 = vmatpush.msra.mxu0 0.0
  %68 = vmatpush.msra.mxu0 0.0
  %69 = vmatpush.msra.mxu0 %v37
  %70 = vmatpush.msra.mxu0 %v36
  %71 = vmatpush.msra.mxu0 %v35
  %72 = vmatpush.msra.mxu0 %v34
  %73 = vmatpush.msra.mxu0 %v33
  %74 = vmatpush.msra.mxu0 %v32
  %75 = vmatpush.msra.mxu0 %v31
  %76 = vmatpush.msra.mxu0 %v30
  %77 = vmatpush.msra.mxu0 %v29
  %78 = vmatmul.f32.gmra.mxu0 %v40
  %v79 = vpop.f32.mrf.mxu0
  %v80 = vadd.f32 %v60, %v79
  %81 = vdwg.mxu0
  %82 = vst [vmem:[%s2] sm:$0xff] %v80
  // Predicated region
  $region10: #{competitive_block_forward.5} parent=0 // pred_check
    _
  $region11: #{competitive_block_forward.5} parent=0 // pred_check_branch
    %84 = sbr.rel (0) target = $region13
  $region12: #{competitive_block_forward.5} parent=0 // pred_region
    _
  $region13: #{competitive_block_forward.5} parent=0 // pred_fallthru
    _
  // Predicated region
  $region14: #{competitive_block_forward.5} parent=0 // pred_check
    _
  $region15: #{competitive_block_forward.5} parent=0 // pred_check_branch
    %86 = sbr.rel (0) target = $region17
  $region16: #{competitive_block_forward.5} parent=0 // pred_region
    _
  $region17: #{competitive_block_forward.5} parent=0 // pred_fallthru
    _

// kernel: competitive_block_forward.6
$region0: #{competitive_block_forward.6}
  #allocation0 [shape = 'u32[]', space=smem, size = 0x4, offset = 0x4, fixed_abs, tag = 'smem constant byte address 0x4 - core index']
  #allocation1 [shape = 'u32[72,128]{1,0:T(1,128)}', space=vmem, size = 0x9000, scoped, tag = 'internal scratch']
  %s0 = inlined_call_operand.vmem [shape: f32[2,8,16,16], index: 0, kind: input, shape index: {}]
  %s1 = inlined_call_operand.vmem [shape: f32[8,8], index: 1, kind: input, shape index: {}]
  %s2 = inlined_call_operand.vmem [shape: f32[8,8], index: 2, kind: input, shape index: {}]
  %s3 = inlined_call_operand.vmem [shape: f32[2,8,8,8], index: 3, kind: input, shape index: {}]
  %s4 = inlined_call_operand.vmem [shape: f32[8,8], index: 4, kind: input, shape index: {}]
  %s5 = inlined_call_operand.vmem [shape: f32[8,8], index: 5, kind: input, shape index: {}]
  %s6 = inlined_call_operand.vmem [shape: f32[2,8,16,16], index: 6, kind: output, shape index: {0}]
  %s7 = inlined_call_operand.vmem [shape: f32[2,8,8,8], index: 7, kind: output, shape index: {1}]
  %8 = xla_tuple %s6, %s7
  %s9 = sld [smem:[#allocation0]]
  $region42: #{competitive_block_forward.6} parent=0
    _
  %s11 = ssub.s32 1, %s9
  %s12 = scalar_select 0, %s11, %s9
  // Predicated region
  $region2: #{competitive_block_forward.6} parent=0 // pred_check
    _
  $region3: #{competitive_block_forward.6} parent=0 // pred_check_branch
    %14 = sbr.rel (0) target = $region5
  $region4: #{competitive_block_forward.6} parent=0 // pred_region
    _
  $region5: #{competitive_block_forward.6} parent=0 // pred_fallthru
    _
  // Predicated region
  $region6: #{competitive_block_forward.6} parent=0 // pred_check
    _
  $region7: #{competitive_block_forward.6} parent=0 // pred_check_branch
    %16 = sbr.rel (0) target = $region9
  $region8: #{competitive_block_forward.6} parent=0 // pred_region
    _
  $region9: #{competitive_block_forward.6} parent=0 // pred_fallthru
    _
  // Predicated region
  $region10: #{competitive_block_forward.6} parent=0 // pred_check
    _
  $region11: #{competitive_block_forward.6} parent=0 // pred_check_branch
    %18 = sbr.rel (0) target = $region13
  $region12: #{competitive_block_forward.6} parent=0 // pred_region
    _
  $region13: #{competitive_block_forward.6} parent=0 // pred_fallthru
    _
  // Predicated region
  $region14: #{competitive_block_forward.6} parent=0 // pred_check
    _
  $region15: #{competitive_block_forward.6} parent=0 // pred_check_branch
    %20 = sbr.rel (0) target = $region17
  $region16: #{competitive_block_forward.6} parent=0 // pred_region
    _
  $region17: #{competitive_block_forward.6} parent=0 // pred_fallthru
    _
  // Predicated region
  $region18: #{competitive_block_forward.6} parent=0 // pred_check
    _
  $region19: #{competitive_block_forward.6} parent=0 // pred_check_branch
    %22 = sbr.rel (0) target = $region21
  $region20: #{competitive_block_forward.6} parent=0 // pred_region
    _
  $region21: #{competitive_block_forward.6} parent=0 // pred_fallthru
    _
  // Predicated region
  $region22: #{competitive_block_forward.6} parent=0 // pred_check
    _
  $region23: #{competitive_block_forward.6} parent=0 // pred_check_branch
    %24 = sbr.rel (0) target = $region25
  $region24: #{competitive_block_forward.6} parent=0 // pred_region
    _
  $region25: #{competitive_block_forward.6} parent=0 // pred_fallthru
    _
  %v25 = vld [vmem:[%s0] sm:$0xff]
  %v26 = vld [vmem:[%s0 + $0x8] sm:$0xff]
  %v27 = vld [vmem:[%s0 + $0x10] sm:$0xff]
  %v28 = vld [vmem:[%s0 + $0x18] sm:$0xff]
  %v29 = vld [vmem:[%s0 + $0x20] sm:$0xff]
  %v30 = vld [vmem:[%s0 + $0x28] sm:$0xff]
  %v31 = vld [vmem:[%s0 + $0x30] sm:$0xff]
  %v32 = vld [vmem:[%s0 + $0x38] sm:$0xff]
  %v33 = vld [vmem:[%s0 + $0x40] sm:$0xff]
  %v34 = vld [vmem:[%s0 + $0x48] sm:$0xff]
  %v35 = vld [vmem:[%s0 + $0x50] sm:$0xff]
  %v36 = vld [vmem:[%s0 + $0x58] sm:$0xff]
  %v37 = vld [vmem:[%s0 + $0x60] sm:$0xff]
  %v38 = vld [vmem:[%s0 + $0x68] sm:$0xff]
  %v39 = vld [vmem:[%s0 + $0x70] sm:$0xff]
  %v40 = vld [vmem:[%s0 + $0x78] sm:$0xff]
  %v41 = vld [vmem:[%s0 + $0x80] sm:$0xff]
  %v42 = vld [vmem:[%s0 + $0x88] sm:$0xff]
  %v43 = vld [vmem:[%s0 + $0x90] sm:$0xff]
  %v44 = vld [vmem:[%s0 + $0x98] sm:$0xff]
  %v45 = vld [vmem:[%s0 + $0xa0] sm:$0xff]
  %v46 = vld [vmem:[%s0 + $0xa8] sm:$0xff]
  %v47 = vld [vmem:[%s0 + $0xb0] sm:$0xff]
  %v48 = vld [vmem:[%s0 + $0xb8] sm:$0xff]
  %v49 = vld [vmem:[%s0 + $0xc0] sm:$0xff]
  %v50 = vld [vmem:[%s0 + $0xc8] sm:$0xff]
  %v51 = vld [vmem:[%s0 + $0xd0] sm:$0xff]
  %v52 = vld [vmem:[%s0 + $0xd8] sm:$0xff]
  %v53 = vld [vmem:[%s0 + $0xe0] sm:$0xff]
  %v54 = vld [vmem:[%s0 + $0xe8] sm:$0xff]
  %v55 = vld [vmem:[%s0 + $0xf0] sm:$0xff]
  %v56 = vld [vmem:[%s0 + $0xf8] sm:$0xff]
  %vm57 = vcmask 130048
  %v58 = vsel %vm57, %v25, -inf
  %59 = vmax.xlane.f32.xlu0 %v58
  %v60 = vpop.xlane.xlu0 %59
  %v61 = vsel %vm57, %v26, -inf
  %62 = vmax.xlane.f32.xlu0 %v61
  %v63 = vpop.xlane.xlu0 %62
  %v64 = vsel %vm57, %v27, -inf
  %65 = vmax.xlane.f32.xlu0 %v64
  %v66 = vpop.xlane.xlu0 %65
  %v67 = vsel %vm57, %v28, -inf
  %68 = vmax.xlane.f32.xlu0 %v67
  %v69 = vpop.xlane.xlu0 %68
  %v70 = vsel %vm57, %v29, -inf
  %71 = vmax.xlane.f32.xlu0 %v70
  %v72 = vpop.xlane.xlu0 %71
  %v73 = vsel %vm57, %v30, -inf
  %74 = vmax.xlane.f32.xlu0 %v73
  %v75 = vpop.xlane.xlu0 %74
  %v76 = vsel %vm57, %v31, -inf
  %77 = vmax.xlane.f32.xlu0 %v76
  %v78 = vpop.xlane.xlu0 %77
  %v79 = vsel %vm57, %v32, -inf
  %80 = vmax.xlane.f32.xlu0 %v79
  %v81 = vpop.xlane.xlu0 %80
  %v82 = vsel %vm57, %v33, -inf
  %83 = vmax.xlane.f32.xlu0 %v82
  %v84 = vpop.xlane.xlu0 %83
  %v85 = vsel %vm57, %v34, -inf
  %86 = vmax.xlane.f32.xlu0 %v85
  %v87 = vpop.xlane.xlu0 %86
  %v88 = vsel %vm57, %v35, -inf
  %89 = vmax.xlane.f32.xlu0 %v88
  %v90 = vpop.xlane.xlu0 %89
  %v91 = vsel %vm57, %v36, -inf
  %92 = vmax.xlane.f32.xlu0 %v91
  %v93 = vpop.xlane.xlu0 %92
  %v94 = vsel %vm57, %v37, -inf
  %95 = vmax.xlane.f32.xlu0 %v94
  %v96 = vpop.xlane.xlu0 %95
  %v97 = vsel %vm57, %v38, -inf
  %98 = vmax.xlane.f32.xlu0 %v97
  %v99 = vpop.xlane.xlu0 %98
  %v100 = vsel %vm57, %v39, -inf
  %101 = vmax.xlane.f32.xlu0 %v100
  %v102 = vpop.xlane.xlu0 %101
  %v103 = vsel %vm57, %v40, -inf
  %104 = vmax.xlane.f32.xlu0 %v103
  %v105 = vpop.xlane.xlu0 %104
  %v106 = vsel %vm57, %v41, -inf
  %107 = vmax.xlane.f32.xlu0 %v106
  %v108 = vpop.xlane.xlu0 %107
  %v109 = vsel %vm57, %v42, -inf
  %110 = vmax.xlane.f32.xlu0 %v109
  %v111 = vpop.xlane.xlu0 %110
  %v112 = vsel %vm57, %v43, -inf
  %113 = vmax.xlane.f32.xlu0 %v112
  %v114 = vpop.xlane.xlu0 %113
  %v115 = vsel %vm57, %v44, -inf
  %116 = vmax.xlane.f32.xlu0 %v115
  %v117 = vpop.xlane.xlu0 %116
  %v118 = vsel %vm57, %v45, -inf
  %119 = vmax.xlane.f32.xlu0 %v118
  %v120 = vpop.xlane.xlu0 %119
  %v121 = vsel %vm57, %v46, -inf
  %122 = vmax.xlane.f32.xlu0 %v121
  %v123 = vpop.xlane.xlu0 %122
  %v124 = vsel %vm57, %v47, -inf
  %125 = vmax.xlane.f32.xlu0 %v124
  %v126 = vpop.xlane.xlu0 %125
  %v127 = vsel %vm57, %v48, -inf
  %128 = vmax.xlane.f32.xlu0 %v127
  %v129 = vpop.xlane.xlu0 %128
  %v130 = vsel %vm57, %v49, -inf
  %131 = vmax.xlane.f32.xlu0 %v130
  %v132 = vpop.xlane.xlu0 %131
  %v133 = vsel %vm57, %v50, -inf
  %134 = vmax.xlane.f32.xlu0 %v133
  %v135 = vpop.xlane.xlu0 %134
  %v136 = vsel %vm57, %v51, -inf
  %137 = vmax.xlane.f32.xlu0 %v136
  %v138 = vpop.xlane.xlu0 %137
  %v139 = vsel %vm57, %v52, -inf
  %140 = vmax.xlane.f32.xlu0 %v139
  %v141 = vpop.xlane.xlu0 %140
  %v142 = vsel %vm57, %v53, -inf
  %143 = vmax.xlane.f32.xlu0 %v142
  %v144 = vpop.xlane.xlu0 %143
  %v145 = vsel %vm57, %v54, -inf
  %146 = vmax.xlane.f32.xlu0 %v145
  %v147 = vpop.xlane.xlu0 %146
  %v148 = vsel %vm57, %v55, -inf
  %149 = vmax.xlane.f32.xlu0 %v148
  %v150 = vpop.xlane.xlu0 %149
  %v151 = vsel %vm57, %v56, -inf
  %152 = vmax.xlane.f32.xlu0 %v151
  %v153 = vpop.xlane.xlu0 %152
  %v154 = vmax.f32 %v60, %v63
  %v155 = vrot.slane %v154, 4
  %v156 = vmax.f32 %v154, %v155
  %v157 = vrot.slane %v156, 2
  %v158 = vmax.f32 %v156, %v157
  %v159 = vrot.slane %v158, 1
  %v160 = vmax.f32 %v158, %v159
  %v161 = vmax.f32 %v66, %v69
  %v162 = vrot.slane %v161, 4
  %v163 = vmax.f32 %v161, %v162
  %v164 = vrot.slane %v163, 2
  %v165 = vmax.f32 %v163, %v164
  %v166 = vrot.slane %v165, 1
  %v167 = vmax.f32 %v165, %v166
  %v168 = vmax.f32 %v72, %v75
  %v169 = vrot.slane %v168, 4
  %v170 = vmax.f32 %v168, %v169
  %v171 = vrot.slane %v170, 2
  %v172 = vmax.f32 %v170, %v171
  %v173 = vrot.slane %v172, 1
  %v174 = vmax.f32 %v172, %v173
  %v175 = vmax.f32 %v78, %v81
  %v176 = vrot.slane %v175, 4
  %v177 = vmax.f32 %v175, %v176
  %v178 = vrot.slane %v177, 2
  %v179 = vmax.f32 %v177, %v178
  %v180 = vrot.slane %v179, 1
  %v181 = vmax.f32 %v179, %v180
  %v182 = vmax.f32 %v84, %v87
  %v183 = vrot.slane %v182, 4
  %v184 = vmax.f32 %v182, %v183
  %v185 = vrot.slane %v184, 2
  %v186 = vmax.f32 %v184, %v185
  %v187 = vrot.slane %v186, 1
  %v188 = vmax.f32 %v186, %v187
  %v189 = vmax.f32 %v90, %v93
  %v190 = vrot.slane %v189, 4
  %v191 = vmax.f32 %v189, %v190
  %v192 = vrot.slane %v191, 2
  %v193 = vmax.f32 %v191, %v192
  %v194 = vrot.slane %v193, 1
  %v195 = vmax.f32 %v193, %v194
  %v196 = vmax.f32 %v96, %v99
  %v197 = vrot.slane %v196, 4
  %v198 = vmax.f32 %v196, %v197
  %v199 = vrot.slane %v198, 2
  %v200 = vmax.f32 %v198, %v199
  %v201 = vrot.slane %v200, 1
  %v202 = vmax.f32 %v200, %v201
  %v203 = vmax.f32 %v102, %v105
  %v204 = vrot.slane %v203, 4
  %v205 = vmax.f32 %v203, %v204
  %v206 = vrot.slane %v205, 2
  %v207 = vmax.f32 %v205, %v206
  %v208 = vrot.slane %v207, 1
  %v209 = vmax.f32 %v207, %v208
  %v210 = vmax.f32 %v108, %v111
  %v211 = vrot.slane %v210, 4
  %v212 = vmax.f32 %v210, %v211
  %v213 = vrot.slane %v212, 2
  %v214 = vmax.f32 %v212, %v213
  %v215 = vrot.slane %v214, 1
  %v216 = vmax.f32 %v214, %v215
  %v217 = vmax.f32 %v114, %v117
  %v218 = vrot.slane %v217, 4
  %v219 = vmax.f32 %v217, %v218
  %v220 = vrot.slane %v219, 2
  %v221 = vmax.f32 %v219, %v220
  %v222 = vrot.slane %v221, 1
  %v223 = vmax.f32 %v221, %v222
  %v224 = vmax.f32 %v120, %v123
  %v225 = vrot.slane %v224, 4
  %v226 = vmax.f32 %v224, %v225
  %v227 = vrot.slane %v226, 2
  %v228 = vmax.f32 %v226, %v227
  %v229 = vrot.slane %v228, 1
  %v230 = vmax.f32 %v228, %v229
  %v231 = vmax.f32 %v126, %v129
  %v232 = vrot.slane %v231, 4
  %v233 = vmax.f32 %v231, %v232
  %v234 = vrot.slane %v233, 2
  %v235 = vmax.f32 %v233, %v234
  %v236 = vrot.slane %v235, 1
  %v237 = vmax.f32 %v235, %v236
  %v238 = vmax.f32 %v132, %v135
  %v239 = vrot.slane %v238, 4
  %v240 = vmax.f32 %v238, %v239
  %v241 = vrot.slane %v240, 2
  %v242 = vmax.f32 %v240, %v241
  %v243 = vrot.slane %v242, 1
  %v244 = vmax.f32 %v242, %v243
  %v245 = vmax.f32 %v138, %v141
  %v246 = vrot.slane %v245, 4
  %v247 = vmax.f32 %v245, %v246
  %v248 = vrot.slane %v247, 2
  %v249 = vmax.f32 %v247, %v248
  %v250 = vrot.slane %v249, 1
  %v251 = vmax.f32 %v249, %v250
  %v252 = vmax.f32 %v144, %v147
  %v253 = vrot.slane %v252, 4
  %v254 = vmax.f32 %v252, %v253
  %v255 = vrot.slane %v254, 2
  %v256 = vmax.f32 %v254, %v255
  %v257 = vrot.slane %v256, 1
  %v258 = vmax.f32 %v256, %v257
  %v259 = vmax.f32 %v150, %v153
  %v260 = vrot.slane %v259, 4
  %v261 = vmax.f32 %v259, %v260
  %v262 = vrot.slane %v261, 2
  %v263 = vmax.f32 %v261, %v262
  %v264 = vrot.slane %v263, 1
  %v265 = vmax.f32 %v263, %v264
  %v266 = vmax.f32 %v160, %v174
  %v267 = vmax.f32 %v167, %v181
  %v268 = vmax.f32 %v266, %v188
  %v269 = vmax.f32 %v267, %v195
  %v270 = vmax.f32 %v268, %v202
  %v271 = vmax.f32 %v269, %v209
  %v272 = vmax.f32 %v270, %v271
  %v273 = vmax.f32 %v216, %v230
  %v274 = vmax.f32 %v223, %v237
  %v275 = vmax.f32 %v273, %v244
  %v276 = vmax.f32 %v274, %v251
  %v277 = vmax.f32 %v275, %v258
  %v278 = vmax.f32 %v276, %v265
  %v279 = vmax.f32 %v277, %v278
  %v280 = vsub.f32 %v25, %v272
  %v281 = vsub.f32 %v26, %v272
  %v282 = vsub.f32 %v27, %v272
  %v283 = vsub.f32 %v28, %v272
  %v284 = vsub.f32 %v29, %v272
  %v285 = vsub.f32 %v30, %v272
  %v286 = vsub.f32 %v31, %v272
  %v287 = vsub.f32 %v32, %v272
  %v288 = vsub.f32 %v33, %v272
  %v289 = vsub.f32 %v34, %v272
  %v290 = vsub.f32 %v35, %v272
  %v291 = vsub.f32 %v36, %v272
  %v292 = vsub.f32 %v37, %v272
  %v293 = vsub.f32 %v38, %v272
  %v294 = vsub.f32 %v39, %v272
  %v295 = vsub.f32 %v40, %v272
  %v296 = vsub.f32 %v41, %v279
  %v297 = vsub.f32 %v42, %v279
  %v298 = vsub.f32 %v43, %v279
  %v299 = vsub.f32 %v44, %v279
  %v300 = vsub.f32 %v45, %v279
  %v301 = vsub.f32 %v46, %v279
  %v302 = vsub.f32 %v47, %v279
  %v303 = vsub.f32 %v48, %v279
  %v304 = vsub.f32 %v49, %v279
  %v305 = vsub.f32 %v50, %v279
  %v306 = vsub.f32 %v51, %v279
  %v307 = vsub.f32 %v52, %v279
  %v308 = vsub.f32 %v53, %v279
  %v309 = vsub.f32 %v54, %v279
  %v310 = vsub.f32 %v55, %v279
  %v311 = vsub.f32 %v56, %v279
  %v312 = vmul.f32 %v280, 1.442695
  %v313 = vpow.pop %v312
  %v314 = vmul.f32 %v281, 1.442695
  %v315 = vpow.pop %v314
  %v316 = vmul.f32 %v282, 1.442695
  %v317 = vpow.pop %v316
  %v318 = vmul.f32 %v283, 1.442695
  %v319 = vpow.pop %v318
  %v320 = vmul.f32 %v284, 1.442695
  %v321 = vpow.pop %v320
  %v322 = vmul.f32 %v285, 1.442695
  %v323 = vpow.pop %v322
  %v324 = vmul.f32 %v286, 1.442695
  %v325 = vpow.pop %v324
  %v326 = vmul.f32 %v287, 1.442695
  %v327 = vpow.pop %v326
  %v328 = vmul.f32 %v288, 1.442695
  %v329 = vpow.pop %v328
  %v330 = vmul.f32 %v289, 1.442695
  %v331 = vpow.pop %v330
  %v332 = vmul.f32 %v290, 1.442695
  %v333 = vpow.pop %v332
  %v334 = vmul.f32 %v291, 1.442695
  %v335 = vpow.pop %v334
  %v336 = vmul.f32 %v292, 1.442695
  %v337 = vpow.pop %v336
  %v338 = vmul.f32 %v293, 1.442695
  %v339 = vpow.pop %v338
  %v340 = vmul.f32 %v294, 1.442695
  %v341 = vpow.pop %v340
  %v342 = vmul.f32 %v295, 1.442695
  %v343 = vpow.pop %v342
  %v344 = vmul.f32 %v296, 1.442695
  %v345 = vpow.pop %v344
  %v346 = vmul.f32 %v297, 1.442695
  %v347 = vpow.pop %v346
  %v348 = vmul.f32 %v298, 1.442695
  %v349 = vpow.pop %v348
  %v350 = vmul.f32 %v299, 1.442695
  %v351 = vpow.pop %v350
  %v352 = vmul.f32 %v300, 1.442695
  %v353 = vpow.pop %v352
  %v354 = vmul.f32 %v301, 1.442695
  %v355 = vpow.pop %v354
  %v356 = vmul.f32 %v302, 1.442695
  %v357 = vpow.pop %v356
  %v358 = vmul.f32 %v303, 1.442695
  %v359 = vpow.pop %v358
  %v360 = vmul.f32 %v304, 1.442695
  %v361 = vpow.pop %v360
  %v362 = vmul.f32 %v305, 1.442695
  %v363 = vpow.pop %v362
  %v364 = vmul.f32 %v306, 1.442695
  %v365 = vpow.pop %v364
  %v366 = vmul.f32 %v307, 1.442695
  %v367 = vpow.pop %v366
  %v368 = vmul.f32 %v308, 1.442695
  %v369 = vpow.pop %v368
  %v370 = vmul.f32 %v309, 1.442695
  %v371 = vpow.pop %v370
  %v372 = vmul.f32 %v310, 1.442695
  %v373 = vpow.pop %v372
  %v374 = vmul.f32 %v311, 1.442695
  %v375 = vpow.pop %v374
  %v376 = vsel %vm57, %v313, 0.0
  %v377 = vsel %vm57, %v317, 0.0
  %v378 = vadd.f32 %v376, %v377
  %v379 = vsel %vm57, %v321, 0.0
  %v380 = vadd.f32 %v378, %v379
  %v381 = vsel %vm57, %v325, 0.0
  %v382 = vadd.f32 %v380, %v381
  %v383 = vsel %vm57, %v329, 0.0
  %v384 = vadd.f32 %v382, %v383
  %v385 = vsel %vm57, %v333, 0.0
  %v386 = vadd.f32 %v384, %v385
  %v387 = vsel %vm57, %v337, 0.0
  %v388 = vadd.f32 %v386, %v387
  %v389 = vsel %vm57, %v341, 0.0
  %v390 = vadd.f32 %v388, %v389
  %v391 = vsel %vm57, %v315, 0.0
  %v392 = vsel %vm57, %v319, 0.0
  %v393 = vadd.f32 %v391, %v392
  %v394 = vsel %vm57, %v323, 0.0
  %v395 = vadd.f32 %v393, %v394
  %v396 = vsel %vm57, %v327, 0.0
  %v397 = vadd.f32 %v395, %v396
  %v398 = vsel %vm57, %v331, 0.0
  %v399 = vadd.f32 %v397, %v398
  %v400 = vsel %vm57, %v335, 0.0
  %v401 = vadd.f32 %v399, %v400
  %v402 = vsel %vm57, %v339, 0.0
  %v403 = vadd.f32 %v401, %v402
  %v404 = vsel %vm57, %v343, 0.0
  %v405 = vadd.f32 %v403, %v404
  %v406 = vsel %vm57, %v345, 0.0
  %v407 = vsel %vm57, %v349, 0.0
  %v408 = vadd.f32 %v406, %v407
  %v409 = vsel %vm57, %v353, 0.0
  %v410 = vadd.f32 %v408, %v409
  %v411 = vsel %vm57, %v357, 0.0
  %v412 = vadd.f32 %v410, %v411
  %v413 = vsel %vm57, %v361, 0.0
  %v414 = vadd.f32 %v412, %v413
  %v415 = vsel %vm57, %v365, 0.0
  %v416 = vadd.f32 %v414, %v415
  %v417 = vsel %vm57, %v369, 0.0
  %v418 = vadd.f32 %v416, %v417
  %v419 = vsel %vm57, %v373, 0.0
  %v420 = vadd.f32 %v418, %v419
  %v421 = vsel %vm57, %v347, 0.0
  %v422 = vsel %vm57, %v351, 0.0
  %v423 = vadd.f32 %v421, %v422
  %v424 = vsel %vm57, %v355, 0.0
  %v425 = vadd.f32 %v423, %v424
  %v426 = vsel %vm57, %v359, 0.0
  %v427 = vadd.f32 %v425, %v426
  %v428 = vsel %vm57, %v363, 0.0
  %v429 = vadd.f32 %v427, %v428
  %v430 = vsel %vm57, %v367, 0.0
  %v431 = vadd.f32 %v429, %v430
  %v432 = vsel %vm57, %v371, 0.0
  %v433 = vadd.f32 %v431, %v432
  %v434 = vsel %vm57, %v375, 0.0
  %v435 = vadd.f32 %v433, %v434
  %v436 = vrcp.pop %v390
  %v437 = vrcp.pop %v405
  %v438 = vrcp.pop %v420
  %v439 = vrcp.pop %v435
  %v440 = vadd.f32 %v376, %v391
  %v441 = vrot.slane %v440, 4
  %v442 = vadd.f32 %v440, %v441
  %v443 = vrot.slane %v442, 2
  %v444 = vadd.f32 %v442, %v443
  %v445 = vrot.slane %v444, 1
  %v446 = vadd.f32 %v444, %v445
  %v447 = vadd.f32 %v377, %v392
  %v448 = vrot.slane %v447, 4
  %v449 = vadd.f32 %v447, %v448
  %v450 = vrot.slane %v449, 2
  %v451 = vadd.f32 %v449, %v450
  %v452 = vrot.slane %v451, 1
  %v453 = vadd.f32 %v451, %v452
  %v454 = vadd.f32 %v379, %v394
  %v455 = vrot.slane %v454, 4
  %v456 = vadd.f32 %v454, %v455
  %v457 = vrot.slane %v456, 2
  %v458 = vadd.f32 %v456, %v457
  %v459 = vrot.slane %v458, 1
  %v460 = vadd.f32 %v458, %v459
  %v461 = vadd.f32 %v381, %v396
  %v462 = vrot.slane %v461, 4
  %v463 = vadd.f32 %v461, %v462
  %v464 = vrot.slane %v463, 2
  %v465 = vadd.f32 %v463, %v464
  %v466 = vrot.slane %v465, 1
  %v467 = vadd.f32 %v465, %v466
  %v468 = vadd.f32 %v383, %v398
  %v469 = vrot.slane %v468, 4
  %v470 = vadd.f32 %v468, %v469
  %v471 = vrot.slane %v470, 2
  %v472 = vadd.f32 %v470, %v471
  %v473 = vrot.slane %v472, 1
  %v474 = vadd.f32 %v472, %v473
  %v475 = vadd.f32 %v385, %v400
  %v476 = vrot.slane %v475, 4
  %v477 = vadd.f32 %v475, %v476
  %v478 = vrot.slane %v477, 2
  %v479 = vadd.f32 %v477, %v478
  %v480 = vrot.slane %v479, 1
  %v481 = vadd.f32 %v479, %v480
  %v482 = vadd.f32 %v387, %v402
  %v483 = vrot.slane %v482, 4
  %v484 = vadd.f32 %v482, %v483
  %v485 = vrot.slane %v484, 2
  %v486 = vadd.f32 %v484, %v485
  %v487 = vrot.slane %v486, 1
  %v488 = vadd.f32 %v486, %v487
  %v489 = vadd.f32 %v389, %v404
  %v490 = vrot.slane %v489, 4
  %v491 = vadd.f32 %v489, %v490
  %v492 = vrot.slane %v491, 2
  %v493 = vadd.f32 %v491, %v492
  %v494 = vrot.slane %v493, 1
  %v495 = vadd.f32 %v493, %v494
  %v496 = vadd.f32 %v406, %v421
  %v497 = vrot.slane %v496, 4
  %v498 = vadd.f32 %v496, %v497
  %v499 = vrot.slane %v498, 2
  %v500 = vadd.f32 %v498, %v499
  %v501 = vrot.slane %v500, 1
  %v502 = vadd.f32 %v500, %v501
  %v503 = vadd.f32 %v407, %v422
  %v504 = vrot.slane %v503, 4
  %v505 = vadd.f32 %v503, %v504
  %v506 = vrot.slane %v505, 2
  %v507 = vadd.f32 %v505, %v506
  %v508 = vrot.slane %v507, 1
  %v509 = vadd.f32 %v507, %v508
  %v510 = vadd.f32 %v409, %v424
  %v511 = vrot.slane %v510, 4
  %v512 = vadd.f32 %v510, %v511
  %v513 = vrot.slane %v512, 2
  %v514 = vadd.f32 %v512, %v513
  %v515 = vrot.slane %v514, 1
  %v516 = vadd.f32 %v514, %v515
  %v517 = vadd.f32 %v411, %v426
  %v518 = vrot.slane %v517, 4
  %v519 = vadd.f32 %v517, %v518
  %v520 = vrot.slane %v519, 2
  %v521 = vadd.f32 %v519, %v520
  %v522 = vrot.slane %v521, 1
  %v523 = vadd.f32 %v521, %v522
  %v524 = vadd.f32 %v413, %v428
  %v525 = vrot.slane %v524, 4
  %v526 = vadd.f32 %v524, %v525
  %v527 = vrot.slane %v526, 2
  %v528 = vadd.f32 %v526, %v527
  %v529 = vrot.slane %v528, 1
  %v530 = vadd.f32 %v528, %v529
  %v531 = vadd.f32 %v415, %v430
  %v532 = vrot.slane %v531, 4
  %v533 = vadd.f32 %v531, %v532
  %v534 = vrot.slane %v533, 2
  %v535 = vadd.f32 %v533, %v534
  %v536 = vrot.slane %v535, 1
  %v537 = vadd.f32 %v535, %v536
  %v538 = vadd.f32 %v417, %v432
  %v539 = vrot.slane %v538, 4
  %v540 = vadd.f32 %v538, %v539
  %v541 = vrot.slane %v540, 2
  %v542 = vadd.f32 %v540, %v541
  %v543 = vrot.slane %v542, 1
  %v544 = vadd.f32 %v542, %v543
  %v545 = vadd.f32 %v419, %v434
  %v546 = vrot.slane %v545, 4
  %v547 = vadd.f32 %v545, %v546
  %v548 = vrot.slane %v547, 2
  %v549 = vadd.f32 %v547, %v548
  %v550 = vrot.slane %v549, 1
  %v551 = vadd.f32 %v549, %v550
  %v552 = vrcp.pop %v446
  %v553 = vrcp.pop %v453
  %v554 = vrcp.pop %v460
  %v555 = vrcp.pop %v467
  %v556 = vrcp.pop %v474
  %v557 = vrcp.pop %v481
  %v558 = vrcp.pop %v488
  %v559 = vrcp.pop %v495
  %v560 = vrcp.pop %v502
  %v561 = vrcp.pop %v509
  %v562 = vrcp.pop %v516
  %v563 = vrcp.pop %v523
  %v564 = vrcp.pop %v530
  %v565 = vrcp.pop %v537
  %v566 = vrcp.pop %v544
  %v567 = vrcp.pop %v551
  %568 = vadd.xlane.f32.xlu0 %v376
  %v569 = vpop.xlane.xlu0 %568
  %570 = vadd.xlane.f32.xlu0 %v391
  %v571 = vpop.xlane.xlu0 %570
  %572 = vadd.xlane.f32.xlu0 %v377
  %v573 = vpop.xlane.xlu0 %572
  %574 = vadd.xlane.f32.xlu0 %v392
  %v575 = vpop.xlane.xlu0 %574
  %576 = vadd.xlane.f32.xlu0 %v379
  %v577 = vpop.xlane.xlu0 %576
  %578 = vadd.xlane.f32.xlu0 %v394
  %v579 = vpop.xlane.xlu0 %578
  %580 = vadd.xlane.f32.xlu0 %v381
  %v581 = vpop.xlane.xlu0 %580
  %582 = vadd.xlane.f32.xlu0 %v396
  %v583 = vpop.xlane.xlu0 %582
  %584 = vadd.xlane.f32.xlu0 %v383
  %v585 = vpop.xlane.xlu0 %584
  %586 = vadd.xlane.f32.xlu0 %v398
  %v587 = vpop.xlane.xlu0 %586
  %588 = vadd.xlane.f32.xlu0 %v385
  %v589 = vpop.xlane.xlu0 %588
  %590 = vadd.xlane.f32.xlu0 %v400
  %v591 = vpop.xlane.xlu0 %590
  %592 = vadd.xlane.f32.xlu0 %v387
  %v593 = vpop.xlane.xlu0 %592
  %594 = vadd.xlane.f32.xlu0 %v402
  %v595 = vpop.xlane.xlu0 %594
  %596 = vadd.xlane.f32.xlu0 %v389
  %v597 = vpop.xlane.xlu0 %596
  %598 = vadd.xlane.f32.xlu0 %v404
  %v599 = vpop.xlane.xlu0 %598
  %600 = vadd.xlane.f32.xlu0 %v406
  %v601 = vpop.xlane.xlu0 %600
  %602 = vadd.xlane.f32.xlu0 %v421
  %v603 = vpop.xlane.xlu0 %602
  %604 = vadd.xlane.f32.xlu0 %v407
  %v605 = vpop.xlane.xlu0 %604
  %606 = vadd.xlane.f32.xlu0 %v422
  %v607 = vpop.xlane.xlu0 %606
  %608 = vadd.xlane.f32.xlu0 %v409
  %v609 = vpop.xlane.xlu0 %608
  %610 = vadd.xlane.f32.xlu0 %v424
  %v611 = vpop.xlane.xlu0 %610
  %612 = vadd.xlane.f32.xlu0 %v411
  %v613 = vpop.xlane.xlu0 %612
  %614 = vadd.xlane.f32.xlu0 %v426
  %v615 = vpop.xlane.xlu0 %614
  %616 = vadd.xlane.f32.xlu0 %v413
  %v617 = vpop.xlane.xlu0 %616
  %618 = vadd.xlane.f32.xlu0 %v428
  %v619 = vpop.xlane.xlu0 %618
  %620 = vadd.xlane.f32.xlu0 %v415
  %v621 = vpop.xlane.xlu0 %620
  %622 = vadd.xlane.f32.xlu0 %v430
  %v623 = vpop.xlane.xlu0 %622
  %624 = vadd.xlane.f32.xlu0 %v417
  %v625 = vpop.xlane.xlu0 %624
  %626 = vadd.xlane.f32.xlu0 %v432
  %v627 = vpop.xlane.xlu0 %626
  %628 = vadd.xlane.f32.xlu0 %v419
  %v629 = vpop.xlane.xlu0 %628
  %630 = vadd.xlane.f32.xlu0 %v434
  %v631 = vpop.xlane.xlu0 %630
  %v632 = vrcp.pop %v569
  %v633 = vrcp.pop %v571
  %v634 = vrcp.pop %v573
  %v635 = vrcp.pop %v575
  %v636 = vrcp.pop %v577
  %v637 = vrcp.pop %v579
  %v638 = vrcp.pop %v581
  %v639 = vrcp.pop %v583
  %v640 = vrcp.pop %v585
  %v641 = vrcp.pop %v587
  %v642 = vrcp.pop %v589
  %v643 = vrcp.pop %v591
  %v644 = vrcp.pop %v593
  %v645 = vrcp.pop %v595
  %v646 = vrcp.pop %v597
  %v647 = vrcp.pop %v599
  %v648 = vrcp.pop %v601
  %v649 = vrcp.pop %v603
  %v650 = vrcp.pop %v605
  %v651 = vrcp.pop %v607
  %v652 = vrcp.pop %v609
  %v653 = vrcp.pop %v611
  %v654 = vrcp.pop %v613
  %v655 = vrcp.pop %v615
  %v656 = vrcp.pop %v617
  %v657 = vrcp.pop %v619
  %v658 = vrcp.pop %v621
  %v659 = vrcp.pop %v623
  %v660 = vrcp.pop %v625
  %v661 = vrcp.pop %v627
  %v662 = vrcp.pop %v629
  %v663 = vrcp.pop %v631
  %v664 = vmul.f32 %v436, 0.8
  %v665 = vmul.f32 %v437, 0.8
  %v666 = vmul.f32 %v438, 0.8
  %v667 = vmul.f32 %v439, 0.8
  %v668 = vadd.f32 %v552, %v632
  %v669 = vadd.f32 %v552, %v633
  %v670 = vadd.f32 %v553, %v634
  %v671 = vadd.f32 %v553, %v635
  %v672 = vadd.f32 %v554, %v636
  %v673 = vadd.f32 %v554, %v637
  %v674 = vadd.f32 %v555, %v638
  %v675 = vadd.f32 %v555, %v639
  %v676 = vadd.f32 %v556, %v640
  %v677 = vadd.f32 %v556, %v641
  %v678 = vadd.f32 %v557, %v642
  %v679 = vadd.f32 %v557, %v643
  %v680 = vadd.f32 %v558, %v644
  %v681 = vadd.f32 %v558, %v645
  %v682 = vadd.f32 %v559, %v646
  %v683 = vadd.f32 %v559, %v647
  %v684 = vadd.f32 %v560, %v648
  %v685 = vadd.f32 %v560, %v649
  %v686 = vadd.f32 %v561, %v650
  %v687 = vadd.f32 %v561, %v651
  %v688 = vadd.f32 %v562, %v652
  %v689 = vadd.f32 %v562, %v653
  %v690 = vadd.f32 %v563, %v654
  %v691 = vadd.f32 %v563, %v655
  %v692 = vadd.f32 %v564, %v656
  %v693 = vadd.f32 %v564, %v657
  %v694 = vadd.f32 %v565, %v658
  %v695 = vadd.f32 %v565, %v659
  %v696 = vadd.f32 %v566, %v660
  %v697 = vadd.f32 %v566, %v661
  %v698 = vadd.f32 %v567, %v662
  %v699 = vadd.f32 %v567, %v663
  %v700 = vmul.f32 %v668, 0.1
  %v701 = vmul.f32 %v669, 0.1
  %v702 = vmul.f32 %v670, 0.1
  %v703 = vmul.f32 %v671, 0.1
  %v704 = vmul.f32 %v672, 0.1
  %v705 = vmul.f32 %v673, 0.1
  %v706 = vmul.f32 %v674, 0.1
  %v707 = vmul.f32 %v675, 0.1
  %v708 = vmul.f32 %v676, 0.1
  %v709 = vmul.f32 %v677, 0.1
  %v710 = vmul.f32 %v678, 0.1
  %v711 = vmul.f32 %v679, 0.1
  %v712 = vmul.f32 %v680, 0.1
  %v713 = vmul.f32 %v681, 0.1
  %v714 = vmul.f32 %v682, 0.1
  %v715 = vmul.f32 %v683, 0.1
  %v716 = vmul.f32 %v684, 0.1
  %v717 = vmul.f32 %v685, 0.1
  %v718 = vmul.f32 %v686, 0.1
  %v719 = vmul.f32 %v687, 0.1
  %v720 = vmul.f32 %v688, 0.1
  %v721 = vmul.f32 %v689, 0.1
  %v722 = vmul.f32 %v690, 0.1
  %v723 = vmul.f32 %v691, 0.1
  %v724 = vmul.f32 %v692, 0.1
  %v725 = vmul.f32 %v693, 0.1
  %v726 = vmul.f32 %v694, 0.1
  %v727 = vmul.f32 %v695, 0.1
  %v728 = vmul.f32 %v696, 0.1
  %v729 = vmul.f32 %v697, 0.1
  %v730 = vmul.f32 %v698, 0.1
  %v731 = vmul.f32 %v699, 0.1
  %v732 = vadd.f32 %v664, %v700
  %v733 = vadd.f32 %v665, %v701
  %v734 = vadd.f32 %v664, %v702
  %v735 = vadd.f32 %v665, %v703
  %v736 = vadd.f32 %v664, %v704
  %v737 = vadd.f32 %v665, %v705
  %v738 = vadd.f32 %v664, %v706
  %v739 = vadd.f32 %v665, %v707
  %v740 = vadd.f32 %v664, %v708
  %v741 = vadd.f32 %v665, %v709
  %v742 = vadd.f32 %v664, %v710
  %v743 = vadd.f32 %v665, %v711
  %v744 = vadd.f32 %v664, %v712
  %v745 = vadd.f32 %v665, %v713
  %v746 = vadd.f32 %v664, %v714
  %v747 = vadd.f32 %v665, %v715
  %v748 = vadd.f32 %v666, %v716
  %v749 = vadd.f32 %v667, %v717
  %v750 = vadd.f32 %v666, %v718
  %v751 = vadd.f32 %v667, %v719
  %v752 = vadd.f32 %v666, %v720
  %v753 = vadd.f32 %v667, %v721
  %v754 = vadd.f32 %v666, %v722
  %v755 = vadd.f32 %v667, %v723
  %v756 = vadd.f32 %v666, %v724
  %v757 = vadd.f32 %v667, %v725
  %v758 = vadd.f32 %v666, %v726
  %v759 = vadd.f32 %v667, %v727
  %v760 = vadd.f32 %v666, %v728
  %v761 = vadd.f32 %v667, %v729
  %v762 = vadd.f32 %v666, %v730
  %v763 = vadd.f32 %v667, %v731
  %v764 = vmul.f32 %v313, %v732
  %v765 = vmul.f32 %v315, %v733
  %v766 = vmul.f32 %v317, %v734
  %v767 = vmul.f32 %v319, %v735
  %v768 = vmul.f32 %v321, %v736
  %v769 = vmul.f32 %v323, %v737
  %v770 = vmul.f32 %v325, %v738
  %v771 = vmul.f32 %v327, %v739
  %v772 = vmul.f32 %v329, %v740
  %v773 = vmul.f32 %v331, %v741
  %v774 = vmul.f32 %v333, %v742
  %v775 = vmul.f32 %v335, %v743
  %v776 = vmul.f32 %v337, %v744
  %v777 = vmul.f32 %v339, %v745
  %v778 = vmul.f32 %v341, %v746
  %v779 = vmul.f32 %v343, %v747
  %v780 = vmul.f32 %v345, %v748
  %v781 = vmul.f32 %v347, %v749
  %v782 = vmul.f32 %v349, %v750
  %v783 = vmul.f32 %v351, %v751
  %v784 = vmul.f32 %v353, %v752
  %v785 = vmul.f32 %v355, %v753
  %v786 = vmul.f32 %v357, %v754
  %v787 = vmul.f32 %v359, %v755
  %v788 = vmul.f32 %v361, %v756
  %v789 = vmul.f32 %v363, %v757
  %v790 = vmul.f32 %v365, %v758
  %v791 = vmul.f32 %v367, %v759
  %v792 = vmul.f32 %v369, %v760
  %v793 = vmul.f32 %v371, %v761
  %v794 = vmul.f32 %v373, %v762
  %v795 = vmul.f32 %v375, %v763
  %v796 = vsel %vm57, %v764, 0.0
  %797 = vadd.xlane.f32.xlu0 %v796
  %v798 = vpop.xlane.xlu0 %797
  %v799 = vsel %vm57, %v765, 0.0
  %800 = vadd.xlane.f32.xlu0 %v799
  %v801 = vpop.xlane.xlu0 %800
  %v802 = vsel %vm57, %v766, 0.0
  %803 = vadd.xlane.f32.xlu0 %v802
  %v804 = vpop.xlane.xlu0 %803
  %v805 = vsel %vm57, %v767, 0.0
  %806 = vadd.xlane.f32.xlu0 %v805
  %v807 = vpop.xlane.xlu0 %806
  %v808 = vsel %vm57, %v768, 0.0
  %809 = vadd.xlane.f32.xlu0 %v808
  %v810 = vpop.xlane.xlu0 %809
  %v811 = vsel %vm57, %v769, 0.0
  %812 = vadd.xlane.f32.xlu0 %v811
  %v813 = vpop.xlane.xlu0 %812
  %v814 = vsel %vm57, %v770, 0.0
  %815 = vadd.xlane.f32.xlu0 %v814
  %v816 = vpop.xlane.xlu0 %815
  %v817 = vsel %vm57, %v771, 0.0
  %818 = vadd.xlane.f32.xlu0 %v817
  %v819 = vpop.xlane.xlu0 %818
  %v820 = vsel %vm57, %v772, 0.0
  %821 = vadd.xlane.f32.xlu0 %v820
  %v822 = vpop.xlane.xlu0 %821
  %v823 = vsel %vm57, %v773, 0.0
  %824 = vadd.xlane.f32.xlu0 %v823
  %v825 = vpop.xlane.xlu0 %824
  %v826 = vsel %vm57, %v774, 0.0
  %827 = vadd.xlane.f32.xlu0 %v826
  %v828 = vpop.xlane.xlu0 %827
  %v829 = vsel %vm57, %v775, 0.0
  %830 = vadd.xlane.f32.xlu0 %v829
  %v831 = vpop.xlane.xlu0 %830
  %v832 = vsel %vm57, %v776, 0.0
  %833 = vadd.xlane.f32.xlu0 %v832
  %v834 = vpop.xlane.xlu0 %833
  %v835 = vsel %vm57, %v777, 0.0
  %836 = vadd.xlane.f32.xlu0 %v835
  %v837 = vpop.xlane.xlu0 %836
  %v838 = vsel %vm57, %v778, 0.0
  %839 = vadd.xlane.f32.xlu0 %v838
  %v840 = vpop.xlane.xlu0 %839
  %v841 = vsel %vm57, %v779, 0.0
  %842 = vadd.xlane.f32.xlu0 %v841
  %v843 = vpop.xlane.xlu0 %842
  %v844 = vsel %vm57, %v780, 0.0
  %845 = vadd.xlane.f32.xlu0 %v844
  %v846 = vpop.xlane.xlu0 %845
  %v847 = vsel %vm57, %v781, 0.0
  %848 = vadd.xlane.f32.xlu0 %v847
  %v849 = vpop.xlane.xlu0 %848
  %v850 = vsel %vm57, %v782, 0.0
  %851 = vadd.xlane.f32.xlu0 %v850
  %v852 = vpop.xlane.xlu0 %851
  %v853 = vsel %vm57, %v783, 0.0
  %854 = vadd.xlane.f32.xlu0 %v853
  %v855 = vpop.xlane.xlu0 %854
  %v856 = vsel %vm57, %v784, 0.0
  %857 = vadd.xlane.f32.xlu0 %v856
  %v858 = vpop.xlane.xlu0 %857
  %v859 = vsel %vm57, %v785, 0.0
  %860 = vadd.xlane.f32.xlu0 %v859
  %v861 = vpop.xlane.xlu0 %860
  %v862 = vsel %vm57, %v786, 0.0
  %863 = vadd.xlane.f32.xlu0 %v862
  %v864 = vpop.xlane.xlu0 %863
  %v865 = vsel %vm57, %v787, 0.0
  %866 = vadd.xlane.f32.xlu0 %v865
  %v867 = vpop.xlane.xlu0 %866
  %v868 = vsel %vm57, %v788, 0.0
  %869 = vadd.xlane.f32.xlu0 %v868
  %v870 = vpop.xlane.xlu0 %869
  %v871 = vsel %vm57, %v789, 0.0
  %872 = vadd.xlane.f32.xlu0 %v871
  %v873 = vpop.xlane.xlu0 %872
  %v874 = vsel %vm57, %v790, 0.0
  %875 = vadd.xlane.f32.xlu0 %v874
  %v876 = vpop.xlane.xlu0 %875
  %v877 = vsel %vm57, %v791, 0.0
  %878 = vadd.xlane.f32.xlu0 %v877
  %v879 = vpop.xlane.xlu0 %878
  %v880 = vsel %vm57, %v792, 0.0
  %881 = vadd.xlane.f32.xlu0 %v880
  %v882 = vpop.xlane.xlu0 %881
  %v883 = vsel %vm57, %v793, 0.0
  %884 = vadd.xlane.f32.xlu0 %v883
  %v885 = vpop.xlane.xlu0 %884
  %v886 = vsel %vm57, %v794, 0.0
  %887 = vadd.xlane.f32.xlu0 %v886
  %v888 = vpop.xlane.xlu0 %887
  %v889 = vsel %vm57, %v795, 0.0
  %890 = vadd.xlane.f32.xlu0 %v889
  %v891 = vpop.xlane.xlu0 %890
  %v924 = vlaneseq
  %v925 = vand.u32 %v924, 127
  %v926 = vperm.slane %v798, %v925
  %v927 = vadd.s32 %v925, 4294967288
  %v928 = vperm.slane %v801, %v927
  %vm929 = vcmask 130112
  %v930 = vsel %vm929, %v928, %v926
  %v931 = vperm.slane %v804, %v925
  %v932 = vperm.slane %v807, %v927
  %v933 = vsel %vm929, %v932, %v931
  %v934 = vperm.slane %v810, %v925
  %v935 = vperm.slane %v813, %v927
  %v936 = vsel %vm929, %v935, %v934
  %v937 = vperm.slane %v816, %v925
  %v938 = vperm.slane %v819, %v927
  %v939 = vsel %vm929, %v938, %v937
  %v940 = vperm.slane %v822, %v925
  %v941 = vperm.slane %v825, %v927
  %v942 = vsel %vm929, %v941, %v940
  %v943 = vperm.slane %v828, %v925
  %v944 = vperm.slane %v831, %v927
  %v945 = vsel %vm929, %v944, %v943
  %v946 = vperm.slane %v834, %v925
  %v947 = vperm.slane %v837, %v927
  %v948 = vsel %vm929, %v947, %v946
  %v949 = vperm.slane %v840, %v925
  %v950 = vperm.slane %v843, %v927
  %v951 = vsel %vm929, %v950, %v949
  %v952 = vperm.slane %v846, %v925
  %v953 = vperm.slane %v849, %v927
  %v954 = vsel %vm929, %v953, %v952
  %v955 = vperm.slane %v852, %v925
  %v956 = vperm.slane %v855, %v927
  %v957 = vsel %vm929, %v956, %v955
  %v958 = vperm.slane %v858, %v925
  %v959 = vperm.slane %v861, %v927
  %v960 = vsel %vm929, %v959, %v958
  %v961 = vperm.slane %v864, %v925
  %v962 = vperm.slane %v867, %v927
  %v963 = vsel %vm929, %v962, %v961
  %v964 = vperm.slane %v870, %v925
  %v965 = vperm.slane %v873, %v927
  %v966 = vsel %vm929, %v965, %v964
  %v967 = vperm.slane %v876, %v925
  %v968 = vperm.slane %v879, %v927
  %v969 = vsel %vm929, %v968, %v967
  %v970 = vperm.slane %v882, %v925
  %v971 = vperm.slane %v885, %v927
  %v972 = vsel %vm929, %v971, %v970
  %v973 = vperm.slane %v888, %v925
  %v974 = vperm.slane %v891, %v927
  %v975 = vsel %vm929, %v974, %v973
  %vm976 = vcmask 1041409
  %v977 = vsel %vm976, %v933, %v930
  %vm978 = vcmask 1042434
  %v979 = vsel %vm978, %v936, %v977
  %vm980 = vcmask 1043459
  %v981 = vsel %vm980, %v939, %v979
  %vm982 = vcmask 1044484
  %v983 = vsel %vm982, %v942, %v981
  %vm984 = vcmask 1045509
  %v985 = vsel %vm984, %v945, %v983
  %vm986 = vcmask 1046534
  %v987 = vsel %vm986, %v948, %v985
  %vm988 = vcmask 1047559
  %v989 = vsel %vm988, %v951, %v987
  %v990 = vsel %vm976, %v957, %v954
  %v991 = vsel %vm978, %v960, %v990
  %v992 = vsel %vm980, %v963, %v991
  %v993 = vsel %vm982, %v966, %v992
  %v994 = vsel %vm984, %v969, %v993
  %v995 = vsel %vm986, %v972, %v994
  %v996 = vsel %vm988, %v975, %v995
  %v999 = vsel %vm57, %v989, 0.0
  %1000 = vadd.xlane.f32.xlu0 %v999
  %v1001 = vpop.xlane.xlu0 %1000
  %v1002 = vsel %vm57, %v996, 0.0
  %1003 = vadd.xlane.f32.xlu0 %v1002
  %v1004 = vpop.xlane.xlu0 %1003
  %v1005 = vmul.f32 %v1001, 0.00390625
  %v1006 = vmul.f32 %v1004, 0.00390625
  %v1007 = vld [vmem:[%s1] sm:$0xff]
  %v1009 = vperm.slane %v1007, 0
  %v1010 = vlaneseq
  %v1011 = vshrl.u32 %v1010, 7
  %1013 = vset.pattern.permute.xlu0 %v1011
  %1014 = vperm.xlu0 %1013, %v1009
  %v1015 = vpop.permute.xlu0 %1014
  %v1016 = vperm.slane %v1007, 1
  %v1017 = vlaneseq
  %v1018 = vshrl.u32 %v1017, 7
  %1020 = vset.pattern.permute.xlu0 %v1018
  %1021 = vperm.xlu0 %1020, %v1016
  %v1022 = vpop.permute.xlu0 %1021
  %v1023 = vperm.slane %v1007, 2
  %v1024 = vlaneseq
  %v1025 = vshrl.u32 %v1024, 7
  %1027 = vset.pattern.permute.xlu0 %v1025
  %1028 = vperm.xlu0 %1027, %v1023
  %v1029 = vpop.permute.xlu0 %1028
  %v1030 = vperm.slane %v1007, 3
  %v1031 = vlaneseq
  %v1032 = vshrl.u32 %v1031, 7
  %1034 = vset.pattern.permute.xlu0 %v1032
  %1035 = vperm.xlu0 %1034, %v1030
  %v1036 = vpop.permute.xlu0 %1035
  %v1037 = vperm.slane %v1007, 4
  %v1038 = vlaneseq
  %v1039 = vshrl.u32 %v1038, 7
  %1041 = vset.pattern.permute.xlu0 %v1039
  %1042 = vperm.xlu0 %1041, %v1037
  %v1043 = vpop.permute.xlu0 %1042
  %v1044 = vperm.slane %v1007, 5
  %v1045 = vlaneseq
  %v1046 = vshrl.u32 %v1045, 7
  %1048 = vset.pattern.permute.xlu0 %v1046
  %1049 = vperm.xlu0 %1048, %v1044
  %v1050 = vpop.permute.xlu0 %1049
  %v1051 = vperm.slane %v1007, 6
  %v1052 = vlaneseq
  %v1053 = vshrl.u32 %v1052, 7
  %1055 = vset.pattern.permute.xlu0 %v1053
  %1056 = vperm.xlu0 %1055, %v1051
  %v1057 = vpop.permute.xlu0 %1056
  %v1058 = vperm.slane %v1007, 7
  %v1059 = vlaneseq
  %v1060 = vshrl.u32 %v1059, 7
  %1062 = vset.pattern.permute.xlu0 %v1060
  %1063 = vperm.xlu0 %1062, %v1058
  %v1064 = vpop.permute.xlu0 %1063
  %v1073 = vmul.f32 %v1005, %v1015
  %v1074 = vmul.f32 %v1005, %v1022
  %v1075 = vmul.f32 %v1005, %v1029
  %v1076 = vmul.f32 %v1005, %v1036
  %v1077 = vmul.f32 %v1005, %v1043
  %v1078 = vmul.f32 %v1005, %v1050
  %v1079 = vmul.f32 %v1005, %v1057
  %v1080 = vmul.f32 %v1005, %v1064
  %v1081 = vmul.f32 %v1006, %v1015
  %v1082 = vmul.f32 %v1006, %v1022
  %v1083 = vmul.f32 %v1006, %v1029
  %v1084 = vmul.f32 %v1006, %v1036
  %v1085 = vmul.f32 %v1006, %v1043
  %v1086 = vmul.f32 %v1006, %v1050
  %v1087 = vmul.f32 %v1006, %v1057
  %v1088 = vmul.f32 %v1006, %v1064
  %1105 = vset.pattern.permute.xlu0 0
  %1106 = vperm.xlu0 %1105, %v1073
  %v1107 = vpop.permute.xlu0 %1106
  %1108 = vset.pattern.permute.xlu0 0
  %1109 = vperm.xlu0 %1108, %v1074
  %v1110 = vpop.permute.xlu0 %1109
  %1111 = vset.pattern.permute.xlu0 0
  %1112 = vperm.xlu0 %1111, %v1075
  %v1113 = vpop.permute.xlu0 %1112
  %1114 = vset.pattern.permute.xlu0 0
  %1115 = vperm.xlu0 %1114, %v1076
  %v1116 = vpop.permute.xlu0 %1115
  %1117 = vset.pattern.permute.xlu0 0
  %1118 = vperm.xlu0 %1117, %v1077
  %v1119 = vpop.permute.xlu0 %1118
  %1120 = vset.pattern.permute.xlu0 0
  %1121 = vperm.xlu0 %1120, %v1078
  %v1122 = vpop.permute.xlu0 %1121
  %1123 = vset.pattern.permute.xlu0 0
  %1124 = vperm.xlu0 %1123, %v1079
  %v1125 = vpop.permute.xlu0 %1124
  %1126 = vset.pattern.permute.xlu0 0
  %1127 = vperm.xlu0 %1126, %v1080
  %v1128 = vpop.permute.xlu0 %1127
  %1129 = vset.pattern.permute.xlu0 0
  %1130 = vperm.xlu0 %1129, %v1081
  %v1131 = vpop.permute.xlu0 %1130
  %1132 = vset.pattern.permute.xlu0 0
  %1133 = vperm.xlu0 %1132, %v1082
  %v1134 = vpop.permute.xlu0 %1133
  %1135 = vset.pattern.permute.xlu0 0
  %1136 = vperm.xlu0 %1135, %v1083
  %v1137 = vpop.permute.xlu0 %1136
  %1138 = vset.pattern.permute.xlu0 0
  %1139 = vperm.xlu0 %1138, %v1084
  %v1140 = vpop.permute.xlu0 %1139
  %1141 = vset.pattern.permute.xlu0 0
  %1142 = vperm.xlu0 %1141, %v1085
  %v1143 = vpop.permute.xlu0 %1142
  %1144 = vset.pattern.permute.xlu0 0
  %1145 = vperm.xlu0 %1144, %v1086
  %v1146 = vpop.permute.xlu0 %1145
  %1147 = vset.pattern.permute.xlu0 0
  %1148 = vperm.xlu0 %1147, %v1087
  %v1149 = vpop.permute.xlu0 %1148
  %1150 = vset.pattern.permute.xlu0 0
  %1151 = vperm.xlu0 %1150, %v1088
  %v1152 = vpop.permute.xlu0 %1151
  %v1153 = vperm.slane %v1107, %v925
  %v1154 = vperm.slane %v1110, %v925
  %v1155 = vperm.slane %v1113, %v925
  %v1156 = vperm.slane %v1116, %v925
  %v1157 = vperm.slane %v1119, %v925
  %v1158 = vperm.slane %v1122, %v925
  %v1159 = vperm.slane %v1125, %v925
  %v1160 = vperm.slane %v1128, %v925
  %v1161 = vperm.slane %v1131, %v925
  %v1162 = vperm.slane %v1134, %v925
  %v1163 = vperm.slane %v1137, %v925
  %v1164 = vperm.slane %v1140, %v925
  %v1165 = vperm.slane %v1143, %v925
  %v1166 = vperm.slane %v1146, %v925
  %v1167 = vperm.slane %v1149, %v925
  %v1168 = vperm.slane %v1152, %v925
  %v1169 = vsel %vm976, %v1154, %v1153
  %v1170 = vsel %vm978, %v1155, %v1169
  %v1171 = vsel %vm980, %v1156, %v1170
  %v1172 = vsel %vm982, %v1157, %v1171
  %v1173 = vsel %vm984, %v1158, %v1172
  %v1174 = vsel %vm986, %v1159, %v1173
  %v1175 = vsel %vm988, %v1160, %v1174
  %v1176 = vsel %vm976, %v1162, %v1161
  %v1177 = vsel %vm978, %v1163, %v1176
  %v1178 = vsel %vm980, %v1164, %v1177
  %v1179 = vsel %vm982, %v1165, %v1178
  %v1180 = vsel %vm984, %v1166, %v1179
  %v1181 = vsel %vm986, %v1167, %v1180
  %v1182 = vsel %vm988, %v1168, %v1181
  %vm1185 = vcmask 64512
  %v1186 = vsel %vm1185, %v1175, 0.0
  %1187 = vadd.xlane.f32.xlu0 %v1186
  %v1188 = vpop.xlane.xlu0 %1187
  %v1189 = vsel %vm1185, %v1182, 0.0
  %1190 = vadd.xlane.f32.xlu0 %v1189
  %v1191 = vpop.xlane.xlu0 %1190
  %v1192 = vmax.f32 %v1188, 0.0
  %v1193 = vmax.f32 %v1191, 0.0
  %v1194 = vld [vmem:[%s2] sm:$0xff]
  %v1196 = vperm.slane %v1194, 0
  %v1197 = vlaneseq
  %v1198 = vshrl.u32 %v1197, 7
  %1200 = vset.pattern.permute.xlu0 %v1198
  %1201 = vperm.xlu0 %1200, %v1196
  %v1202 = vpop.permute.xlu0 %1201
  %v1203 = vperm.slane %v1194, 1
  %v1204 = vlaneseq
  %v1205 = vshrl.u32 %v1204, 7
  %1207 = vset.pattern.permute.xlu0 %v1205
  %1208 = vperm.xlu0 %1207, %v1203
  %v1209 = vpop.permute.xlu0 %1208
  %v1210 = vperm.slane %v1194, 2
  %v1211 = vlaneseq
  %v1212 = vshrl.u32 %v1211, 7
  %1214 = vset.pattern.permute.xlu0 %v1212
  %1215 = vperm.xlu0 %1214, %v1210
  %v1216 = vpop.permute.xlu0 %1215
  %v1217 = vperm.slane %v1194, 3
  %v1218 = vlaneseq
  %v1219 = vshrl.u32 %v1218, 7
  %1221 = vset.pattern.permute.xlu0 %v1219
  %1222 = vperm.xlu0 %1221, %v1217
  %v1223 = vpop.permute.xlu0 %1222
  %v1224 = vperm.slane %v1194, 4
  %v1225 = vlaneseq
  %v1226 = vshrl.u32 %v1225, 7
  %1228 = vset.pattern.permute.xlu0 %v1226
  %1229 = vperm.xlu0 %1228, %v1224
  %v1230 = vpop.permute.xlu0 %1229
  %v1231 = vperm.slane %v1194, 5
  %v1232 = vlaneseq
  %v1233 = vshrl.u32 %v1232, 7
  %1235 = vset.pattern.permute.xlu0 %v1233
  %1236 = vperm.xlu0 %1235, %v1231
  %v1237 = vpop.permute.xlu0 %1236
  %v1238 = vperm.slane %v1194, 6
  %v1239 = vlaneseq
  %v1240 = vshrl.u32 %v1239, 7
  %1242 = vset.pattern.permute.xlu0 %v1240
  %1243 = vperm.xlu0 %1242, %v1238
  %v1244 = vpop.permute.xlu0 %1243
  %v1245 = vperm.slane %v1194, 7
  %v1246 = vlaneseq
  %v1247 = vshrl.u32 %v1246, 7
  %1249 = vset.pattern.permute.xlu0 %v1247
  %1250 = vperm.xlu0 %1249, %v1245
  %v1251 = vpop.permute.xlu0 %1250
  %v1260 = vmul.f32 %v1192, %v1202
  %v1261 = vmul.f32 %v1192, %v1209
  %v1262 = vmul.f32 %v1192, %v1216
  %v1263 = vmul.f32 %v1192, %v1223
  %v1264 = vmul.f32 %v1192, %v1230
  %v1265 = vmul.f32 %v1192, %v1237
  %v1266 = vmul.f32 %v1192, %v1244
  %v1267 = vmul.f32 %v1192, %v1251
  %v1268 = vmul.f32 %v1193, %v1202
  %v1269 = vmul.f32 %v1193, %v1209
  %v1270 = vmul.f32 %v1193, %v1216
  %v1271 = vmul.f32 %v1193, %v1223
  %v1272 = vmul.f32 %v1193, %v1230
  %v1273 = vmul.f32 %v1193, %v1237
  %v1274 = vmul.f32 %v1193, %v1244
  %v1275 = vmul.f32 %v1193, %v1251
  %1292 = vset.pattern.permute.xlu0 0
  %1293 = vperm.xlu0 %1292, %v1260
  %v1294 = vpop.permute.xlu0 %1293
  %1295 = vset.pattern.permute.xlu0 0
  %1296 = vperm.xlu0 %1295, %v1261
  %v1297 = vpop.permute.xlu0 %1296
  %1298 = vset.pattern.permute.xlu0 0
  %1299 = vperm.xlu0 %1298, %v1262
  %v1300 = vpop.permute.xlu0 %1299
  %1301 = vset.pattern.permute.xlu0 0
  %1302 = vperm.xlu0 %1301, %v1263
  %v1303 = vpop.permute.xlu0 %1302
  %1304 = vset.pattern.permute.xlu0 0
  %1305 = vperm.xlu0 %1304, %v1264
  %v1306 = vpop.permute.xlu0 %1305
  %1307 = vset.pattern.permute.xlu0 0
  %1308 = vperm.xlu0 %1307, %v1265
  %v1309 = vpop.permute.xlu0 %1308
  %1310 = vset.pattern.permute.xlu0 0
  %1311 = vperm.xlu0 %1310, %v1266
  %v1312 = vpop.permute.xlu0 %1311
  %1313 = vset.pattern.permute.xlu0 0
  %1314 = vperm.xlu0 %1313, %v1267
  %v1315 = vpop.permute.xlu0 %1314
  %1316 = vset.pattern.permute.xlu0 0
  %1317 = vperm.xlu0 %1316, %v1268
  %v1318 = vpop.permute.xlu0 %1317
  %1319 = vset.pattern.permute.xlu0 0
  %1320 = vperm.xlu0 %1319, %v1269
  %v1321 = vpop.permute.xlu0 %1320
  %1322 = vset.pattern.permute.xlu0 0
  %1323 = vperm.xlu0 %1322, %v1270
  %v1324 = vpop.permute.xlu0 %1323
  %1325 = vset.pattern.permute.xlu0 0
  %1326 = vperm.xlu0 %1325, %v1271
  %v1327 = vpop.permute.xlu0 %1326
  %1328 = vset.pattern.permute.xlu0 0
  %1329 = vperm.xlu0 %1328, %v1272
  %v1330 = vpop.permute.xlu0 %1329
  %1331 = vset.pattern.permute.xlu0 0
  %1332 = vperm.xlu0 %1331, %v1273
  %v1333 = vpop.permute.xlu0 %1332
  %1334 = vset.pattern.permute.xlu0 0
  %1335 = vperm.xlu0 %1334, %v1274
  %v1336 = vpop.permute.xlu0 %1335
  %1337 = vset.pattern.permute.xlu0 0
  %1338 = vperm.xlu0 %1337, %v1275
  %v1339 = vpop.permute.xlu0 %1338
  %v1340 = vperm.slane %v1294, %v925
  %v1341 = vperm.slane %v1297, %v925
  %v1342 = vperm.slane %v1300, %v925
  %v1343 = vperm.slane %v1303, %v925
  %v1344 = vperm.slane %v1306, %v925
  %v1345 = vperm.slane %v1309, %v925
  %v1346 = vperm.slane %v1312, %v925
  %v1347 = vperm.slane %v1315, %v925
  %v1348 = vperm.slane %v1318, %v925
  %v1349 = vperm.slane %v1321, %v925
  %v1350 = vperm.slane %v1324, %v925
  %v1351 = vperm.slane %v1327, %v925
  %v1352 = vperm.slane %v1330, %v925
  %v1353 = vperm.slane %v1333, %v925
  %v1354 = vperm.slane %v1336, %v925
  %v1355 = vperm.slane %v1339, %v925
  %v1356 = vsel %vm976, %v1341, %v1340
  %v1357 = vsel %vm978, %v1342, %v1356
  %v1358 = vsel %vm980, %v1343, %v1357
  %v1359 = vsel %vm982, %v1344, %v1358
  %v1360 = vsel %vm984, %v1345, %v1359
  %v1361 = vsel %vm986, %v1346, %v1360
  %v1362 = vsel %vm988, %v1347, %v1361
  %v1363 = vsel %vm976, %v1349, %v1348
  %v1364 = vsel %vm978, %v1350, %v1363
  %v1365 = vsel %vm980, %v1351, %v1364
  %v1366 = vsel %vm982, %v1352, %v1365
  %v1367 = vsel %vm984, %v1353, %v1366
  %v1368 = vsel %vm986, %v1354, %v1367
  %v1369 = vsel %vm988, %v1355, %v1368
  %v1372 = vsel %vm1185, %v1362, 0.0
  %1373 = vadd.xlane.f32.xlu0 %v1372
  %v1374 = vpop.xlane.xlu0 %1373
  %v1375 = vsel %vm1185, %v1369, 0.0
  %1376 = vadd.xlane.f32.xlu0 %v1375
  %v1377 = vpop.xlane.xlu0 %1376
  %v1378 = vsub.f32 0.0, %v1374
  %v1379 = vsub.f32 0.0, %v1377
  %v1380 = vmul.f32 %v1378, 1.442695
  %v1381 = vpow.pop %v1380
  %v1382 = vmul.f32 %v1379, 1.442695
  %v1383 = vpow.pop %v1382
  %v1384 = vadd.f32 %v1381, 1.0
  %v1385 = vadd.f32 %v1383, 1.0
  %v1386 = vrcp.pop %v1384
  %v1387 = vmul.f32 %v1384, %v1386
  %v1388 = vsub.f32 1.0, %v1387
  %v1389 = vmul.f32 %v1386, %v1388
  %v1390 = vadd.f32 %v1386, %v1389
  %vm1391 = vweird.f32 %v1384
  %vm1392 = vweird.f32 %v1386
  %vm1393 = vmor %vm1391, %vm1392
  %v1394 = vsel %vm1393, %v1386, %v1390
  %v1395 = vand.u32 2147483647, %v1384
  %vm1396 = vcmp.eq.f32.partialorder %v1395, 8.507059e+37
  %v1397 = vand.u32 %v1384, 2147483648
  %v1398 = vor.u32 1.1754944e-38, %v1397
  %v1399 = vsel %vm1396, %v1398, %v1394
  %v1400 = vmul.f32 1.0, %v1399
  %v1401 = vrcp.pop %v1385
  %v1402 = vmul.f32 %v1385, %v1401
  %v1403 = vsub.f32 1.0, %v1402
  %v1404 = vmul.f32 %v1401, %v1403
  %v1405 = vadd.f32 %v1401, %v1404
  %vm1406 = vweird.f32 %v1385
  %vm1407 = vweird.f32 %v1401
  %vm1408 = vmor %vm1406, %vm1407
  %v1409 = vsel %vm1408, %v1401, %v1405
  %v1410 = vand.u32 2147483647, %v1385
  %vm1411 = vcmp.eq.f32.partialorder %v1410, 8.507059e+37
  %v1412 = vand.u32 %v1385, 2147483648
  %v1413 = vor.u32 1.1754944e-38, %v1412
  %v1414 = vsel %vm1411, %v1413, %v1409
  %v1415 = vmul.f32 1.0, %v1414
  %v1418 = vperm.slane %v1400, 0
  %v1419 = vperm.slane %v1400, 1
  %v1420 = vperm.slane %v1400, 2
  %v1421 = vperm.slane %v1400, 3
  %v1422 = vperm.slane %v1400, 4
  %v1423 = vperm.slane %v1400, 5
  %v1424 = vperm.slane %v1400, 6
  %v1425 = vperm.slane %v1400, 7
  %v1426 = vperm.slane %v1415, 0
  %v1427 = vperm.slane %v1415, 1
  %v1428 = vperm.slane %v1415, 2
  %v1429 = vperm.slane %v1415, 3
  %v1430 = vperm.slane %v1415, 4
  %v1431 = vperm.slane %v1415, 5
  %v1432 = vperm.slane %v1415, 6
  %v1433 = vperm.slane %v1415, 7
  %v1450 = vmul.f32 %v764, %v1418
  %v1451 = vmul.f32 %v765, %v1418
  %v1452 = vmul.f32 %v766, %v1419
  %v1453 = vmul.f32 %v767, %v1419
  %v1454 = vmul.f32 %v768, %v1420
  %v1455 = vmul.f32 %v769, %v1420
  %v1456 = vmul.f32 %v770, %v1421
  %v1457 = vmul.f32 %v771, %v1421
  %v1458 = vmul.f32 %v772, %v1422
  %v1459 = vmul.f32 %v773, %v1422
  %v1460 = vmul.f32 %v774, %v1423
  %v1461 = vmul.f32 %v775, %v1423
  %v1462 = vmul.f32 %v776, %v1424
  %v1463 = vmul.f32 %v777, %v1424
  %v1464 = vmul.f32 %v778, %v1425
  %v1465 = vmul.f32 %v779, %v1425
  %v1466 = vmul.f32 %v780, %v1426
  %v1467 = vmul.f32 %v781, %v1426
  %v1468 = vmul.f32 %v782, %v1427
  %v1469 = vmul.f32 %v783, %v1427
  %v1470 = vmul.f32 %v784, %v1428
  %v1471 = vmul.f32 %v785, %v1428
  %v1472 = vmul.f32 %v786, %v1429
  %v1473 = vmul.f32 %v787, %v1429
  %v1474 = vmul.f32 %v788, %v1430
  %v1475 = vmul.f32 %v789, %v1430
  %v1476 = vmul.f32 %v790, %v1431
  %v1477 = vmul.f32 %v791, %v1431
  %v1478 = vmul.f32 %v792, %v1432
  %v1479 = vmul.f32 %v793, %v1432
  %v1480 = vmul.f32 %v794, %v1433
  %v1481 = vmul.f32 %v795, %v1433
  %1482 = vst.msk [vmem:[%s6] sm:$0xff] %vm57, %v1450
  %1483 = vst.msk [vmem:[%s6 + $0x8] sm:$0xff] %vm57, %v1451
  %1484 = vst.msk [vmem:[%s6 + $0x10] sm:$0xff] %vm57, %v1452
  %1485 = vst.msk [vmem:[%s6 + $0x18] sm:$0xff] %vm57, %v1453
  %1486 = vst.msk [vmem:[%s6 + $0x20] sm:$0xff] %vm57, %v1454
  %1487 = vst.msk [vmem:[%s6 + $0x28] sm:$0xff] %vm57, %v1455
  %1488 = vst.msk [vmem:[%s6 + $0x30] sm:$0xff] %vm57, %v1456
  %1489 = vst.msk [vmem:[%s6 + $0x38] sm:$0xff] %vm57, %v1457
  %1490 = vst.msk [vmem:[%s6 + $0x40] sm:$0xff] %vm57, %v1458
  %1491 = vst.msk [vmem:[%s6 + $0x48] sm:$0xff] %vm57, %v1459
  %1492 = vst.msk [vmem:[%s6 + $0x50] sm:$0xff] %vm57, %v1460
  %1493 = vst.msk [vmem:[%s6 + $0x58] sm:$0xff] %vm57, %v1461
  %1494 = vst.msk [vmem:[%s6 + $0x60] sm:$0xff] %vm57, %v1462
  %1495 = vst.msk [vmem:[%s6 + $0x68] sm:$0xff] %vm57, %v1463
  %1496 = vst.msk [vmem:[%s6 + $0x70] sm:$0xff] %vm57, %v1464
  %1497 = vst.msk [vmem:[%s6 + $0x78] sm:$0xff] %vm57, %v1465
  %1498 = vst.msk [vmem:[%s6 + $0x80] sm:$0xff] %vm57, %v1466
  %1499 = vst.msk [vmem:[%s6 + $0x88] sm:$0xff] %vm57, %v1467
  %1500 = vst.msk [vmem:[%s6 + $0x90] sm:$0xff] %vm57, %v1468
  %1501 = vst.msk [vmem:[%s6 + $0x98] sm:$0xff] %vm57, %v1469
  %1502 = vst.msk [vmem:[%s6 + $0xa0] sm:$0xff] %vm57, %v1470
  %1503 = vst.msk [vmem:[%s6 + $0xa8] sm:$0xff] %vm57, %v1471
  %1504 = vst.msk [vmem:[%s6 + $0xb0] sm:$0xff] %vm57, %v1472
  %1505 = vst.msk [vmem:[%s6 + $0xb8] sm:$0xff] %vm57, %v1473
  %1506 = vst.msk [vmem:[%s6 + $0xc0] sm:$0xff] %vm57, %v1474
  %1507 = vst.msk [vmem:[%s6 + $0xc8] sm:$0xff] %vm57, %v1475
  %1508 = vst.msk [vmem:[%s6 + $0xd0] sm:$0xff] %vm57, %v1476
  %1509 = vst.msk [vmem:[%s6 + $0xd8] sm:$0xff] %vm57, %v1477
  %1510 = vst.msk [vmem:[%s6 + $0xe0] sm:$0xff] %vm57, %v1478
  %1511 = vst.msk [vmem:[%s6 + $0xe8] sm:$0xff] %vm57, %v1479
  %1512 = vst.msk [vmem:[%s6 + $0xf0] sm:$0xff] %vm57, %v1480
  %1513 = vst.msk [vmem:[%s6 + $0xf8] sm:$0xff] %vm57, %v1481
  %v1514 = vld [vmem:[%s3] sm:$0xff]
  %v1515 = vld [vmem:[%s3 + $0x8] sm:$0xff]
  %v1516 = vld [vmem:[%s3 + $0x10] sm:$0xff]
  %v1517 = vld [vmem:[%s3 + $0x18] sm:$0xff]
  %v1518 = vld [vmem:[%s3 + $0x20] sm:$0xff]
  %v1519 = vld [vmem:[%s3 + $0x28] sm:$0xff]
  %v1520 = vld [vmem:[%s3 + $0x30] sm:$0xff]
  %v1521 = vld [vmem:[%s3 + $0x38] sm:$0xff]
  %v1522 = vld [vmem:[%s3 + $0x40] sm:$0xff]
  %v1523 = vld [vmem:[%s3 + $0x48] sm:$0xff]
  %v1524 = vld [vmem:[%s3 + $0x50] sm:$0xff]
  %v1525 = vld [vmem:[%s3 + $0x58] sm:$0xff]
  %v1526 = vld [vmem:[%s3 + $0x60] sm:$0xff]
  %v1527 = vld [vmem:[%s3 + $0x68] sm:$0xff]
  %v1528 = vld [vmem:[%s3 + $0x70] sm:$0xff]
  %v1529 = vld [vmem:[%s3 + $0x78] sm:$0xff]
  %v1530 = vsel %vm1185, %v1514, -inf
  %1531 = vmax.xlane.f32.xlu0 %v1530
  %v1532 = vpop.xlane.xlu0 %1531
  %v1533 = vsel %vm1185, %v1515, -inf
  %1534 = vmax.xlane.f32.xlu0 %v1533
  %v1535 = vpop.xlane.xlu0 %1534
  %v1536 = vsel %vm1185, %v1516, -inf
  %1537 = vmax.xlane.f32.xlu0 %v1536
  %v1538 = vpop.xlane.xlu0 %1537
  %v1539 = vsel %vm1185, %v1517, -inf
  %1540 = vmax.xlane.f32.xlu0 %v1539
  %v1541 = vpop.xlane.xlu0 %1540
  %v1542 = vsel %vm1185, %v1518, -inf
  %1543 = vmax.xlane.f32.xlu0 %v1542
  %v1544 = vpop.xlane.xlu0 %1543
  %v1545 = vsel %vm1185, %v1519, -inf
  %1546 = vmax.xlane.f32.xlu0 %v1545
  %v1547 = vpop.xlane.xlu0 %1546
  %v1548 = vsel %vm1185, %v1520, -inf
  %1549 = vmax.xlane.f32.xlu0 %v1548
  %v1550 = vpop.xlane.xlu0 %1549
  %v1551 = vsel %vm1185, %v1521, -inf
  %1552 = vmax.xlane.f32.xlu0 %v1551
  %v1553 = vpop.xlane.xlu0 %1552
  %v1554 = vsel %vm1185, %v1522, -inf
  %1555 = vmax.xlane.f32.xlu0 %v1554
  %v1556 = vpop.xlane.xlu0 %1555
  %v1557 = vsel %vm1185, %v1523, -inf
  %1558 = vmax.xlane.f32.xlu0 %v1557
  %v1559 = vpop.xlane.xlu0 %1558
  %v1560 = vsel %vm1185, %v1524, -inf
  %1561 = vmax.xlane.f32.xlu0 %v1560
  %v1562 = vpop.xlane.xlu0 %1561
  %v1563 = vsel %vm1185, %v1525, -inf
  %1564 = vmax.xlane.f32.xlu0 %v1563
  %v1565 = vpop.xlane.xlu0 %1564
  %v1566 = vsel %vm1185, %v1526, -inf
  %1567 = vmax.xlane.f32.xlu0 %v1566
  %v1568 = vpop.xlane.xlu0 %1567
  %v1569 = vsel %vm1185, %v1527, -inf
  %1570 = vmax.xlane.f32.xlu0 %v1569
  %v1571 = vpop.xlane.xlu0 %1570
  %v1572 = vsel %vm1185, %v1528, -inf
  %1573 = vmax.xlane.f32.xlu0 %v1572
  %v1574 = vpop.xlane.xlu0 %1573
  %v1575 = vsel %vm1185, %v1529, -inf
  %1576 = vmax.xlane.f32.xlu0 %v1575
  %v1577 = vpop.xlane.xlu0 %1576
  %v1578 = vrot.slane %v1532, 4
  %v1579 = vmax.f32 %v1532, %v1578
  %v1580 = vrot.slane %v1579, 2
  %v1581 = vmax.f32 %v1579, %v1580
  %v1582 = vrot.slane %v1581, 1
  %v1583 = vmax.f32 %v1581, %v1582
  %v1584 = vrot.slane %v1535, 4
  %v1585 = vmax.f32 %v1535, %v1584
  %v1586 = vrot.slane %v1585, 2
  %v1587 = vmax.f32 %v1585, %v1586
  %v1588 = vrot.slane %v1587, 1
  %v1589 = vmax.f32 %v1587, %v1588
  %v1590 = vrot.slane %v1538, 4
  %v1591 = vmax.f32 %v1538, %v1590
  %v1592 = vrot.slane %v1591, 2
  %v1593 = vmax.f32 %v1591, %v1592
  %v1594 = vrot.slane %v1593, 1
  %v1595 = vmax.f32 %v1593, %v1594
  %v1596 = vrot.slane %v1541, 4
  %v1597 = vmax.f32 %v1541, %v1596
  %v1598 = vrot.slane %v1597, 2
  %v1599 = vmax.f32 %v1597, %v1598
  %v1600 = vrot.slane %v1599, 1
  %v1601 = vmax.f32 %v1599, %v1600
  %v1602 = vrot.slane %v1544, 4
  %v1603 = vmax.f32 %v1544, %v1602
  %v1604 = vrot.slane %v1603, 2
  %v1605 = vmax.f32 %v1603, %v1604
  %v1606 = vrot.slane %v1605, 1
  %v1607 = vmax.f32 %v1605, %v1606
  %v1608 = vrot.slane %v1547, 4
  %v1609 = vmax.f32 %v1547, %v1608
  %v1610 = vrot.slane %v1609, 2
  %v1611 = vmax.f32 %v1609, %v1610
  %v1612 = vrot.slane %v1611, 1
  %v1613 = vmax.f32 %v1611, %v1612
  %v1614 = vrot.slane %v1550, 4
  %v1615 = vmax.f32 %v1550, %v1614
  %v1616 = vrot.slane %v1615, 2
  %v1617 = vmax.f32 %v1615, %v1616
  %v1618 = vrot.slane %v1617, 1
  %v1619 = vmax.f32 %v1617, %v1618
  %v1620 = vrot.slane %v1553, 4
  %v1621 = vmax.f32 %v1553, %v1620
  %v1622 = vrot.slane %v1621, 2
  %v1623 = vmax.f32 %v1621, %v1622
  %v1624 = vrot.slane %v1623, 1
  %v1625 = vmax.f32 %v1623, %v1624
  %v1626 = vrot.slane %v1556, 4
  %v1627 = vmax.f32 %v1556, %v1626
  %v1628 = vrot.slane %v1627, 2
  %v1629 = vmax.f32 %v1627, %v1628
  %v1630 = vrot.slane %v1629, 1
  %v1631 = vmax.f32 %v1629, %v1630
  %v1632 = vrot.slane %v1559, 4
  %v1633 = vmax.f32 %v1559, %v1632
  %v1634 = vrot.slane %v1633, 2
  %v1635 = vmax.f32 %v1633, %v1634
  %v1636 = vrot.slane %v1635, 1
  %v1637 = vmax.f32 %v1635, %v1636
  %v1638 = vrot.slane %v1562, 4
  %v1639 = vmax.f32 %v1562, %v1638
  %v1640 = vrot.slane %v1639, 2
  %v1641 = vmax.f32 %v1639, %v1640
  %v1642 = vrot.slane %v1641, 1
  %v1643 = vmax.f32 %v1641, %v1642
  %v1644 = vrot.slane %v1565, 4
  %v1645 = vmax.f32 %v1565, %v1644
  %v1646 = vrot.slane %v1645, 2
  %v1647 = vmax.f32 %v1645, %v1646
  %v1648 = vrot.slane %v1647, 1
  %v1649 = vmax.f32 %v1647, %v1648
  %v1650 = vrot.slane %v1568, 4
  %v1651 = vmax.f32 %v1568, %v1650
  %v1652 = vrot.slane %v1651, 2
  %v1653 = vmax.f32 %v1651, %v1652
  %v1654 = vrot.slane %v1653, 1
  %v1655 = vmax.f32 %v1653, %v1654
  %v1656 = vrot.slane %v1571, 4
  %v1657 = vmax.f32 %v1571, %v1656
  %v1658 = vrot.slane %v1657, 2
  %v1659 = vmax.f32 %v1657, %v1658
  %v1660 = vrot.slane %v1659, 1
  %v1661 = vmax.f32 %v1659, %v1660
  %v1662 = vrot.slane %v1574, 4
  %v1663 = vmax.f32 %v1574, %v1662
  %v1664 = vrot.slane %v1663, 2
  %v1665 = vmax.f32 %v1663, %v1664
  %v1666 = vrot.slane %v1665, 1
  %v1667 = vmax.f32 %v1665, %v1666
  %v1668 = vrot.slane %v1577, 4
  %v1669 = vmax.f32 %v1577, %v1668
  %v1670 = vrot.slane %v1669, 2
  %v1671 = vmax.f32 %v1669, %v1670
  %v1672 = vrot.slane %v1671, 1
  %v1673 = vmax.f32 %v1671, %v1672
  %v1674 = vmax.f32 %v1583, %v1595
  %v1675 = vmax.f32 %v1589, %v1601
  %v1676 = vmax.f32 %v1674, %v1607
  %v1677 = vmax.f32 %v1675, %v1613
  %v1678 = vmax.f32 %v1676, %v1619
  %v1679 = vmax.f32 %v1677, %v1625
  %v1680 = vmax.f32 %v1678, %v1679
  %v1681 = vmax.f32 %v1631, %v1643
  %v1682 = vmax.f32 %v1637, %v1649
  %v1683 = vmax.f32 %v1681, %v1655
  %v1684 = vmax.f32 %v1682, %v1661
  %v1685 = vmax.f32 %v1683, %v1667
  %v1686 = vmax.f32 %v1684, %v1673
  %v1687 = vmax.f32 %v1685, %v1686
  %v1688 = vsub.f32 %v1514, %v1680
  %v1689 = vsub.f32 %v1515, %v1680
  %v1690 = vsub.f32 %v1516, %v1680
  %v1691 = vsub.f32 %v1517, %v1680
  %v1692 = vsub.f32 %v1518, %v1680
  %v1693 = vsub.f32 %v1519, %v1680
  %v1694 = vsub.f32 %v1520, %v1680
  %v1695 = vsub.f32 %v1521, %v1680
  %v1696 = vsub.f32 %v1522, %v1687
  %v1697 = vsub.f32 %v1523, %v1687
  %v1698 = vsub.f32 %v1524, %v1687
  %v1699 = vsub.f32 %v1525, %v1687
  %v1700 = vsub.f32 %v1526, %v1687
  %v1701 = vsub.f32 %v1527, %v1687
  %v1702 = vsub.f32 %v1528, %v1687
  %v1703 = vsub.f32 %v1529, %v1687
  %v1704 = vmul.f32 %v1688, 1.442695
  %v1705 = vpow.pop %v1704
  %v1706 = vmul.f32 %v1689, 1.442695
  %v1707 = vpow.pop %v1706
  %v1708 = vmul.f32 %v1690, 1.442695
  %v1709 = vpow.pop %v1708
  %v1710 = vmul.f32 %v1691, 1.442695
  %v1711 = vpow.pop %v1710
  %v1712 = vmul.f32 %v1692, 1.442695
  %v1713 = vpow.pop %v1712
  %v1714 = vmul.f32 %v1693, 1.442695
  %v1715 = vpow.pop %v1714
  %v1716 = vmul.f32 %v1694, 1.442695
  %v1717 = vpow.pop %v1716
  %v1718 = vmul.f32 %v1695, 1.442695
  %v1719 = vpow.pop %v1718
  %v1720 = vmul.f32 %v1696, 1.442695
  %v1721 = vpow.pop %v1720
  %v1722 = vmul.f32 %v1697, 1.442695
  %v1723 = vpow.pop %v1722
  %v1724 = vmul.f32 %v1698, 1.442695
  %v1725 = vpow.pop %v1724
  %v1726 = vmul.f32 %v1699, 1.442695
  %v1727 = vpow.pop %v1726
  %v1728 = vmul.f32 %v1700, 1.442695
  %v1729 = vpow.pop %v1728
  %v1730 = vmul.f32 %v1701, 1.442695
  %v1731 = vpow.pop %v1730
  %v1732 = vmul.f32 %v1702, 1.442695
  %v1733 = vpow.pop %v1732
  %v1734 = vmul.f32 %v1703, 1.442695
  %v1735 = vpow.pop %v1734
  %v1736 = vsel %vm1185, %v1705, 0.0
  %v1737 = vsel %vm1185, %v1707, 0.0
  %v1738 = vadd.f32 %v1736, %v1737
  %v1739 = vsel %vm1185, %v1709, 0.0
  %v1740 = vadd.f32 %v1738, %v1739
  %v1741 = vsel %vm1185, %v1711, 0.0
  %v1742 = vadd.f32 %v1740, %v1741
  %v1743 = vsel %vm1185, %v1713, 0.0
  %v1744 = vadd.f32 %v1742, %v1743
  %v1745 = vsel %vm1185, %v1715, 0.0
  %v1746 = vadd.f32 %v1744, %v1745
  %v1747 = vsel %vm1185, %v1717, 0.0
  %v1748 = vadd.f32 %v1746, %v1747
  %v1749 = vsel %vm1185, %v1719, 0.0
  %v1750 = vadd.f32 %v1748, %v1749
  %v1751 = vsel %vm1185, %v1721, 0.0
  %v1752 = vsel %vm1185, %v1723, 0.0
  %v1753 = vadd.f32 %v1751, %v1752
  %v1754 = vsel %vm1185, %v1725, 0.0
  %v1755 = vadd.f32 %v1753, %v1754
  %v1756 = vsel %vm1185, %v1727, 0.0
  %v1757 = vadd.f32 %v1755, %v1756
  %v1758 = vsel %vm1185, %v1729, 0.0
  %v1759 = vadd.f32 %v1757, %v1758
  %v1760 = vsel %vm1185, %v1731, 0.0
  %v1761 = vadd.f32 %v1759, %v1760
  %v1762 = vsel %vm1185, %v1733, 0.0
  %v1763 = vadd.f32 %v1761, %v1762
  %v1764 = vsel %vm1185, %v1735, 0.0
  %v1765 = vadd.f32 %v1763, %v1764
  %v1766 = vrcp.pop %v1750
  %v1767 = vrcp.pop %v1765
  %v1768 = vrot.slane %v1736, 4
  %v1769 = vadd.f32 %v1736, %v1768
  %v1770 = vrot.slane %v1769, 2
  %v1771 = vadd.f32 %v1769, %v1770
  %v1772 = vrot.slane %v1771, 1
  %v1773 = vadd.f32 %v1771, %v1772
  %v1774 = vrot.slane %v1737, 4
  %v1775 = vadd.f32 %v1737, %v1774
  %v1776 = vrot.slane %v1775, 2
  %v1777 = vadd.f32 %v1775, %v1776
  %v1778 = vrot.slane %v1777, 1
  %v1779 = vadd.f32 %v1777, %v1778
  %v1780 = vrot.slane %v1739, 4
  %v1781 = vadd.f32 %v1739, %v1780
  %v1782 = vrot.slane %v1781, 2
  %v1783 = vadd.f32 %v1781, %v1782
  %v1784 = vrot.slane %v1783, 1
  %v1785 = vadd.f32 %v1783, %v1784
  %v1786 = vrot.slane %v1741, 4
  %v1787 = vadd.f32 %v1741, %v1786
  %v1788 = vrot.slane %v1787, 2
  %v1789 = vadd.f32 %v1787, %v1788
  %v1790 = vrot.slane %v1789, 1
  %v1791 = vadd.f32 %v1789, %v1790
  %v1792 = vrot.slane %v1743, 4
  %v1793 = vadd.f32 %v1743, %v1792
  %v1794 = vrot.slane %v1793, 2
  %v1795 = vadd.f32 %v1793, %v1794
  %v1796 = vrot.slane %v1795, 1
  %v1797 = vadd.f32 %v1795, %v1796
  %v1798 = vrot.slane %v1745, 4
  %v1799 = vadd.f32 %v1745, %v1798
  %v1800 = vrot.slane %v1799, 2
  %v1801 = vadd.f32 %v1799, %v1800
  %v1802 = vrot.slane %v1801, 1
  %v1803 = vadd.f32 %v1801, %v1802
  %v1804 = vrot.slane %v1747, 4
  %v1805 = vadd.f32 %v1747, %v1804
  %v1806 = vrot.slane %v1805, 2
  %v1807 = vadd.f32 %v1805, %v1806
  %v1808 = vrot.slane %v1807, 1
  %v1809 = vadd.f32 %v1807, %v1808
  %v1810 = vrot.slane %v1749, 4
  %v1811 = vadd.f32 %v1749, %v1810
  %v1812 = vrot.slane %v1811, 2
  %v1813 = vadd.f32 %v1811, %v1812
  %v1814 = vrot.slane %v1813, 1
  %v1815 = vadd.f32 %v1813, %v1814
  %v1816 = vrot.slane %v1751, 4
  %v1817 = vadd.f32 %v1751, %v1816
  %v1818 = vrot.slane %v1817, 2
  %v1819 = vadd.f32 %v1817, %v1818
  %v1820 = vrot.slane %v1819, 1
  %v1821 = vadd.f32 %v1819, %v1820
  %v1822 = vrot.slane %v1752, 4
  %v1823 = vadd.f32 %v1752, %v1822
  %v1824 = vrot.slane %v1823, 2
  %v1825 = vadd.f32 %v1823, %v1824
  %v1826 = vrot.slane %v1825, 1
  %v1827 = vadd.f32 %v1825, %v1826
  %v1828 = vrot.slane %v1754, 4
  %v1829 = vadd.f32 %v1754, %v1828
  %v1830 = vrot.slane %v1829, 2
  %v1831 = vadd.f32 %v1829, %v1830
  %v1832 = vrot.slane %v1831, 1
  %v1833 = vadd.f32 %v1831, %v1832
  %v1834 = vrot.slane %v1756, 4
  %v1835 = vadd.f32 %v1756, %v1834
  %v1836 = vrot.slane %v1835, 2
  %v1837 = vadd.f32 %v1835, %v1836
  %v1838 = vrot.slane %v1837, 1
  %v1839 = vadd.f32 %v1837, %v1838
  %v1840 = vrot.slane %v1758, 4
  %v1841 = vadd.f32 %v1758, %v1840
  %v1842 = vrot.slane %v1841, 2
  %v1843 = vadd.f32 %v1841, %v1842
  %v1844 = vrot.slane %v1843, 1
  %v1845 = vadd.f32 %v1843, %v1844
  %v1846 = vrot.slane %v1760, 4
  %v1847 = vadd.f32 %v1760, %v1846
  %v1848 = vrot.slane %v1847, 2
  %v1849 = vadd.f32 %v1847, %v1848
  %v1850 = vrot.slane %v1849, 1
  %v1851 = vadd.f32 %v1849, %v1850
  %v1852 = vrot.slane %v1762, 4
  %v1853 = vadd.f32 %v1762, %v1852
  %v1854 = vrot.slane %v1853, 2
  %v1855 = vadd.f32 %v1853, %v1854
  %v1856 = vrot.slane %v1855, 1
  %v1857 = vadd.f32 %v1855, %v1856
  %v1858 = vrot.slane %v1764, 4
  %v1859 = vadd.f32 %v1764, %v1858
  %v1860 = vrot.slane %v1859, 2
  %v1861 = vadd.f32 %v1859, %v1860
  %v1862 = vrot.slane %v1861, 1
  %v1863 = vadd.f32 %v1861, %v1862
  %v1864 = vrcp.pop %v1773
  %v1865 = vrcp.pop %v1779
  %v1866 = vrcp.pop %v1785
  %v1867 = vrcp.pop %v1791
  %v1868 = vrcp.pop %v1797
  %v1869 = vrcp.pop %v1803
  %v1870 = vrcp.pop %v1809
  %v1871 = vrcp.pop %v1815
  %v1872 = vrcp.pop %v1821
  %v1873 = vrcp.pop %v1827
  %v1874 = vrcp.pop %v1833
  %v1875 = vrcp.pop %v1839
  %v1876 = vrcp.pop %v1845
  %v1877 = vrcp.pop %v1851
  %v1878 = vrcp.pop %v1857
  %v1879 = vrcp.pop %v1863
  %1880 = vadd.xlane.f32.xlu0 %v1736
  %v1881 = vpop.xlane.xlu0 %1880
  %1882 = vadd.xlane.f32.xlu0 %v1737
  %v1883 = vpop.xlane.xlu0 %1882
  %1884 = vadd.xlane.f32.xlu0 %v1739
  %v1885 = vpop.xlane.xlu0 %1884
  %1886 = vadd.xlane.f32.xlu0 %v1741
  %v1887 = vpop.xlane.xlu0 %1886
  %1888 = vadd.xlane.f32.xlu0 %v1743
  %v1889 = vpop.xlane.xlu0 %1888
  %1890 = vadd.xlane.f32.xlu0 %v1745
  %v1891 = vpop.xlane.xlu0 %1890
  %1892 = vadd.xlane.f32.xlu0 %v1747
  %v1893 = vpop.xlane.xlu0 %1892
  %1894 = vadd.xlane.f32.xlu0 %v1749
  %v1895 = vpop.xlane.xlu0 %1894
  %1896 = vadd.xlane.f32.xlu0 %v1751
  %v1897 = vpop.xlane.xlu0 %1896
  %1898 = vadd.xlane.f32.xlu0 %v1752
  %v1899 = vpop.xlane.xlu0 %1898
  %1900 = vadd.xlane.f32.xlu0 %v1754
  %v1901 = vpop.xlane.xlu0 %1900
  %1902 = vadd.xlane.f32.xlu0 %v1756
  %v1903 = vpop.xlane.xlu0 %1902
  %1904 = vadd.xlane.f32.xlu0 %v1758
  %v1905 = vpop.xlane.xlu0 %1904
  %1906 = vadd.xlane.f32.xlu0 %v1760
  %v1907 = vpop.xlane.xlu0 %1906
  %1908 = vadd.xlane.f32.xlu0 %v1762
  %v1909 = vpop.xlane.xlu0 %1908
  %1910 = vadd.xlane.f32.xlu0 %v1764
  %v1911 = vpop.xlane.xlu0 %1910
  %v1912 = vrcp.pop %v1881
  %v1913 = vrcp.pop %v1883
  %v1914 = vrcp.pop %v1885
  %v1915 = vrcp.pop %v1887
  %v1916 = vrcp.pop %v1889
  %v1917 = vrcp.pop %v1891
  %v1918 = vrcp.pop %v1893
  %v1919 = vrcp.pop %v1895
  %v1920 = vrcp.pop %v1897
  %v1921 = vrcp.pop %v1899
  %v1922 = vrcp.pop %v1901
  %v1923 = vrcp.pop %v1903
  %v1924 = vrcp.pop %v1905
  %v1925 = vrcp.pop %v1907
  %v1926 = vrcp.pop %v1909
  %v1927 = vrcp.pop %v1911
  %v1928 = vmul.f32 %v1766, 0.8
  %v1929 = vmul.f32 %v1767, 0.8
  %v1930 = vadd.f32 %v1864, %v1912
  %v1931 = vadd.f32 %v1865, %v1913
  %v1932 = vadd.f32 %v1866, %v1914
  %v1933 = vadd.f32 %v1867, %v1915
  %v1934 = vadd.f32 %v1868, %v1916
  %v1935 = vadd.f32 %v1869, %v1917
  %v1936 = vadd.f32 %v1870, %v1918
  %v1937 = vadd.f32 %v1871, %v1919
  %v1938 = vadd.f32 %v1872, %v1920
  %v1939 = vadd.f32 %v1873, %v1921
  %v1940 = vadd.f32 %v1874, %v1922
  %v1941 = vadd.f32 %v1875, %v1923
  %v1942 = vadd.f32 %v1876, %v1924
  %v1943 = vadd.f32 %v1877, %v1925
  %v1944 = vadd.f32 %v1878, %v1926
  %v1945 = vadd.f32 %v1879, %v1927
  %v1946 = vmul.f32 %v1930, 0.1
  %v1947 = vmul.f32 %v1931, 0.1
  %v1948 = vmul.f32 %v1932, 0.1
  %v1949 = vmul.f32 %v1933, 0.1
  %v1950 = vmul.f32 %v1934, 0.1
  %v1951 = vmul.f32 %v1935, 0.1
  %v1952 = vmul.f32 %v1936, 0.1
  %v1953 = vmul.f32 %v1937, 0.1
  %v1954 = vmul.f32 %v1938, 0.1
  %v1955 = vmul.f32 %v1939, 0.1
  %v1956 = vmul.f32 %v1940, 0.1
  %v1957 = vmul.f32 %v1941, 0.1
  %v1958 = vmul.f32 %v1942, 0.1
  %v1959 = vmul.f32 %v1943, 0.1
  %v1960 = vmul.f32 %v1944, 0.1
  %v1961 = vmul.f32 %v1945, 0.1
  %v1962 = vadd.f32 %v1928, %v1946
  %v1963 = vadd.f32 %v1928, %v1947
  %v1964 = vadd.f32 %v1928, %v1948
  %v1965 = vadd.f32 %v1928, %v1949
  %v1966 = vadd.f32 %v1928, %v1950
  %v1967 = vadd.f32 %v1928, %v1951
  %v1968 = vadd.f32 %v1928, %v1952
  %v1969 = vadd.f32 %v1928, %v1953
  %v1970 = vadd.f32 %v1929, %v1954
  %v1971 = vadd.f32 %v1929, %v1955
  %v1972 = vadd.f32 %v1929, %v1956
  %v1973 = vadd.f32 %v1929, %v1957
  %v1974 = vadd.f32 %v1929, %v1958
  %v1975 = vadd.f32 %v1929, %v1959
  %v1976 = vadd.f32 %v1929, %v1960
  %v1977 = vadd.f32 %v1929, %v1961
  %v1978 = vmul.f32 %v1705, %v1962
  %v1979 = vmul.f32 %v1707, %v1963
  %v1980 = vmul.f32 %v1709, %v1964
  %v1981 = vmul.f32 %v1711, %v1965
  %v1982 = vmul.f32 %v1713, %v1966
  %v1983 = vmul.f32 %v1715, %v1967
  %v1984 = vmul.f32 %v1717, %v1968
  %v1985 = vmul.f32 %v1719, %v1969
  %v1986 = vmul.f32 %v1721, %v1970
  %v1987 = vmul.f32 %v1723, %v1971
  %v1988 = vmul.f32 %v1725, %v1972
  %v1989 = vmul.f32 %v1727, %v1973
  %v1990 = vmul.f32 %v1729, %v1974
  %v1991 = vmul.f32 %v1731, %v1975
  %v1992 = vmul.f32 %v1733, %v1976
  %v1993 = vmul.f32 %v1735, %v1977
  %v1994 = vsel %vm1185, %v1978, 0.0
  %1995 = vadd.xlane.f32.xlu0 %v1994
  %v1996 = vpop.xlane.xlu0 %1995
  %v1997 = vsel %vm1185, %v1979, 0.0
  %1998 = vadd.xlane.f32.xlu0 %v1997
  %v1999 = vpop.xlane.xlu0 %1998
  %v2000 = vsel %vm1185, %v1980, 0.0
  %2001 = vadd.xlane.f32.xlu0 %v2000
  %v2002 = vpop.xlane.xlu0 %2001
  %v2003 = vsel %vm1185, %v1981, 0.0
  %2004 = vadd.xlane.f32.xlu0 %v2003
  %v2005 = vpop.xlane.xlu0 %2004
  %v2006 = vsel %vm1185, %v1982, 0.0
  %2007 = vadd.xlane.f32.xlu0 %v2006
  %v2008 = vpop.xlane.xlu0 %2007
  %v2009 = vsel %vm1185, %v1983, 0.0
  %2010 = vadd.xlane.f32.xlu0 %v2009
  %v2011 = vpop.xlane.xlu0 %2010
  %v2012 = vsel %vm1185, %v1984, 0.0
  %2013 = vadd.xlane.f32.xlu0 %v2012
  %v2014 = vpop.xlane.xlu0 %2013
  %v2015 = vsel %vm1185, %v1985, 0.0
  %2016 = vadd.xlane.f32.xlu0 %v2015
  %v2017 = vpop.xlane.xlu0 %2016
  %v2018 = vsel %vm1185, %v1986, 0.0
  %2019 = vadd.xlane.f32.xlu0 %v2018
  %v2020 = vpop.xlane.xlu0 %2019
  %v2021 = vsel %vm1185, %v1987, 0.0
  %2022 = vadd.xlane.f32.xlu0 %v2021
  %v2023 = vpop.xlane.xlu0 %2022
  %v2024 = vsel %vm1185, %v1988, 0.0
  %2025 = vadd.xlane.f32.xlu0 %v2024
  %v2026 = vpop.xlane.xlu0 %2025
  %v2027 = vsel %vm1185, %v1989, 0.0
  %2028 = vadd.xlane.f32.xlu0 %v2027
  %v2029 = vpop.xlane.xlu0 %2028
  %v2030 = vsel %vm1185, %v1990, 0.0
  %2031 = vadd.xlane.f32.xlu0 %v2030
  %v2032 = vpop.xlane.xlu0 %2031
  %v2033 = vsel %vm1185, %v1991, 0.0
  %2034 = vadd.xlane.f32.xlu0 %v2033
  %v2035 = vpop.xlane.xlu0 %2034
  %v2036 = vsel %vm1185, %v1992, 0.0
  %2037 = vadd.xlane.f32.xlu0 %v2036
  %v2038 = vpop.xlane.xlu0 %2037
  %v2039 = vsel %vm1185, %v1993, 0.0
  %2040 = vadd.xlane.f32.xlu0 %v2039
  %v2041 = vpop.xlane.xlu0 %2040
  %v2058 = vperm.slane %v1996, %v925
  %v2059 = vperm.slane %v1999, %v925
  %v2060 = vperm.slane %v2002, %v925
  %v2061 = vperm.slane %v2005, %v925
  %v2062 = vperm.slane %v2008, %v925
  %v2063 = vperm.slane %v2011, %v925
  %v2064 = vperm.slane %v2014, %v925
  %v2065 = vperm.slane %v2017, %v925
  %v2066 = vperm.slane %v2020, %v925
  %v2067 = vperm.slane %v2023, %v925
  %v2068 = vperm.slane %v2026, %v925
  %v2069 = vperm.slane %v2029, %v925
  %v2070 = vperm.slane %v2032, %v925
  %v2071 = vperm.slane %v2035, %v925
  %v2072 = vperm.slane %v2038, %v925
  %v2073 = vperm.slane %v2041, %v925
  %v2074 = vsel %vm976, %v2059, %v2058
  %v2075 = vsel %vm978, %v2060, %v2074
  %v2076 = vsel %vm980, %v2061, %v2075
  %v2077 = vsel %vm982, %v2062, %v2076
  %v2078 = vsel %vm984, %v2063, %v2077
  %v2079 = vsel %vm986, %v2064, %v2078
  %v2080 = vsel %vm988, %v2065, %v2079
  %v2081 = vsel %vm976, %v2067, %v2066
  %v2082 = vsel %vm978, %v2068, %v2081
  %v2083 = vsel %vm980, %v2069, %v2082
  %v2084 = vsel %vm982, %v2070, %v2083
  %v2085 = vsel %vm984, %v2071, %v2084
  %v2086 = vsel %vm986, %v2072, %v2085
  %v2087 = vsel %vm988, %v2073, %v2086
  %v2090 = vsel %vm1185, %v2080, 0.0
  %2091 = vadd.xlane.f32.xlu0 %v2090
  %v2092 = vpop.xlane.xlu0 %2091
  %v2093 = vsel %vm1185, %v2087, 0.0
  %2094 = vadd.xlane.f32.xlu0 %v2093
  %v2095 = vpop.xlane.xlu0 %2094
  %v2096 = vmul.f32 %v2092, 0.015625
  %v2097 = vmul.f32 %v2095, 0.015625
  %v2098 = vld [vmem:[%s4] sm:$0xff]
  %v2100 = vperm.slane %v2098, 0
  %v2101 = vlaneseq
  %v2102 = vshrl.u32 %v2101, 7
  %2104 = vset.pattern.permute.xlu0 %v2102
  %2105 = vperm.xlu0 %2104, %v2100
  %v2106 = vpop.permute.xlu0 %2105
  %v2107 = vperm.slane %v2098, 1
  %v2108 = vlaneseq
  %v2109 = vshrl.u32 %v2108, 7
  %2111 = vset.pattern.permute.xlu0 %v2109
  %2112 = vperm.xlu0 %2111, %v2107
  %v2113 = vpop.permute.xlu0 %2112
  %v2114 = vperm.slane %v2098, 2
  %v2115 = vlaneseq
  %v2116 = vshrl.u32 %v2115, 7
  %2118 = vset.pattern.permute.xlu0 %v2116
  %2119 = vperm.xlu0 %2118, %v2114
  %v2120 = vpop.permute.xlu0 %2119
  %v2121 = vperm.slane %v2098, 3
  %v2122 = vlaneseq
  %v2123 = vshrl.u32 %v2122, 7
  %2125 = vset.pattern.permute.xlu0 %v2123
  %2126 = vperm.xlu0 %2125, %v2121
  %v2127 = vpop.permute.xlu0 %2126
  %v2128 = vperm.slane %v2098, 4
  %v2129 = vlaneseq
  %v2130 = vshrl.u32 %v2129, 7
  %2132 = vset.pattern.permute.xlu0 %v2130
  %2133 = vperm.xlu0 %2132, %v2128
  %v2134 = vpop.permute.xlu0 %2133
  %v2135 = vperm.slane %v2098, 5
  %v2136 = vlaneseq
  %v2137 = vshrl.u32 %v2136, 7
  %2139 = vset.pattern.permute.xlu0 %v2137
  %2140 = vperm.xlu0 %2139, %v2135
  %v2141 = vpop.permute.xlu0 %2140
  %v2142 = vperm.slane %v2098, 6
  %v2143 = vlaneseq
  %v2144 = vshrl.u32 %v2143, 7
  %2146 = vset.pattern.permute.xlu0 %v2144
  %2147 = vperm.xlu0 %2146, %v2142
  %v2148 = vpop.permute.xlu0 %2147
  %v2149 = vperm.slane %v2098, 7
  %v2150 = vlaneseq
  %v2151 = vshrl.u32 %v2150, 7
  %2153 = vset.pattern.permute.xlu0 %v2151
  %2154 = vperm.xlu0 %2153, %v2149
  %v2155 = vpop.permute.xlu0 %2154
  %v2164 = vmul.f32 %v2096, %v2106
  %v2165 = vmul.f32 %v2096, %v2113
  %v2166 = vmul.f32 %v2096, %v2120
  %v2167 = vmul.f32 %v2096, %v2127
  %v2168 = vmul.f32 %v2096, %v2134
  %v2169 = vmul.f32 %v2096, %v2141
  %v2170 = vmul.f32 %v2096, %v2148
  %v2171 = vmul.f32 %v2096, %v2155
  %v2172 = vmul.f32 %v2097, %v2106
  %v2173 = vmul.f32 %v2097, %v2113
  %v2174 = vmul.f32 %v2097, %v2120
  %v2175 = vmul.f32 %v2097, %v2127
  %v2176 = vmul.f32 %v2097, %v2134
  %v2177 = vmul.f32 %v2097, %v2141
  %v2178 = vmul.f32 %v2097, %v2148
  %v2179 = vmul.f32 %v2097, %v2155
  %2196 = vset.pattern.permute.xlu0 0
  %2197 = vperm.xlu0 %2196, %v2164
  %v2198 = vpop.permute.xlu0 %2197
  %2199 = vset.pattern.permute.xlu0 0
  %2200 = vperm.xlu0 %2199, %v2165
  %v2201 = vpop.permute.xlu0 %2200
  %2202 = vset.pattern.permute.xlu0 0
  %2203 = vperm.xlu0 %2202, %v2166
  %v2204 = vpop.permute.xlu0 %2203
  %2205 = vset.pattern.permute.xlu0 0
  %2206 = vperm.xlu0 %2205, %v2167
  %v2207 = vpop.permute.xlu0 %2206
  %2208 = vset.pattern.permute.xlu0 0
  %2209 = vperm.xlu0 %2208, %v2168
  %v2210 = vpop.permute.xlu0 %2209
  %2211 = vset.pattern.permute.xlu0 0
  %2212 = vperm.xlu0 %2211, %v2169
  %v2213 = vpop.permute.xlu0 %2212
  %2214 = vset.pattern.permute.xlu0 0
  %2215 = vperm.xlu0 %2214, %v2170
  %v2216 = vpop.permute.xlu0 %2215
  %2217 = vset.pattern.permute.xlu0 0
  %2218 = vperm.xlu0 %2217, %v2171
  %v2219 = vpop.permute.xlu0 %2218
  %2220 = vset.pattern.permute.xlu0 0
  %2221 = vperm.xlu0 %2220, %v2172
  %v2222 = vpop.permute.xlu0 %2221
  %2223 = vset.pattern.permute.xlu0 0
  %2224 = vperm.xlu0 %2223, %v2173
  %v2225 = vpop.permute.xlu0 %2224
  %2226 = vset.pattern.permute.xlu0 0
  %2227 = vperm.xlu0 %2226, %v2174
  %v2228 = vpop.permute.xlu0 %2227
  %2229 = vset.pattern.permute.xlu0 0
  %2230 = vperm.xlu0 %2229, %v2175
  %v2231 = vpop.permute.xlu0 %2230
  %2232 = vset.pattern.permute.xlu0 0
  %2233 = vperm.xlu0 %2232, %v2176
  %v2234 = vpop.permute.xlu0 %2233
  %2235 = vset.pattern.permute.xlu0 0
  %2236 = vperm.xlu0 %2235, %v2177
  %v2237 = vpop.permute.xlu0 %2236
  %2238 = vset.pattern.permute.xlu0 0
  %2239 = vperm.xlu0 %2238, %v2178
  %v2240 = vpop.permute.xlu0 %2239
  %2241 = vset.pattern.permute.xlu0 0
  %2242 = vperm.xlu0 %2241, %v2179
  %v2243 = vpop.permute.xlu0 %2242
  %v2244 = vperm.slane %v2198, %v925
  %v2245 = vperm.slane %v2201, %v925
  %v2246 = vperm.slane %v2204, %v925
  %v2247 = vperm.slane %v2207, %v925
  %v2248 = vperm.slane %v2210, %v925
  %v2249 = vperm.slane %v2213, %v925
  %v2250 = vperm.slane %v2216, %v925
  %v2251 = vperm.slane %v2219, %v925
  %v2252 = vperm.slane %v2222, %v925
  %v2253 = vperm.slane %v2225, %v925
  %v2254 = vperm.slane %v2228, %v925
  %v2255 = vperm.slane %v2231, %v925
  %v2256 = vperm.slane %v2234, %v925
  %v2257 = vperm.slane %v2237, %v925
  %v2258 = vperm.slane %v2240, %v925
  %v2259 = vperm.slane %v2243, %v925
  %v2260 = vsel %vm976, %v2245, %v2244
  %v2261 = vsel %vm978, %v2246, %v2260
  %v2262 = vsel %vm980, %v2247, %v2261
  %v2263 = vsel %vm982, %v2248, %v2262
  %v2264 = vsel %vm984, %v2249, %v2263
  %v2265 = vsel %vm986, %v2250, %v2264
  %v2266 = vsel %vm988, %v2251, %v2265
  %v2267 = vsel %vm976, %v2253, %v2252
  %v2268 = vsel %vm978, %v2254, %v2267
  %v2269 = vsel %vm980, %v2255, %v2268
  %v2270 = vsel %vm982, %v2256, %v2269
  %v2271 = vsel %vm984, %v2257, %v2270
  %v2272 = vsel %vm986, %v2258, %v2271
  %v2273 = vsel %vm988, %v2259, %v2272
  %v2276 = vsel %vm1185, %v2266, 0.0
  %2277 = vadd.xlane.f32.xlu0 %v2276
  %v2278 = vpop.xlane.xlu0 %2277
  %v2279 = vsel %vm1185, %v2273, 0.0
  %2280 = vadd.xlane.f32.xlu0 %v2279
  %v2281 = vpop.xlane.xlu0 %2280
  %v2282 = vmax.f32 %v2278, 0.0
  %v2283 = vmax.f32 %v2281, 0.0
  %v2284 = vld [vmem:[%s5] sm:$0xff]
  %v2286 = vperm.slane %v2284, 0
  %v2287 = vlaneseq
  %v2288 = vshrl.u32 %v2287, 7
  %2290 = vset.pattern.permute.xlu0 %v2288
  %2291 = vperm.xlu0 %2290, %v2286
  %v2292 = vpop.permute.xlu0 %2291
  %v2293 = vperm.slane %v2284, 1
  %v2294 = vlaneseq
  %v2295 = vshrl.u32 %v2294, 7
  %2297 = vset.pattern.permute.xlu0 %v2295
  %2298 = vperm.xlu0 %2297, %v2293
  %v2299 = vpop.permute.xlu0 %2298
  %v2300 = vperm.slane %v2284, 2
  %v2301 = vlaneseq
  %v2302 = vshrl.u32 %v2301, 7
  %2304 = vset.pattern.permute.xlu0 %v2302
  %2305 = vperm.xlu0 %2304, %v2300
  %v2306 = vpop.permute.xlu0 %2305
  %v2307 = vperm.slane %v2284, 3
  %v2308 = vlaneseq
  %v2309 = vshrl.u32 %v2308, 7
  %2311 = vset.pattern.permute.xlu0 %v2309
  %2312 = vperm.xlu0 %2311, %v2307
  %v2313 = vpop.permute.xlu0 %2312
  %v2314 = vperm.slane %v2284, 4
  %v2315 = vlaneseq
  %v2316 = vshrl.u32 %v2315, 7
  %2318 = vset.pattern.permute.xlu0 %v2316
  %2319 = vperm.xlu0 %2318, %v2314
  %v2320 = vpop.permute.xlu0 %2319
  %v2321 = vperm.slane %v2284, 5
  %v2322 = vlaneseq
  %v2323 = vshrl.u32 %v2322, 7
  %2325 = vset.pattern.permute.xlu0 %v2323
  %2326 = vperm.xlu0 %2325, %v2321
  %v2327 = vpop.permute.xlu0 %2326
  %v2328 = vperm.slane %v2284, 6
  %v2329 = vlaneseq
  %v2330 = vshrl.u32 %v2329, 7
  %2332 = vset.pattern.permute.xlu0 %v2330
  %2333 = vperm.xlu0 %2332, %v2328
  %v2334 = vpop.permute.xlu0 %2333
  %v2335 = vperm.slane %v2284, 7
  %v2336 = vlaneseq
  %v2337 = vshrl.u32 %v2336, 7
  %2339 = vset.pattern.permute.xlu0 %v2337
  %2340 = vperm.xlu0 %2339, %v2335
  %v2341 = vpop.permute.xlu0 %2340
  %v2350 = vmul.f32 %v2282, %v2292
  %v2351 = vmul.f32 %v2282, %v2299
  %v2352 = vmul.f32 %v2282, %v2306
  %v2353 = vmul.f32 %v2282, %v2313
  %v2354 = vmul.f32 %v2282, %v2320
  %v2355 = vmul.f32 %v2282, %v2327
  %v2356 = vmul.f32 %v2282, %v2334
  %v2357 = vmul.f32 %v2282, %v2341
  %v2358 = vmul.f32 %v2283, %v2292
  %v2359 = vmul.f32 %v2283, %v2299
  %v2360 = vmul.f32 %v2283, %v2306
  %v2361 = vmul.f32 %v2283, %v2313
  %v2362 = vmul.f32 %v2283, %v2320
  %v2363 = vmul.f32 %v2283, %v2327
  %v2364 = vmul.f32 %v2283, %v2334
  %v2365 = vmul.f32 %v2283, %v2341
  %2382 = vset.pattern.permute.xlu0 0
  %2383 = vperm.xlu0 %2382, %v2350
  %v2384 = vpop.permute.xlu0 %2383
  %2385 = vset.pattern.permute.xlu0 0
  %2386 = vperm.xlu0 %2385, %v2351
  %v2387 = vpop.permute.xlu0 %2386
  %2388 = vset.pattern.permute.xlu0 0
  %2389 = vperm.xlu0 %2388, %v2352
  %v2390 = vpop.permute.xlu0 %2389
  %2391 = vset.pattern.permute.xlu0 0
  %2392 = vperm.xlu0 %2391, %v2353
  %v2393 = vpop.permute.xlu0 %2392
  %2394 = vset.pattern.permute.xlu0 0
  %2395 = vperm.xlu0 %2394, %v2354
  %v2396 = vpop.permute.xlu0 %2395
  %2397 = vset.pattern.permute.xlu0 0
  %2398 = vperm.xlu0 %2397, %v2355
  %v2399 = vpop.permute.xlu0 %2398
  %2400 = vset.pattern.permute.xlu0 0
  %2401 = vperm.xlu0 %2400, %v2356
  %v2402 = vpop.permute.xlu0 %2401
  %2403 = vset.pattern.permute.xlu0 0
  %2404 = vperm.xlu0 %2403, %v2357
  %v2405 = vpop.permute.xlu0 %2404
  %2406 = vset.pattern.permute.xlu0 0
  %2407 = vperm.xlu0 %2406, %v2358
  %v2408 = vpop.permute.xlu0 %2407
  %2409 = vset.pattern.permute.xlu0 0
  %2410 = vperm.xlu0 %2409, %v2359
  %v2411 = vpop.permute.xlu0 %2410
  %2412 = vset.pattern.permute.xlu0 0
  %2413 = vperm.xlu0 %2412, %v2360
  %v2414 = vpop.permute.xlu0 %2413
  %2415 = vset.pattern.permute.xlu0 0
  %2416 = vperm.xlu0 %2415, %v2361
  %v2417 = vpop.permute.xlu0 %2416
  %2418 = vset.pattern.permute.xlu0 0
  %2419 = vperm.xlu0 %2418, %v2362
  %v2420 = vpop.permute.xlu0 %2419
  %2421 = vset.pattern.permute.xlu0 0
  %2422 = vperm.xlu0 %2421, %v2363
  %v2423 = vpop.permute.xlu0 %2422
  %2424 = vset.pattern.permute.xlu0 0
  %2425 = vperm.xlu0 %2424, %v2364
  %v2426 = vpop.permute.xlu0 %2425
  %2427 = vset.pattern.permute.xlu0 0
  %2428 = vperm.xlu0 %2427, %v2365
  %v2429 = vpop.permute.xlu0 %2428
  %v2430 = vperm.slane %v2384, %v925
  %v2431 = vperm.slane %v2387, %v925
  %v2432 = vperm.slane %v2390, %v925
  %v2433 = vperm.slane %v2393, %v925
  %v2434 = vperm.slane %v2396, %v925
  %v2435 = vperm.slane %v2399, %v925
  %v2436 = vperm.slane %v2402, %v925
  %v2437 = vperm.slane %v2405, %v925
  %v2438 = vperm.slane %v2408, %v925
  %v2439 = vperm.slane %v2411, %v925
  %v2440 = vperm.slane %v2414, %v925
  %v2441 = vperm.slane %v2417, %v925
  %v2442 = vperm.slane %v2420, %v925
  %v2443 = vperm.slane %v2423, %v925
  %v2444 = vperm.slane %v2426, %v925
  %v2445 = vperm.slane %v2429, %v925
  %v2446 = vsel %vm976, %v2431, %v2430
  %v2447 = vsel %vm978, %v2432, %v2446
  %v2448 = vsel %vm980, %v2433, %v2447
  %v2449 = vsel %vm982, %v2434, %v2448
  %v2450 = vsel %vm984, %v2435, %v2449
  %v2451 = vsel %vm986, %v2436, %v2450
  %v2452 = vsel %vm988, %v2437, %v2451
  %v2453 = vsel %vm976, %v2439, %v2438
  %v2454 = vsel %vm978, %v2440, %v2453
  %v2455 = vsel %vm980, %v2441, %v2454
  %v2456 = vsel %vm982, %v2442, %v2455
  %v2457 = vsel %vm984, %v2443, %v2456
  %v2458 = vsel %vm986, %v2444, %v2457
  %v2459 = vsel %vm988, %v2445, %v2458
  %v2462 = vsel %vm1185, %v2452, 0.0
  %2463 = vadd.xlane.f32.xlu0 %v2462
  %v2464 = vpop.xlane.xlu0 %2463
  %v2465 = vsel %vm1185, %v2459, 0.0
  %2466 = vadd.xlane.f32.xlu0 %v2465
  %v2467 = vpop.xlane.xlu0 %2466
  %v2468 = vsub.f32 0.0, %v2464
  %v2469 = vsub.f32 0.0, %v2467
  %v2470 = vmul.f32 %v2468, 1.442695
  %v2471 = vpow.pop %v2470
  %v2472 = vmul.f32 %v2469, 1.442695
  %v2473 = vpow.pop %v2472
  %v2474 = vadd.f32 %v2471, 1.0
  %v2475 = vadd.f32 %v2473, 1.0
  %v2476 = vrcp.pop %v2474
  %v2477 = vmul.f32 %v2474, %v2476
  %v2478 = vsub.f32 1.0, %v2477
  %v2479 = vmul.f32 %v2476, %v2478
  %v2480 = vadd.f32 %v2476, %v2479
  %vm2481 = vweird.f32 %v2474
  %vm2482 = vweird.f32 %v2476
  %vm2483 = vmor %vm2481, %vm2482
  %v2484 = vsel %vm2483, %v2476, %v2480
  %v2485 = vand.u32 2147483647, %v2474
  %vm2486 = vcmp.eq.f32.partialorder %v2485, 8.507059e+37
  %v2487 = vand.u32 %v2474, 2147483648
  %v2488 = vor.u32 1.1754944e-38, %v2487
  %v2489 = vsel %vm2486, %v2488, %v2484
  %v2490 = vmul.f32 1.0, %v2489
  %v2491 = vrcp.pop %v2475
  %v2492 = vmul.f32 %v2475, %v2491
  %v2493 = vsub.f32 1.0, %v2492
  %v2494 = vmul.f32 %v2491, %v2493
  %v2495 = vadd.f32 %v2491, %v2494
  %vm2496 = vweird.f32 %v2475
  %vm2497 = vweird.f32 %v2491
  %vm2498 = vmor %vm2496, %vm2497
  %v2499 = vsel %vm2498, %v2491, %v2495
  %v2500 = vand.u32 2147483647, %v2475
  %vm2501 = vcmp.eq.f32.partialorder %v2500, 8.507059e+37
  %v2502 = vand.u32 %v2475, 2147483648
  %v2503 = vor.u32 1.1754944e-38, %v2502
  %v2504 = vsel %vm2501, %v2503, %v2499
  %v2505 = vmul.f32 1.0, %v2504
  %v2508 = vperm.slane %v2490, 0
  %v2509 = vperm.slane %v2490, 1
  %v2510 = vperm.slane %v2490, 2
  %v2511 = vperm.slane %v2490, 3
  %v2512 = vperm.slane %v2490, 4
  %v2513 = vperm.slane %v2490, 5
  %v2514 = vperm.slane %v2490, 6
  %v2515 = vperm.slane %v2490, 7
  %v2516 = vperm.slane %v2505, 0
  %v2517 = vperm.slane %v2505, 1
  %v2518 = vperm.slane %v2505, 2
  %v2519 = vperm.slane %v2505, 3
  %v2520 = vperm.slane %v2505, 4
  %v2521 = vperm.slane %v2505, 5
  %v2522 = vperm.slane %v2505, 6
  %v2523 = vperm.slane %v2505, 7
  %v2540 = vmul.f32 %v1978, %v2508
  %v2541 = vmul.f32 %v1979, %v2509
  %v2542 = vmul.f32 %v1980, %v2510
  %v2543 = vmul.f32 %v1981, %v2511
  %v2544 = vmul.f32 %v1982, %v2512
  %v2545 = vmul.f32 %v1983, %v2513
  %v2546 = vmul.f32 %v1984, %v2514
  %v2547 = vmul.f32 %v1985, %v2515
  %v2548 = vmul.f32 %v1986, %v2516
  %v2549 = vmul.f32 %v1987, %v2517
  %v2550 = vmul.f32 %v1988, %v2518
  %v2551 = vmul.f32 %v1989, %v2519
  %v2552 = vmul.f32 %v1990, %v2520
  %v2553 = vmul.f32 %v1991, %v2521
  %v2554 = vmul.f32 %v1992, %v2522
  %v2555 = vmul.f32 %v1993, %v2523
  %2556 = vst.msk [vmem:[%s7] sm:$0xff] %vm1185, %v2540
  %2557 = vst.msk [vmem:[%s7 + $0x8] sm:$0xff] %vm1185, %v2541
  %2558 = vst.msk [vmem:[%s7 + $0x10] sm:$0xff] %vm1185, %v2542
  %2559 = vst.msk [vmem:[%s7 + $0x18] sm:$0xff] %vm1185, %v2543
  %2560 = vst.msk [vmem:[%s7 + $0x20] sm:$0xff] %vm1185, %v2544
  %2561 = vst.msk [vmem:[%s7 + $0x28] sm:$0xff] %vm1185, %v2545
  %2562 = vst.msk [vmem:[%s7 + $0x30] sm:$0xff] %vm1185, %v2546
  %2563 = vst.msk [vmem:[%s7 + $0x38] sm:$0xff] %vm1185, %v2547
  %2564 = vst.msk [vmem:[%s7 + $0x40] sm:$0xff] %vm1185, %v2548
  %2565 = vst.msk [vmem:[%s7 + $0x48] sm:$0xff] %vm1185, %v2549
  %2566 = vst.msk [vmem:[%s7 + $0x50] sm:$0xff] %vm1185, %v2550
  %2567 = vst.msk [vmem:[%s7 + $0x58] sm:$0xff] %vm1185, %v2551
  %2568 = vst.msk [vmem:[%s7 + $0x60] sm:$0xff] %vm1185, %v2552
  %2569 = vst.msk [vmem:[%s7 + $0x68] sm:$0xff] %vm1185, %v2553
  %2570 = vst.msk [vmem:[%s7 + $0x70] sm:$0xff] %vm1185, %v2554
  %2571 = vst.msk [vmem:[%s7 + $0x78] sm:$0xff] %vm1185, %v2555
  // Predicated region
  $region26: #{competitive_block_forward.6} parent=0 // pred_check
    _
  $region27: #{competitive_block_forward.6} parent=0 // pred_check_branch
    %2573 = sbr.rel (0) target = $region29
  $region28: #{competitive_block_forward.6} parent=0 // pred_region
    _
  $region29: #{competitive_block_forward.6} parent=0 // pred_fallthru
    _
  // Predicated region
  $region30: #{competitive_block_forward.6} parent=0 // pred_check
    _
  $region31: #{competitive_block_forward.6} parent=0 // pred_check_branch
    %2575 = sbr.rel (0) target = $region33
  $region32: #{competitive_block_forward.6} parent=0 // pred_region
    _
  $region33: #{competitive_block_forward.6} parent=0 // pred_fallthru
    _
  // Predicated region
  $region34: #{competitive_block_forward.6} parent=0 // pred_check
    _
  $region35: #{competitive_block_forward.6} parent=0 // pred_check_branch
    %2577 = sbr.rel (0) target = $region37
  $region36: #{competitive_block_forward.6} parent=0 // pred_region
    _
  $region37: #{competitive_block_forward.6} parent=0 // pred_fallthru
    _
  // Predicated region
  $region38: #{competitive_block_forward.6} parent=0 // pred_check
    _
  $region39: #{competitive_block_forward.6} parent=0 // pred_check_branch
    %2579 = sbr.rel (0) target = $region41
  $region40: #{competitive_block_forward.6} parent=0 // pred_region
    _
  $region41: #{competitive_block_forward.6} parent=0 // pred_fallthru
    _

// kernel: competitive_block_forward.7
$region0: #{competitive_block_forward.7}
  #allocation0 [shape = 'u32[]', space=smem, size = 0x4, offset = 0x4, fixed_abs, tag = 'smem constant byte address 0x4 - core index']
  #allocation1 [shape = 'u32[72,128]{1,0:T(1,128)}', space=vmem, size = 0x9000, scoped, tag = 'internal scratch']
  %s0 = inlined_call_operand.vmem [shape: f32[4,200,18], index: 0, kind: input, shape index: {}]
  %s1 = inlined_call_operand.vmem [shape: f32[16,200], index: 1, kind: input, shape index: {}]
  %s2 = inlined_call_operand.vmem [shape: f32[16,1], index: 2, kind: input, shape index: {}]
  %s3 = inlined_call_operand.vmem [shape: f32[4,200,2], index: 3, kind: input, shape index: {}]
  %s4 = inlined_call_operand.vmem [shape: f32[16,200], index: 4, kind: input, shape index: {}]
  %s5 = inlined_call_operand.vmem [shape: f32[16,1], index: 5, kind: input, shape index: {}]
  %s6 = inlined_call_operand.vmem [shape: f32[16,18], index: 6, kind: output, shape index: {0}]
  %s7 = inlined_call_operand.vmem [shape: f32[16,2], index: 7, kind: output, shape index: {1}]
  %8 = xla_tuple %s6, %s7
  %s9 = sld [smem:[#allocation0]]
  $region42: #{competitive_block_forward.7} parent=0
    _
  %s11 = ssub.s32 1, %s9
  %s12 = scalar_select 0, %s11, %s9
  // Predicated region
  $region2: #{competitive_block_forward.7} parent=0 // pred_check
    _
  $region3: #{competitive_block_forward.7} parent=0 // pred_check_branch
    %14 = sbr.rel (0) target = $region5
  $region4: #{competitive_block_forward.7} parent=0 // pred_region
    _
  $region5: #{competitive_block_forward.7} parent=0 // pred_fallthru
    _
  // Predicated region
  $region6: #{competitive_block_forward.7} parent=0 // pred_check
    _
  $region7: #{competitive_block_forward.7} parent=0 // pred_check_branch
    %16 = sbr.rel (0) target = $region9
  $region8: #{competitive_block_forward.7} parent=0 // pred_region
    _
  $region9: #{competitive_block_forward.7} parent=0 // pred_fallthru
    _
  // Predicated region
  $region10: #{competitive_block_forward.7} parent=0 // pred_check
    _
  $region11: #{competitive_block_forward.7} parent=0 // pred_check_branch
    %18 = sbr.rel (0) target = $region13
  $region12: #{competitive_block_forward.7} parent=0 // pred_region
    _
  $region13: #{competitive_block_forward.7} parent=0 // pred_fallthru
    _
  // Predicated region
  $region14: #{competitive_block_forward.7} parent=0 // pred_check
    _
  $region15: #{competitive_block_forward.7} parent=0 // pred_check_branch
    %20 = sbr.rel (0) target = $region17
  $region16: #{competitive_block_forward.7} parent=0 // pred_region
    _
  $region17: #{competitive_block_forward.7} parent=0 // pred_fallthru
    _
  // Predicated region
  $region18: #{competitive_block_forward.7} parent=0 // pred_check
    _
  $region19: #{competitive_block_forward.7} parent=0 // pred_check_branch
    %22 = sbr.rel (0) target = $region21
  $region20: #{competitive_block_forward.7} parent=0 // pred_region
    _
  $region21: #{competitive_block_forward.7} parent=0 // pred_fallthru
    _
  // Predicated region
  $region22: #{competitive_block_forward.7} parent=0 // pred_check
    _
  $region23: #{competitive_block_forward.7} parent=0 // pred_check_branch
    %24 = sbr.rel (0) target = $region25
  $region24: #{competitive_block_forward.7} parent=0 // pred_region
    _
  $region25: #{competitive_block_forward.7} parent=0 // pred_fallthru
    _
  %v25 = vld [vmem:[%s1] sm:$0xff]
  %v26 = vld [vmem:[%s1 + $0x8] sm:$0xff]
  %v27 = vld [vmem:[%s1 + $0x10] sm:$0xff]
  %v28 = vld [vmem:[%s1 + $0x18] sm:$0xff]
  %v29 = vld [vmem:[%s0] sm:$0xff]
  %v30 = vld [vmem:[%s0 + $0x8] sm:$0xff]
  %v31 = vld [vmem:[%s0 + $0x10] sm:$0xff]
  %v32 = vld [vmem:[%s0 + $0x18] sm:$0xff]
  %v33 = vld [vmem:[%s0 + $0x20] sm:$0xff]
  %v34 = vld [vmem:[%s0 + $0x28] sm:$0xff]
  %v35 = vld [vmem:[%s0 + $0x30] sm:$0xff]
  %v36 = vld [vmem:[%s0 + $0x38] sm:$0xff]
  %v37 = vld [vmem:[%s0 + $0x40] sm:$0xff]
  %v38 = vld [vmem:[%s0 + $0x48] sm:$0xff]
  %v39 = vld [vmem:[%s0 + $0x50] sm:$0xff]
  %v40 = vld [vmem:[%s0 + $0x58] sm:$0xff]
  %v41 = vld [vmem:[%s0 + $0x60] sm:$0xff]
  %v42 = vld [vmem:[%s0 + $0x68] sm:$0xff]
  %v43 = vld [vmem:[%s0 + $0x70] sm:$0xff]
  %v44 = vld [vmem:[%s0 + $0x78] sm:$0xff]
  %v45 = vld [vmem:[%s0 + $0x80] sm:$0xff]
  %v46 = vld [vmem:[%s0 + $0x88] sm:$0xff]
  %v47 = vld [vmem:[%s0 + $0x90] sm:$0xff]
  %v48 = vld [vmem:[%s0 + $0x98] sm:$0xff]
  %v49 = vld [vmem:[%s0 + $0xa0] sm:$0xff]
  %v50 = vld [vmem:[%s0 + $0xa8] sm:$0xff]
  %v51 = vld [vmem:[%s0 + $0xb0] sm:$0xff]
  %v52 = vld [vmem:[%s0 + $0xb8] sm:$0xff]
  %v53 = vld [vmem:[%s0 + $0xc0] sm:$0xff]
  %vm54 = vcmask 588800
  %v56 = vsel %vm54, %v26, 0
  %v59 = vsel %vm54, %v28, 0
  %61 = vmatpush.msra.mxu0 %v44
  %62 = vmatpush.msra.mxu0 %v43
  %63 = vmatpush.msra.mxu0 %v42
  %64 = vmatpush.msra.mxu0 %v41
  %65 = vmatpush.msra.mxu0 %v40
  %66 = vmatpush.msra.mxu0 %v39
  %67 = vmatpush.msra.mxu0 %v38
  %68 = vmatpush.msra.mxu0 %v37
  %69 = vmatpush.msra.mxu0 %v36
  %70 = vmatpush.msra.mxu0 %v35
  %71 = vmatpush.msra.mxu0 %v34
  %72 = vmatpush.msra.mxu0 %v33
  %73 = vmatpush.msra.mxu0 %v32
  %74 = vmatpush.msra.mxu0 %v31
  %75 = vmatpush.msra.mxu0 %v30
  %76 = vmatpush.msra.mxu0 %v29
  %77 = vmatmul.f32.gmra.mxu0 %v25
  %v78 = vpop.f32.mrf.mxu0
  %v79 = vadd.f32 0.0, %v78
  %80 = vmatmul.f32.gmra.mxu0 %v27
  %v81 = vpop.f32.mrf.mxu0
  %v82 = vadd.f32 0.0, %v81
  %83 = vdwg.mxu0
  %84 = vmatpush.msra.mxu0 0.0
  %85 = vmatpush.msra.mxu0 0.0
  %86 = vmatpush.msra.mxu0 0.0
  %87 = vmatpush.msra.mxu0 0.0
  %88 = vmatpush.msra.mxu0 0.0
  %89 = vmatpush.msra.mxu0 0.0
  %90 = vmatpush.msra.mxu0 0.0
  %91 = vmatpush.msra.mxu0 %v53
  %92 = vmatpush.msra.mxu0 %v52
  %93 = vmatpush.msra.mxu0 %v51
  %94 = vmatpush.msra.mxu0 %v50
  %95 = vmatpush.msra.mxu0 %v49
  %96 = vmatpush.msra.mxu0 %v48
  %97 = vmatpush.msra.mxu0 %v47
  %98 = vmatpush.msra.mxu0 %v46
  %99 = vmatpush.msra.mxu0 %v45
  %100 = vmatmul.f32.gmra.mxu0 %v56
  %v101 = vpop.f32.mrf.mxu0
  %v102 = vadd.f32 %v79, %v101
  %103 = vmatmul.f32.gmra.mxu0 %v59
  %v104 = vpop.f32.mrf.mxu0
  %v105 = vadd.f32 %v82, %v104
  %106 = vdwg.mxu0
  %s107 = scalar_lea.vmem %s0, 200
  %v108 = vld [vmem:[%s107] sm:$0xff]
  %v109 = vld [vmem:[%s107 + $0x8] sm:$0xff]
  %v110 = vld [vmem:[%s107 + $0x10] sm:$0xff]
  %v111 = vld [vmem:[%s107 + $0x18] sm:$0xff]
  %v112 = vld [vmem:[%s107 + $0x20] sm:$0xff]
  %v113 = vld [vmem:[%s107 + $0x28] sm:$0xff]
  %v114 = vld [vmem:[%s107 + $0x30] sm:$0xff]
  %v115 = vld [vmem:[%s107 + $0x38] sm:$0xff]
  %v116 = vld [vmem:[%s107 + $0x40] sm:$0xff]
  %v117 = vld [vmem:[%s107 + $0x48] sm:$0xff]
  %v118 = vld [vmem:[%s107 + $0x50] sm:$0xff]
  %v119 = vld [vmem:[%s107 + $0x58] sm:$0xff]
  %v120 = vld [vmem:[%s107 + $0x60] sm:$0xff]
  %v121 = vld [vmem:[%s107 + $0x68] sm:$0xff]
  %v122 = vld [vmem:[%s107 + $0x70] sm:$0xff]
  %v123 = vld [vmem:[%s107 + $0x78] sm:$0xff]
  %v124 = vld [vmem:[%s107 + $0x80] sm:$0xff]
  %v125 = vld [vmem:[%s107 + $0x88] sm:$0xff]
  %v126 = vld [vmem:[%s107 + $0x90] sm:$0xff]
  %v127 = vld [vmem:[%s107 + $0x98] sm:$0xff]
  %v128 = vld [vmem:[%s107 + $0xa0] sm:$0xff]
  %v129 = vld [vmem:[%s107 + $0xa8] sm:$0xff]
  %v130 = vld [vmem:[%s107 + $0xb0] sm:$0xff]
  %v131 = vld [vmem:[%s107 + $0xb8] sm:$0xff]
  %v132 = vld [vmem:[%s107 + $0xc0] sm:$0xff]
  %133 = vmatpush.msra.mxu0 %v123
  %134 = vmatpush.msra.mxu0 %v122
  %135 = vmatpush.msra.mxu0 %v121
  %136 = vmatpush.msra.mxu0 %v120
  %137 = vmatpush.msra.mxu0 %v119
  %138 = vmatpush.msra.mxu0 %v118
  %139 = vmatpush.msra.mxu0 %v117
  %140 = vmatpush.msra.mxu0 %v116
  %141 = vmatpush.msra.mxu0 %v115
  %142 = vmatpush.msra.mxu0 %v114
  %143 = vmatpush.msra.mxu0 %v113
  %144 = vmatpush.msra.mxu0 %v112
  %145 = vmatpush.msra.mxu0 %v111
  %146 = vmatpush.msra.mxu0 %v110
  %147 = vmatpush.msra.mxu0 %v109
  %148 = vmatpush.msra.mxu0 %v108
  %149 = vmatmul.f32.gmra.mxu0 %v25
  %v150 = vpop.f32.mrf.mxu0
  %v151 = vadd.f32 0.0, %v150
  %152 = vmatmul.f32.gmra.mxu0 %v27
  %v153 = vpop.f32.mrf.mxu0
  %v154 = vadd.f32 0.0, %v153
  %155 = vdwg.mxu0
  %156 = vmatpush.msra.mxu0 0.0
  %157 = vmatpush.msra.mxu0 0.0
  %158 = vmatpush.msra.mxu0 0.0
  %159 = vmatpush.msra.mxu0 0.0
  %160 = vmatpush.msra.mxu0 0.0
  %161 = vmatpush.msra.mxu0 0.0
  %162 = vmatpush.msra.mxu0 0.0
  %163 = vmatpush.msra.mxu0 %v132
  %164 = vmatpush.msra.mxu0 %v131
  %165 = vmatpush.msra.mxu0 %v130
  %166 = vmatpush.msra.mxu0 %v129
  %167 = vmatpush.msra.mxu0 %v128
  %168 = vmatpush.msra.mxu0 %v127
  %169 = vmatpush.msra.mxu0 %v126
  %170 = vmatpush.msra.mxu0 %v125
  %171 = vmatpush.msra.mxu0 %v124
  %172 = vmatmul.f32.gmra.mxu0 %v56
  %v173 = vpop.f32.mrf.mxu0
  %v174 = vadd.f32 %v151, %v173
  %175 = vmatmul.f32.gmra.mxu0 %v59
  %v176 = vpop.f32.mrf.mxu0
  %v177 = vadd.f32 %v154, %v176
  %178 = vdwg.mxu0
  %s179 = scalar_lea.vmem %s0, 400
  %v180 = vld [vmem:[%s179] sm:$0xff]
  %v181 = vld [vmem:[%s179 + $0x8] sm:$0xff]
  %v182 = vld [vmem:[%s179 + $0x10] sm:$0xff]
  %v183 = vld [vmem:[%s179 + $0x18] sm:$0xff]
  %v184 = vld [vmem:[%s179 + $0x20] sm:$0xff]
  %v185 = vld [vmem:[%s179 + $0x28] sm:$0xff]
  %v186 = vld [vmem:[%s179 + $0x30] sm:$0xff]
  %v187 = vld [vmem:[%s179 + $0x38] sm:$0xff]
  %v188 = vld [vmem:[%s179 + $0x40] sm:$0xff]
  %v189 = vld [vmem:[%s179 + $0x48] sm:$0xff]
  %v190 = vld [vmem:[%s179 + $0x50] sm:$0xff]
  %v191 = vld [vmem:[%s179 + $0x58] sm:$0xff]
  %v192 = vld [vmem:[%s179 + $0x60] sm:$0xff]
  %v193 = vld [vmem:[%s179 + $0x68] sm:$0xff]
  %v194 = vld [vmem:[%s179 + $0x70] sm:$0xff]
  %v195 = vld [vmem:[%s179 + $0x78] sm:$0xff]
  %v196 = vld [vmem:[%s179 + $0x80] sm:$0xff]
  %v197 = vld [vmem:[%s179 + $0x88] sm:$0xff]
  %v198 = vld [vmem:[%s179 + $0x90] sm:$0xff]
  %v199 = vld [vmem:[%s179 + $0x98] sm:$0xff]
  %v200 = vld [vmem:[%s179 + $0xa0] sm:$0xff]
  %v201 = vld [vmem:[%s179 + $0xa8] sm:$0xff]
  %v202 = vld [vmem:[%s179 + $0xb0] sm:$0xff]
  %v203 = vld [vmem:[%s179 + $0xb8] sm:$0xff]
  %v204 = vld [vmem:[%s179 + $0xc0] sm:$0xff]
  %205 = vmatpush.msra.mxu0 %v195
  %206 = vmatpush.msra.mxu0 %v194
  %207 = vmatpush.msra.mxu0 %v193
  %208 = vmatpush.msra.mxu0 %v192
  %209 = vmatpush.msra.mxu0 %v191
  %210 = vmatpush.msra.mxu0 %v190
  %211 = vmatpush.msra.mxu0 %v189
  %212 = vmatpush.msra.mxu0 %v188
  %213 = vmatpush.msra.mxu0 %v187
  %214 = vmatpush.msra.mxu0 %v186
  %215 = vmatpush.msra.mxu0 %v185
  %216 = vmatpush.msra.mxu0 %v184
  %217 = vmatpush.msra.mxu0 %v183
  %218 = vmatpush.msra.mxu0 %v182
  %219 = vmatpush.msra.mxu0 %v181
  %220 = vmatpush.msra.mxu0 %v180
  %221 = vmatmul.f32.gmra.mxu0 %v25
  %v222 = vpop.f32.mrf.mxu0
  %v223 = vadd.f32 0.0, %v222
  %224 = vmatmul.f32.gmra.mxu0 %v27
  %v225 = vpop.f32.mrf.mxu0
  %v226 = vadd.f32 0.0, %v225
  %227 = vdwg.mxu0
  %228 = vmatpush.msra.mxu0 0.0
  %229 = vmatpush.msra.mxu0 0.0
  %230 = vmatpush.msra.mxu0 0.0
  %231 = vmatpush.msra.mxu0 0.0
  %232 = vmatpush.msra.mxu0 0.0
  %233 = vmatpush.msra.mxu0 0.0
  %234 = vmatpush.msra.mxu0 0.0
  %235 = vmatpush.msra.mxu0 %v204
  %236 = vmatpush.msra.mxu0 %v203
  %237 = vmatpush.msra.mxu0 %v202
  %238 = vmatpush.msra.mxu0 %v201
  %239 = vmatpush.msra.mxu0 %v200
  %240 = vmatpush.msra.mxu0 %v199
  %241 = vmatpush.msra.mxu0 %v198
  %242 = vmatpush.msra.mxu0 %v197
  %243 = vmatpush.msra.mxu0 %v196
  %244 = vmatmul.f32.gmra.mxu0 %v56
  %v245 = vpop.f32.mrf.mxu0
  %v246 = vadd.f32 %v223, %v245
  %247 = vmatmul.f32.gmra.mxu0 %v59
  %v248 = vpop.f32.mrf.mxu0
  %v249 = vadd.f32 %v226, %v248
  %250 = vdwg.mxu0
  %s251 = scalar_lea.vmem %s0, 600
  %v252 = vld [vmem:[%s251] sm:$0xff]
  %v253 = vld [vmem:[%s251 + $0x8] sm:$0xff]
  %v254 = vld [vmem:[%s251 + $0x10] sm:$0xff]
  %v255 = vld [vmem:[%s251 + $0x18] sm:$0xff]
  %v256 = vld [vmem:[%s251 + $0x20] sm:$0xff]
  %v257 = vld [vmem:[%s251 + $0x28] sm:$0xff]
  %v258 = vld [vmem:[%s251 + $0x30] sm:$0xff]
  %v259 = vld [vmem:[%s251 + $0x38] sm:$0xff]
  %v260 = vld [vmem:[%s251 + $0x40] sm:$0xff]
  %v261 = vld [vmem:[%s251 + $0x48] sm:$0xff]
  %v262 = vld [vmem:[%s251 + $0x50] sm:$0xff]
  %v263 = vld [vmem:[%s251 + $0x58] sm:$0xff]
  %v264 = vld [vmem:[%s251 + $0x60] sm:$0xff]
  %v265 = vld [vmem:[%s251 + $0x68] sm:$0xff]
  %v266 = vld [vmem:[%s251 + $0x70] sm:$0xff]
  %v267 = vld [vmem:[%s251 + $0x78] sm:$0xff]
  %v268 = vld [vmem:[%s251 + $0x80] sm:$0xff]
  %v269 = vld [vmem:[%s251 + $0x88] sm:$0xff]
  %v270 = vld [vmem:[%s251 + $0x90] sm:$0xff]
  %v271 = vld [vmem:[%s251 + $0x98] sm:$0xff]
  %v272 = vld [vmem:[%s251 + $0xa0] sm:$0xff]
  %v273 = vld [vmem:[%s251 + $0xa8] sm:$0xff]
  %v274 = vld [vmem:[%s251 + $0xb0] sm:$0xff]
  %v275 = vld [vmem:[%s251 + $0xb8] sm:$0xff]
  %v276 = vld [vmem:[%s251 + $0xc0] sm:$0xff]
  %277 = vmatpush.msra.mxu0 %v267
  %278 = vmatpush.msra.mxu0 %v266
  %279 = vmatpush.msra.mxu0 %v265
  %280 = vmatpush.msra.mxu0 %v264
  %281 = vmatpush.msra.mxu0 %v263
  %282 = vmatpush.msra.mxu0 %v262
  %283 = vmatpush.msra.mxu0 %v261
  %284 = vmatpush.msra.mxu0 %v260
  %285 = vmatpush.msra.mxu0 %v259
  %286 = vmatpush.msra.mxu0 %v258
  %287 = vmatpush.msra.mxu0 %v257
  %288 = vmatpush.msra.mxu0 %v256
  %289 = vmatpush.msra.mxu0 %v255
  %290 = vmatpush.msra.mxu0 %v254
  %291 = vmatpush.msra.mxu0 %v253
  %292 = vmatpush.msra.mxu0 %v252
  %293 = vmatmul.f32.gmra.mxu0 %v25
  %v294 = vpop.f32.mrf.mxu0
  %v295 = vadd.f32 0.0, %v294
  %296 = vmatmul.f32.gmra.mxu0 %v27
  %v297 = vpop.f32.mrf.mxu0
  %v298 = vadd.f32 0.0, %v297
  %299 = vdwg.mxu0
  %300 = vmatpush.msra.mxu0 0.0
  %301 = vmatpush.msra.mxu0 0.0
  %302 = vmatpush.msra.mxu0 0.0
  %303 = vmatpush.msra.mxu0 0.0
  %304 = vmatpush.msra.mxu0 0.0
  %305 = vmatpush.msra.mxu0 0.0
  %306 = vmatpush.msra.mxu0 0.0
  %307 = vmatpush.msra.mxu0 %v276
  %308 = vmatpush.msra.mxu0 %v275
  %309 = vmatpush.msra.mxu0 %v274
  %310 = vmatpush.msra.mxu0 %v273
  %311 = vmatpush.msra.mxu0 %v272
  %312 = vmatpush.msra.mxu0 %v271
  %313 = vmatpush.msra.mxu0 %v270
  %314 = vmatpush.msra.mxu0 %v269
  %315 = vmatpush.msra.mxu0 %v268
  %316 = vmatmul.f32.gmra.mxu0 %v56
  %v317 = vpop.f32.mrf.mxu0
  %v318 = vadd.f32 %v295, %v317
  %319 = vmatmul.f32.gmra.mxu0 %v59
  %v320 = vpop.f32.mrf.mxu0
  %v321 = vadd.f32 %v298, %v320
  %322 = vdwg.mxu0
  %v323 = vmax.f32 %v102, %v174
  %v324 = vmax.f32 %v105, %v177
  %v325 = vmax.f32 %v246, %v318
  %v326 = vmax.f32 %v249, %v321
  %v327 = vmax.f32 %v323, %v325
  %v328 = vmax.f32 %v324, %v326
  %v329 = vld [vmem:[%s2] sm:$0xff]
  %v330 = vld [vmem:[%s2 + $0x8] sm:$0xff]
  %332 = vset.pattern.permute.xlu0 0
  %333 = vperm.xlu0 %332, %v329
  %v334 = vpop.permute.xlu0 %333
  %337 = vset.pattern.permute.xlu0 0
  %338 = vperm.xlu0 %337, %v330
  %v339 = vpop.permute.xlu0 %338
  %v341 = vadd.f32 %v327, %v334
  %v342 = vadd.f32 %v328, %v339
  %vm343 = vcmask 146432
  %344 = vst.msk [vmem:[%s6] sm:$0xff] %vm343, %v341
  %345 = vst.msk [vmem:[%s6 + $0x8] sm:$0xff] %vm343, %v342
  %v346 = vld [vmem:[%s4] sm:$0xff]
  %v347 = vld [vmem:[%s4 + $0x8] sm:$0xff]
  %v348 = vld [vmem:[%s4 + $0x10] sm:$0xff]
  %v349 = vld [vmem:[%s4 + $0x18] sm:$0xff]
  %v350 = vld [vmem:[%s3] sm:$0xff]
  %v351 = vld [vmem:[%s3 + $0x8] sm:$0xff]
  %v352 = vld [vmem:[%s3 + $0x10] sm:$0xff]
  %v353 = vld [vmem:[%s3 + $0x18] sm:$0xff]
  %v354 = vld [vmem:[%s3 + $0x20] sm:$0xff]
  %v355 = vld [vmem:[%s3 + $0x28] sm:$0xff]
  %v356 = vld [vmem:[%s3 + $0x30] sm:$0xff]
  %v357 = vld [vmem:[%s3 + $0x38] sm:$0xff]
  %v358 = vld [vmem:[%s3 + $0x40] sm:$0xff]
  %v359 = vld [vmem:[%s3 + $0x48] sm:$0xff]
  %v360 = vld [vmem:[%s3 + $0x50] sm:$0xff]
  %v361 = vld [vmem:[%s3 + $0x58] sm:$0xff]
  %v362 = vld [vmem:[%s3 + $0x60] sm:$0xff]
  %v363 = vld [vmem:[%s3 + $0x68] sm:$0xff]
  %v364 = vld [vmem:[%s3 + $0x70] sm:$0xff]
  %v365 = vld [vmem:[%s3 + $0x78] sm:$0xff]
  %v366 = vld [vmem:[%s3 + $0x80] sm:$0xff]
  %v367 = vld [vmem:[%s3 + $0x88] sm:$0xff]
  %v368 = vld [vmem:[%s3 + $0x90] sm:$0xff]
  %v369 = vld [vmem:[%s3 + $0x98] sm:$0xff]
  %v370 = vld [vmem:[%s3 + $0xa0] sm:$0xff]
  %v371 = vld [vmem:[%s3 + $0xa8] sm:$0xff]
  %v372 = vld [vmem:[%s3 + $0xb0] sm:$0xff]
  %v373 = vld [vmem:[%s3 + $0xb8] sm:$0xff]
  %v374 = vld [vmem:[%s3 + $0xc0] sm:$0xff]
  %v376 = vsel %vm54, %v347, 0
  %v379 = vsel %vm54, %v349, 0
  %381 = vmatpush.msra.mxu0 %v365
  %382 = vmatpush.msra.mxu0 %v364
  %383 = vmatpush.msra.mxu0 %v363
  %384 = vmatpush.msra.mxu0 %v362
  %385 = vmatpush.msra.mxu0 %v361
  %386 = vmatpush.msra.mxu0 %v360
  %387 = vmatpush.msra.mxu0 %v359
  %388 = vmatpush.msra.mxu0 %v358
  %389 = vmatpush.msra.mxu0 %v357
  %390 = vmatpush.msra.mxu0 %v356
  %391 = vmatpush.msra.mxu0 %v355
  %392 = vmatpush.msra.mxu0 %v354
  %393 = vmatpush.msra.mxu0 %v353
  %394 = vmatpush.msra.mxu0 %v352
  %395 = vmatpush.msra.mxu0 %v351
  %396 = vmatpush.msra.mxu0 %v350
  %397 = vmatmul.f32.gmra.mxu0 %v346
  %v398 = vpop.f32.mrf.mxu0
  %v399 = vadd.f32 0.0, %v398
  %400 = vmatmul.f32.gmra.mxu0 %v348
  %v401 = vpop.f32.mrf.mxu0
  %v402 = vadd.f32 0.0, %v401
  %403 = vdwg.mxu0
  %404 = vmatpush.msra.mxu0 0.0
  %405 = vmatpush.msra.mxu0 0.0
  %406 = vmatpush.msra.mxu0 0.0
  %407 = vmatpush.msra.mxu0 0.0
  %408 = vmatpush.msra.mxu0 0.0
  %409 = vmatpush.msra.mxu0 0.0
  %410 = vmatpush.msra.mxu0 0.0
  %411 = vmatpush.msra.mxu0 %v374
  %412 = vmatpush.msra.mxu0 %v373
  %413 = vmatpush.msra.mxu0 %v372
  %414 = vmatpush.msra.mxu0 %v371
  %415 = vmatpush.msra.mxu0 %v370
  %416 = vmatpush.msra.mxu0 %v369
  %417 = vmatpush.msra.mxu0 %v368
  %418 = vmatpush.msra.mxu0 %v367
  %419 = vmatpush.msra.mxu0 %v366
  %420 = vmatmul.f32.gmra.mxu0 %v376
  %v421 = vpop.f32.mrf.mxu0
  %v422 = vadd.f32 %v399, %v421
  %423 = vmatmul.f32.gmra.mxu0 %v379
  %v424 = vpop.f32.mrf.mxu0
  %v425 = vadd.f32 %v402, %v424
  %426 = vdwg.mxu0
  %s427 = scalar_lea.vmem %s3, 200
  %v428 = vld [vmem:[%s427] sm:$0xff]
  %v429 = vld [vmem:[%s427 + $0x8] sm:$0xff]
  %v430 = vld [vmem:[%s427 + $0x10] sm:$0xff]
  %v431 = vld [vmem:[%s427 + $0x18] sm:$0xff]
  %v432 = vld [vmem:[%s427 + $0x20] sm:$0xff]
  %v433 = vld [vmem:[%s427 + $0x28] sm:$0xff]
  %v434 = vld [vmem:[%s427 + $0x30] sm:$0xff]
  %v435 = vld [vmem:[%s427 + $0x38] sm:$0xff]
  %v436 = vld [vmem:[%s427 + $0x40] sm:$0xff]
  %v437 = vld [vmem:[%s427 + $0x48] sm:$0xff]
  %v438 = vld [vmem:[%s427 + $0x50] sm:$0xff]
  %v439 = vld [vmem:[%s427 + $0x58] sm:$0xff]
  %v440 = vld [vmem:[%s427 + $0x60] sm:$0xff]
  %v441 = vld [vmem:[%s427 + $0x68] sm:$0xff]
  %v442 = vld [vmem:[%s427 + $0x70] sm:$0xff]
  %v443 = vld [vmem:[%s427 + $0x78] sm:$0xff]
  %v444 = vld [vmem:[%s427 + $0x80] sm:$0xff]
  %v445 = vld [vmem:[%s427 + $0x88] sm:$0xff]
  %v446 = vld [vmem:[%s427 + $0x90] sm:$0xff]
  %v447 = vld [vmem:[%s427 + $0x98] sm:$0xff]
  %v448 = vld [vmem:[%s427 + $0xa0] sm:$0xff]
  %v449 = vld [vmem:[%s427 + $0xa8] sm:$0xff]
  %v450 = vld [vmem:[%s427 + $0xb0] sm:$0xff]
  %v451 = vld [vmem:[%s427 + $0xb8] sm:$0xff]
  %v452 = vld [vmem:[%s427 + $0xc0] sm:$0xff]
  %453 = vmatpush.msra.mxu0 %v443
  %454 = vmatpush.msra.mxu0 %v442
  %455 = vmatpush.msra.mxu0 %v441
  %456 = vmatpush.msra.mxu0 %v440
  %457 = vmatpush.msra.mxu0 %v439
  %458 = vmatpush.msra.mxu0 %v438
  %459 = vmatpush.msra.mxu0 %v437
  %460 = vmatpush.msra.mxu0 %v436
  %461 = vmatpush.msra.mxu0 %v435
  %462 = vmatpush.msra.mxu0 %v434
  %463 = vmatpush.msra.mxu0 %v433
  %464 = vmatpush.msra.mxu0 %v432
  %465 = vmatpush.msra.mxu0 %v431
  %466 = vmatpush.msra.mxu0 %v430
  %467 = vmatpush.msra.mxu0 %v429
  %468 = vmatpush.msra.mxu0 %v428
  %469 = vmatmul.f32.gmra.mxu0 %v346
  %v470 = vpop.f32.mrf.mxu0
  %v471 = vadd.f32 0.0, %v470
  %472 = vmatmul.f32.gmra.mxu0 %v348
  %v473 = vpop.f32.mrf.mxu0
  %v474 = vadd.f32 0.0, %v473
  %475 = vdwg.mxu0
  %476 = vmatpush.msra.mxu0 0.0
  %477 = vmatpush.msra.mxu0 0.0
  %478 = vmatpush.msra.mxu0 0.0
  %479 = vmatpush.msra.mxu0 0.0
  %480 = vmatpush.msra.mxu0 0.0
  %481 = vmatpush.msra.mxu0 0.0
  %482 = vmatpush.msra.mxu0 0.0
  %483 = vmatpush.msra.mxu0 %v452
  %484 = vmatpush.msra.mxu0 %v451
  %485 = vmatpush.msra.mxu0 %v450
  %486 = vmatpush.msra.mxu0 %v449
  %487 = vmatpush.msra.mxu0 %v448
  %488 = vmatpush.msra.mxu0 %v447
  %489 = vmatpush.msra.mxu0 %v446
  %490 = vmatpush.msra.mxu0 %v445
  %491 = vmatpush.msra.mxu0 %v444
  %492 = vmatmul.f32.gmra.mxu0 %v376
  %v493 = vpop.f32.mrf.mxu0
  %v494 = vadd.f32 %v471, %v493
  %495 = vmatmul.f32.gmra.mxu0 %v379
  %v496 = vpop.f32.mrf.mxu0
  %v497 = vadd.f32 %v474, %v496
  %498 = vdwg.mxu0
  %s499 = scalar_lea.vmem %s3, 400
  %v500 = vld [vmem:[%s499] sm:$0xff]
  %v501 = vld [vmem:[%s499 + $0x8] sm:$0xff]
  %v502 = vld [vmem:[%s499 + $0x10] sm:$0xff]
  %v503 = vld [vmem:[%s499 + $0x18] sm:$0xff]
  %v504 = vld [vmem:[%s499 + $0x20] sm:$0xff]
  %v505 = vld [vmem:[%s499 + $0x28] sm:$0xff]
  %v506 = vld [vmem:[%s499 + $0x30] sm:$0xff]
  %v507 = vld [vmem:[%s499 + $0x38] sm:$0xff]
  %v508 = vld [vmem:[%s499 + $0x40] sm:$0xff]
  %v509 = vld [vmem:[%s499 + $0x48] sm:$0xff]
  %v510 = vld [vmem:[%s499 + $0x50] sm:$0xff]
  %v511 = vld [vmem:[%s499 + $0x58] sm:$0xff]
  %v512 = vld [vmem:[%s499 + $0x60] sm:$0xff]
  %v513 = vld [vmem:[%s499 + $0x68] sm:$0xff]
  %v514 = vld [vmem:[%s499 + $0x70] sm:$0xff]
  %v515 = vld [vmem:[%s499 + $0x78] sm:$0xff]
  %v516 = vld [vmem:[%s499 + $0x80] sm:$0xff]
  %v517 = vld [vmem:[%s499 + $0x88] sm:$0xff]
  %v518 = vld [vmem:[%s499 + $0x90] sm:$0xff]
  %v519 = vld [vmem:[%s499 + $0x98] sm:$0xff]
  %v520 = vld [vmem:[%s499 + $0xa0] sm:$0xff]
  %v521 = vld [vmem:[%s499 + $0xa8] sm:$0xff]
  %v522 = vld [vmem:[%s499 + $0xb0] sm:$0xff]
  %v523 = vld [vmem:[%s499 + $0xb8] sm:$0xff]
  %v524 = vld [vmem:[%s499 + $0xc0] sm:$0xff]
  %525 = vmatpush.msra.mxu0 %v515
  %526 = vmatpush.msra.mxu0 %v514
  %527 = vmatpush.msra.mxu0 %v513
  %528 = vmatpush.msra.mxu0 %v512
  %529 = vmatpush.msra.mxu0 %v511
  %530 = vmatpush.msra.mxu0 %v510
  %531 = vmatpush.msra.mxu0 %v509
  %532 = vmatpush.msra.mxu0 %v508
  %533 = vmatpush.msra.mxu0 %v507
  %534 = vmatpush.msra.mxu0 %v506
  %535 = vmatpush.msra.mxu0 %v505
  %536 = vmatpush.msra.mxu0 %v504
  %537 = vmatpush.msra.mxu0 %v503
  %538 = vmatpush.msra.mxu0 %v502
  %539 = vmatpush.msra.mxu0 %v501
  %540 = vmatpush.msra.mxu0 %v500
  %541 = vmatmul.f32.gmra.mxu0 %v346
  %v542 = vpop.f32.mrf.mxu0
  %v543 = vadd.f32 0.0, %v542
  %544 = vmatmul.f32.gmra.mxu0 %v348
  %v545 = vpop.f32.mrf.mxu0
  %v546 = vadd.f32 0.0, %v545
  %547 = vdwg.mxu0
  %548 = vmatpush.msra.mxu0 0.0
  %549 = vmatpush.msra.mxu0 0.0
  %550 = vmatpush.msra.mxu0 0.0
  %551 = vmatpush.msra.mxu0 0.0
  %552 = vmatpush.msra.mxu0 0.0
  %553 = vmatpush.msra.mxu0 0.0
  %554 = vmatpush.msra.mxu0 0.0
  %555 = vmatpush.msra.mxu0 %v524
  %556 = vmatpush.msra.mxu0 %v523
  %557 = vmatpush.msra.mxu0 %v522
  %558 = vmatpush.msra.mxu0 %v521
  %559 = vmatpush.msra.mxu0 %v520
  %560 = vmatpush.msra.mxu0 %v519
  %561 = vmatpush.msra.mxu0 %v518
  %562 = vmatpush.msra.mxu0 %v517
  %563 = vmatpush.msra.mxu0 %v516
  %564 = vmatmul.f32.gmra.mxu0 %v376
  %v565 = vpop.f32.mrf.mxu0
  %v566 = vadd.f32 %v543, %v565
  %567 = vmatmul.f32.gmra.mxu0 %v379
  %v568 = vpop.f32.mrf.mxu0
  %v569 = vadd.f32 %v546, %v568
  %570 = vdwg.mxu0
  %s571 = scalar_lea.vmem %s3, 600
  %v572 = vld [vmem:[%s571] sm:$0xff]
  %v573 = vld [vmem:[%s571 + $0x8] sm:$0xff]
  %v574 = vld [vmem:[%s571 + $0x10] sm:$0xff]
  %v575 = vld [vmem:[%s571 + $0x18] sm:$0xff]
  %v576 = vld [vmem:[%s571 + $0x20] sm:$0xff]
  %v577 = vld [vmem:[%s571 + $0x28] sm:$0xff]
  %v578 = vld [vmem:[%s571 + $0x30] sm:$0xff]
  %v579 = vld [vmem:[%s571 + $0x38] sm:$0xff]
  %v580 = vld [vmem:[%s571 + $0x40] sm:$0xff]
  %v581 = vld [vmem:[%s571 + $0x48] sm:$0xff]
  %v582 = vld [vmem:[%s571 + $0x50] sm:$0xff]
  %v583 = vld [vmem:[%s571 + $0x58] sm:$0xff]
  %v584 = vld [vmem:[%s571 + $0x60] sm:$0xff]
  %v585 = vld [vmem:[%s571 + $0x68] sm:$0xff]
  %v586 = vld [vmem:[%s571 + $0x70] sm:$0xff]
  %v587 = vld [vmem:[%s571 + $0x78] sm:$0xff]
  %v588 = vld [vmem:[%s571 + $0x80] sm:$0xff]
  %v589 = vld [vmem:[%s571 + $0x88] sm:$0xff]
  %v590 = vld [vmem:[%s571 + $0x90] sm:$0xff]
  %v591 = vld [vmem:[%s571 + $0x98] sm:$0xff]
  %v592 = vld [vmem:[%s571 + $0xa0] sm:$0xff]
  %v593 = vld [vmem:[%s571 + $0xa8] sm:$0xff]
  %v594 = vld [vmem:[%s571 + $0xb0] sm:$0xff]
  %v595 = vld [vmem:[%s571 + $0xb8] sm:$0xff]
  %v596 = vld [vmem:[%s571 + $0xc0] sm:$0xff]
  %597 = vmatpush.msra.mxu0 %v587
  %598 = vmatpush.msra.mxu0 %v586
  %599 = vmatpush.msra.mxu0 %v585
  %600 = vmatpush.msra.mxu0 %v584
  %601 = vmatpush.msra.mxu0 %v583
  %602 = vmatpush.msra.mxu0 %v582
  %603 = vmatpush.msra.mxu0 %v581
  %604 = vmatpush.msra.mxu0 %v580
  %605 = vmatpush.msra.mxu0 %v579
  %606 = vmatpush.msra.mxu0 %v578
  %607 = vmatpush.msra.mxu0 %v577
  %608 = vmatpush.msra.mxu0 %v576
  %609 = vmatpush.msra.mxu0 %v575
  %610 = vmatpush.msra.mxu0 %v574
  %611 = vmatpush.msra.mxu0 %v573
  %612 = vmatpush.msra.mxu0 %v572
  %613 = vmatmul.f32.gmra.mxu0 %v346
  %v614 = vpop.f32.mrf.mxu0
  %v615 = vadd.f32 0.0, %v614
  %616 = vmatmul.f32.gmra.mxu0 %v348
  %v617 = vpop.f32.mrf.mxu0
  %v618 = vadd.f32 0.0, %v617
  %619 = vdwg.mxu0
  %620 = vmatpush.msra.mxu0 0.0
  %621 = vmatpush.msra.mxu0 0.0
  %622 = vmatpush.msra.mxu0 0.0
  %623 = vmatpush.msra.mxu0 0.0
  %624 = vmatpush.msra.mxu0 0.0
  %625 = vmatpush.msra.mxu0 0.0
  %626 = vmatpush.msra.mxu0 0.0
  %627 = vmatpush.msra.mxu0 %v596
  %628 = vmatpush.msra.mxu0 %v595
  %629 = vmatpush.msra.mxu0 %v594
  %630 = vmatpush.msra.mxu0 %v593
  %631 = vmatpush.msra.mxu0 %v592
  %632 = vmatpush.msra.mxu0 %v591
  %633 = vmatpush.msra.mxu0 %v590
  %634 = vmatpush.msra.mxu0 %v589
  %635 = vmatpush.msra.mxu0 %v588
  %636 = vmatmul.f32.gmra.mxu0 %v376
  %v637 = vpop.f32.mrf.mxu0
  %v638 = vadd.f32 %v615, %v637
  %639 = vmatmul.f32.gmra.mxu0 %v379
  %v640 = vpop.f32.mrf.mxu0
  %v641 = vadd.f32 %v618, %v640
  %642 = vdwg.mxu0
  %v643 = vmax.f32 %v422, %v494
  %v644 = vmax.f32 %v425, %v497
  %v645 = vmax.f32 %v566, %v638
  %v646 = vmax.f32 %v569, %v641
  %v647 = vmax.f32 %v643, %v645
  %v648 = vmax.f32 %v644, %v646
  %v649 = vld [vmem:[%s5] sm:$0xff]
  %v650 = vld [vmem:[%s5 + $0x8] sm:$0xff]
  %652 = vset.pattern.permute.xlu0 0
  %653 = vperm.xlu0 %652, %v649
  %v654 = vpop.permute.xlu0 %653
  %657 = vset.pattern.permute.xlu0 0
  %658 = vperm.xlu0 %657, %v650
  %v659 = vpop.permute.xlu0 %658
  %v661 = vadd.f32 %v647, %v654
  %v662 = vadd.f32 %v648, %v659
  %vm663 = vcmask 15360
  %664 = vst.msk [vmem:[%s7] sm:$0xff] %vm663, %v661
  %665 = vst.msk [vmem:[%s7 + $0x8] sm:$0xff] %vm663, %v662
  // Predicated region
  $region26: #{competitive_block_forward.7} parent=0 // pred_check
    _
  $region27: #{competitive_block_forward.7} parent=0 // pred_check_branch
    %667 = sbr.rel (0) target = $region29
  $region28: #{competitive_block_forward.7} parent=0 // pred_region
    _
  $region29: #{competitive_block_forward.7} parent=0 // pred_fallthru
    _
  // Predicated region
  $region30: #{competitive_block_forward.7} parent=0 // pred_check
    _
  $region31: #{competitive_block_forward.7} parent=0 // pred_check_branch
    %669 = sbr.rel (0) target = $region33
  $region32: #{competitive_block_forward.7} parent=0 // pred_region
    _
  $region33: #{competitive_block_forward.7} parent=0 // pred_fallthru
    _
  // Predicated region
  $region34: #{competitive_block_forward.7} parent=0 // pred_check
    _
  $region35: #{competitive_block_forward.7} parent=0 // pred_check_branch
    %671 = sbr.rel (0) target = $region37
  $region36: #{competitive_block_forward.7} parent=0 // pred_region
    _
  $region37: #{competitive_block_forward.7} parent=0 // pred_fallthru
    _
  // Predicated region
  $region38: #{competitive_block_forward.7} parent=0 // pred_check
    _
  $region39: #{competitive_block_forward.7} parent=0 // pred_check_branch
    %673 = sbr.rel (0) target = $region41
  $region40: #{competitive_block_forward.7} parent=0 // pred_region
    _
  $region41: #{competitive_block_forward.7} parent=0 // pred_fallthru
    _

</llo_original>
